<compile_context>
chip_gen: v7x
topology: tpu7x:2x2x1
jax: 0.10.0
libtpu: 0.0.40
codegen_flags: <defaults>
</compile_context>

<pallas_src>
import jax
import jax.numpy as jnp
import numpy as np
from jax.experimental import pallas as pl
from jax.experimental.pallas import tpu as pltpu


def layer_kernel(x_ref, w_ref, sb_ref, o_ref, xpad_ref, patches_ref, t_ref):
    # x_ref:       (bb, H, W, cin_p)        bf16, bb images (Cin zero-padded)
    # w_ref:       (9*cin_p, Cpad)          bf16 im2col weights, Cout padded
    # sb_ref:      (2, Cpad)                f32: row0 = BN scale, row1 = bias
    # o_ref:       (bb, H//2, W//2, Cpad)   bf16 output (lane-dense)
    # xpad_ref:    (bb, H+2, W+2, cin_p)    bf16 scratch: halo-padded images
    # patches_ref: (bb*H*W, 9*cin_p)        bf16 scratch: im2col patch matrix
    # t_ref:       (bb*H//2, W, Cpad)       f32 scratch: y-pooled rows
    bb, h, w, cin_p = x_ref.shape
    _, hh, wh, cpad = o_ref.shape
    m = bb * h * w

    # --- conv padding=1 in VMEM: zero ONLY the halo strips, copy interior ---
    zrow = jnp.zeros((bb, 1, w + 2, cin_p), x_ref.dtype)
    xpad_ref[:, 0:1, :, :] = zrow
    xpad_ref[:, h + 1:h + 2, :, :] = zrow
    zcol = jnp.zeros((bb, h, 1, cin_p), x_ref.dtype)
    xpad_ref[:, 1:h + 1, 0:1, :] = zcol
    xpad_ref[:, 1:h + 1, w + 1:w + 2, :] = zcol
    xpad_ref[:, 1:h + 1, 1:w + 1, :] = x_ref[...]

    # --- im2col: 9 shifted taps written at static, cin_p-aligned lane offsets
    #     (no concatenate / tile-crossing reshape).  Rows ordered (b, y, x). --
    for t in range(9):
        dy, dx = t // 3, t % 3
        tap = xpad_ref[:, dy:dy + h, dx:dx + w, :]           # (bb, h, w, cin_p)
        patches_ref[:, t * cin_p:(t + 1) * cin_p] = tap.reshape(m, cin_p)

    # --- single fat MXU matmul, K = 9*cin_p, f32 accumulation ---------------
    acc = jnp.dot(patches_ref[...], w_ref[...],
                  preferred_element_type=jnp.float32)         # (m, cpad)

    # --- folded conv-bias + BatchNorm(eval) scale/bias, ReLU (f32, in-reg) --
    acc = jnp.maximum(acc * sb_ref[0:1, :] + sb_ref[1:2, :], 0.0)

    # --- MaxPool 2x2 stride 2 ----------------------------------------------
    # y-parity on the register value: split rows (b*h + y, x) into
    # (b*hh + y//2, y%2, x); new sublane extent w is a multiple of 8, so the
    # reshape is tile-aligned (no repack).
    t4 = acc.reshape(bb * hh, 2, w, cpad)
    ymax = jnp.maximum(t4[:, 0], t4[:, 1])                    # (bb*hh, w, cpad)
    # x-parity via stride-2 sublane Ref reads of a small scratch (slice-only
    # indexing -- no int indexers mixed with pl.ds; value-level strided
    # slices are avoided for Mosaic portability).
    t_ref[...] = ymax
    pooled = jnp.maximum(t_ref[:, pl.ds(0, wh, 2), :],
                         t_ref[:, pl.ds(1, wh, 2), :])        # (bb*hh, wh, cpad)
    o_ref[...] = pooled.reshape(bb, hh, wh, cpad).astype(o_ref.dtype)


def _round_up(x, m):
    return (x + m - 1) // m * m


def _pick_block_batch(n, max_b=8):
    # Largest bblk dividing n with n // bblk >= 2, so the megacore "parallel"
    # grid keeps at least two blocks; batch more aggressively for larger n.
    for b in range(min(n, max_b), 0, -1):
        if n % b == 0 and n // b >= 2:
            return b
    return n if n <= max_b else 1


def layer_forward(x_nchw, w_oihw, b_conv, gamma, beta, run_mean, run_var,
                  eps=1e-5):
    n, cin, h, w = x_nchw.shape
    cout = w_oihw.shape[0]
    assert h % 2 == 0 and w % 2 == 0
    cin_p = _round_up(cin, 8)            # aligned im2col lane offsets
    cpad = _round_up(cout, 128)          # lane-dense output channels
    hh, wh = h // 2, w // 2
    bblk = _pick_block_batch(n)

    # NCHW -> NHWC, bf16, zero-pad Cin (one fused XLA pass over x).
    x = jnp.transpose(x_nchw, (0, 2, 3, 1)).astype(jnp.bfloat16)
    x = jnp.pad(x, ((0, 0), (0, 0), (0, 0), (0, cin_p - cin)))

    # OIHW -> (ky, kx, Cin, Cout), pad Cin/Cout, flatten to (9*cin_p, Cpad).
    w_hwio = jnp.transpose(w_oihw, (2, 3, 1, 0)).astype(jnp.float32)
    w_hwio = jnp.pad(w_hwio,
                     ((0, 0), (0, 0), (0, cin_p - cin), (0, cpad - cout)))
    w_mat = w_hwio.reshape(9 * cin_p, cpad).astype(jnp.bfloat16)

    # Fold conv bias + BN(eval) into per-channel scale/bias (padded chans 0).
    scale = gamma / jnp.sqrt(run_var + eps)                    # (Cout,)
    bias = (b_conv - run_mean) * scale + beta                  # (Cout,)
    sb = jnp.pad(jnp.stack([scale, bias]).astype(jnp.float32),
                 ((0, 0), (0, cpad - cout)))                   # (2, Cpad)

    out = pl.pallas_call(
        layer_kernel,
        out_shape=jax.ShapeDtypeStruct((n, hh, wh, cpad), jnp.bfloat16),
        grid_spec=pltpu.PrefetchScalarGridSpec(
            num_scalar_prefetch=0,
            grid=(n // bblk,),
            in_specs=[
                pl.BlockSpec((bblk, h, w, cin_p), lambda i: (i, 0, 0, 0)),
                pl.BlockSpec((9 * cin_p, cpad), lambda i: (0, 0)),
                pl.BlockSpec((2, cpad), lambda i: (0, 0)),
            ],
            out_specs=pl.BlockSpec((bblk, hh, wh, cpad),
                                   lambda i: (i, 0, 0, 0)),
            scratch_shapes=[
                pltpu.VMEM((bblk, h + 2, w + 2, cin_p), jnp.bfloat16),
                pltpu.VMEM((bblk * h * w, 9 * cin_p), jnp.bfloat16),
                pltpu.VMEM((bblk * hh, w, cpad), jnp.float32),
            ],
        ),
        compiler_params=pltpu.CompilerParams(
            dimension_semantics=("parallel",),
            vmem_limit_bytes=32 * 1024 * 1024,
        ),
    )(x, w_mat, sb)

    # Drop channel padding, NHWC -> NCHW, back to f32 (PyTorch convention).
    return jnp.transpose(out[..., :cout], (0, 3, 1, 2)).astype(jnp.float32)


def reference(x, w_oihw, b_conv, gamma, beta, run_mean, run_var, eps=1e-5):
    y = jax.lax.conv_general_dilated(
        x, w_oihw, window_strides=(1, 1), padding=((1, 1), (1, 1)),
        dimension_numbers=("NCHW", "OIHW", "NCHW"))
    y = y + b_conv.reshape(1, -1, 1, 1)
    y = ((y - run_mean.reshape(1, -1, 1, 1))
         / jnp.sqrt(run_var.reshape(1, -1, 1, 1) + eps)
         * gamma.reshape(1, -1, 1, 1) + beta.reshape(1, -1, 1, 1))
    y = jnp.maximum(y, 0.0)
    y = jax.lax.reduce_window(y, -jnp.inf, jax.lax.max,
                              (1, 1, 2, 2), (1, 1, 2, 2), "VALID")
    return y


if __name__ == "__main__":
    N, Cin, Cout, H, W = 2, 4, 8, 16, 16

    key = jax.random.PRNGKey(0)
    kx, kw, kb, kg, kbe, km, kv = jax.random.split(key, 7)

    x = jax.random.normal(kx, (N, Cin, H, W), jnp.float32)
    w_oihw = jax.random.normal(kw, (Cout, Cin, 3, 3), jnp.float32) * 0.1
    b_conv = jax.random.normal(kb, (Cout,), jnp.float32) * 0.1
    gamma = 1.0 + 0.1 * jax.random.normal(kg, (Cout,), jnp.float32)
    beta = 0.1 * jax.random.normal(kbe, (Cout,), jnp.float32)
    run_mean = 0.1 * jax.random.normal(km, (Cout,), jnp.float32)
    run_var = jnp.abs(jax.random.normal(kv, (Cout,), jnp.float32)) + 0.5

    # Numerics contract: conv operands pre-rounded to bf16 so the bf16-MXU
    # kernel (f32 accumulation) and the f32 XLA reference see identical
    # inputs; the kernel additionally writes its output in bf16, hence the
    # relaxed (bf16-level) tolerance below.
    x = x.astype(jnp.bfloat16).astype(jnp.float32)
    w_oihw = w_oihw.astype(jnp.bfloat16).astype(jnp.float32)

    out = layer_forward(x, w_oihw, b_conv, gamma, beta, run_mean, run_var)
    out = jax.block_until_ready(out)

    ref = reference(x, w_oihw, b_conv, gamma, beta, run_mean, run_var)
    np.testing.assert_allclose(np.asarray(out), np.asarray(ref),
                               rtol=1e-2, atol=1e-2)

    print("KERNEL_OK")
</pallas_src>

<mosaic_0001>
module attributes {stable_mosaic.version = 11 : i64} {
  func.func @layer_kernel(%arg0: i32, %arg1: memref<1x16x16x8xbf16, #tpu.memory_space<vmem>>, %arg2: memref<72x128xbf16, #tpu.memory_space<vmem>>, %arg3: memref<2x128xf32, #tpu.memory_space<vmem>>, %arg4: memref<1x8x8x128xbf16, #tpu.memory_space<vmem>>, %arg5: memref<1x18x18x8xbf16, #tpu.memory_space<vmem>>, %arg6: memref<256x72xbf16, #tpu.memory_space<vmem>>, %arg7: memref<8x16x128xf32, #tpu.memory_space<vmem>>) attributes {dimension_semantics = [#tpu.dimension_semantics<parallel>], iteration_bounds = array<i64: 2>, scalar_prefetch = 0 : i64, scratch_operands = 3 : i64, tpu.core_type = #tpu.core_type<tc>, window_params = [{transform_indices = @transform_0, window_bounds = array<i64: 1, 16, 16, 8>}, {pipeline_mode = #tpu.pipeline_mode<synchronous>, transform_indices = @transform_1, window_bounds = array<i64: 72, 128>}, {pipeline_mode = #tpu.pipeline_mode<synchronous>, transform_indices = @transform_2, window_bounds = array<i64: 2, 128>}, {transform_indices = @transform_3, window_bounds = array<i64: 1, 8, 8, 128>}]} {
    %cst = arith.constant 0.000000e+00 : bf16
    %0 = vector.broadcast %cst : bf16 to vector<1x1x18x8xbf16>
    %c0 = arith.constant 0 : index
    %c0_0 = arith.constant 0 : index
    %c0_1 = arith.constant 0 : index
    %c0_2 = arith.constant 0 : index
    %1 = vector.load %arg5[%c0, %c0_0, %c0_1, %c0_2] : memref<1x18x18x8xbf16, #tpu.memory_space<vmem>>, vector<1x1x18x8xbf16>
    tpu.vector_store %arg5[%c0, %c0_0, %c0_1, %c0_2], %0 {strides = array<i32>} : memref<1x18x18x8xbf16, #tpu.memory_space<vmem>>, vector<1x1x18x8xbf16>,
    %c0_3 = arith.constant 0 : index
    %c17 = arith.constant 17 : index
    %c0_4 = arith.constant 0 : index
    %c0_5 = arith.constant 0 : index
    %2 = vector.load %arg5[%c0_3, %c17, %c0_4, %c0_5] : memref<1x18x18x8xbf16, #tpu.memory_space<vmem>>, vector<1x1x18x8xbf16>
    tpu.vector_store %arg5[%c0_3, %c17, %c0_4, %c0_5], %0 {strides = array<i32>} : memref<1x18x18x8xbf16, #tpu.memory_space<vmem>>, vector<1x1x18x8xbf16>,
    %cst_6 = arith.constant 0.000000e+00 : bf16
    %3 = vector.broadcast %cst_6 : bf16 to vector<1x16x1x8xbf16>
    %c0_7 = arith.constant 0 : index
    %c1 = arith.constant 1 : index
    %c0_8 = arith.constant 0 : index
    %c0_9 = arith.constant 0 : index
    %4 = vector.load %arg5[%c0_7, %c1, %c0_8, %c0_9] : memref<1x18x18x8xbf16, #tpu.memory_space<vmem>>, vector<1x16x1x8xbf16>
    tpu.vector_store %arg5[%c0_7, %c1, %c0_8, %c0_9], %3 {strides = array<i32>} : memref<1x18x18x8xbf16, #tpu.memory_space<vmem>>, vector<1x16x1x8xbf16>,
    %c0_10 = arith.constant 0 : index
    %c1_11 = arith.constant 1 : index
    %c17_12 = arith.constant 17 : index
    %c0_13 = arith.constant 0 : index
    %5 = vector.load %arg5[%c0_10, %c1_11, %c17_12, %c0_13] : memref<1x18x18x8xbf16, #tpu.memory_space<vmem>>, vector<1x16x1x8xbf16>
    tpu.vector_store %arg5[%c0_10, %c1_11, %c17_12, %c0_13], %3 {strides = array<i32>} : memref<1x18x18x8xbf16, #tpu.memory_space<vmem>>, vector<1x16x1x8xbf16>,
    %c0_14 = arith.constant 0 : index
    %c0_15 = arith.constant 0 : index
    %c0_16 = arith.constant 0 : index
    %c0_17 = arith.constant 0 : index
    %6 = vector.load %arg1[%c0_14, %c0_15, %c0_16, %c0_17] : memref<1x16x16x8xbf16, #tpu.memory_space<vmem>>, vector<1x16x16x8xbf16>
    %c0_18 = arith.constant 0 : index
    %c1_19 = arith.constant 1 : index
    %c1_20 = arith.constant 1 : index
    %c0_21 = arith.constant 0 : index
    %7 = vector.load %arg5[%c0_18, %c1_19, %c1_20, %c0_21] : memref<1x18x18x8xbf16, #tpu.memory_space<vmem>>, vector<1x16x16x8xbf16>
    tpu.vector_store %arg5[%c0_18, %c1_19, %c1_20, %c0_21], %6 {strides = array<i32>} : memref<1x18x18x8xbf16, #tpu.memory_space<vmem>>, vector<1x16x16x8xbf16>,
    %c0_22 = arith.constant 0 : index
    %c0_23 = arith.constant 0 : index
    %c0_24 = arith.constant 0 : index
    %c0_25 = arith.constant 0 : index
    %8 = vector.load %arg5[%c0_22, %c0_23, %c0_24, %c0_25] : memref<1x18x18x8xbf16, #tpu.memory_space<vmem>>, vector<1x16x16x8xbf16>
    %9 = vector.shape_cast %8 : vector<1x16x16x8xbf16> to vector<256x8xbf16>
    %c0_26 = arith.constant 0 : index
    %c0_27 = arith.constant 0 : index
    %10 = vector.load %arg6[%c0_26, %c0_27] : memref<256x72xbf16, #tpu.memory_space<vmem>>, vector<256x8xbf16>
    tpu.vector_store %arg6[%c0_26, %c0_27], %9 {strides = array<i32>} : memref<256x72xbf16, #tpu.memory_space<vmem>>, vector<256x8xbf16>,
    %c0_28 = arith.constant 0 : index
    %c0_29 = arith.constant 0 : index
    %c1_30 = arith.constant 1 : index
    %c0_31 = arith.constant 0 : index
    %11 = vector.load %arg5[%c0_28, %c0_29, %c1_30, %c0_31] : memref<1x18x18x8xbf16, #tpu.memory_space<vmem>>, vector<1x16x16x8xbf16>
    %12 = vector.shape_cast %11 : vector<1x16x16x8xbf16> to vector<256x8xbf16>
    %c0_32 = arith.constant 0 : index
    %c8 = arith.constant 8 : index
    %13 = vector.load %arg6[%c0_32, %c8] : memref<256x72xbf16, #tpu.memory_space<vmem>>, vector<256x8xbf16>
    tpu.vector_store %arg6[%c0_32, %c8], %12 {strides = array<i32>} : memref<256x72xbf16, #tpu.memory_space<vmem>>, vector<256x8xbf16>,
    %c0_33 = arith.constant 0 : index
    %c0_34 = arith.constant 0 : index
    %c2 = arith.constant 2 : index
    %c0_35 = arith.constant 0 : index
    %14 = vector.load %arg5[%c0_33, %c0_34, %c2, %c0_35] : memref<1x18x18x8xbf16, #tpu.memory_space<vmem>>, vector<1x16x16x8xbf16>
    %15 = vector.shape_cast %14 : vector<1x16x16x8xbf16> to vector<256x8xbf16>
    %c0_36 = arith.constant 0 : index
    %c16 = arith.constant 16 : index
    %16 = vector.load %arg6[%c0_36, %c16] : memref<256x72xbf16, #tpu.memory_space<vmem>>, vector<256x8xbf16>
    tpu.vector_store %arg6[%c0_36, %c16], %15 {strides = array<i32>} : memref<256x72xbf16, #tpu.memory_space<vmem>>, vector<256x8xbf16>,
    %c0_37 = arith.constant 0 : index
    %c1_38 = arith.constant 1 : index
    %c0_39 = arith.constant 0 : index
    %c0_40 = arith.constant 0 : index
    %17 = vector.load %arg5[%c0_37, %c1_38, %c0_39, %c0_40] : memref<1x18x18x8xbf16, #tpu.memory_space<vmem>>, vector<1x16x16x8xbf16>
    %18 = vector.shape_cast %17 : vector<1x16x16x8xbf16> to vector<256x8xbf16>
    %c0_41 = arith.constant 0 : index
    %c24 = arith.constant 24 : index
    %19 = vector.load %arg6[%c0_41, %c24] : memref<256x72xbf16, #tpu.memory_space<vmem>>, vector<256x8xbf16>
    tpu.vector_store %arg6[%c0_41, %c24], %18 {strides = array<i32>} : memref<256x72xbf16, #tpu.memory_space<vmem>>, vector<256x8xbf16>,
    %c0_42 = arith.constant 0 : index
    %c1_43 = arith.constant 1 : index
    %c1_44 = arith.constant 1 : index
    %c0_45 = arith.constant 0 : index
    %20 = vector.load %arg5[%c0_42, %c1_43, %c1_44, %c0_45] : memref<1x18x18x8xbf16, #tpu.memory_space<vmem>>, vector<1x16x16x8xbf16>
    %21 = vector.shape_cast %20 : vector<1x16x16x8xbf16> to vector<256x8xbf16>
    %c0_46 = arith.constant 0 : index
    %c32 = arith.constant 32 : index
    %22 = vector.load %arg6[%c0_46, %c32] : memref<256x72xbf16, #tpu.memory_space<vmem>>, vector<256x8xbf16>
    tpu.vector_store %arg6[%c0_46, %c32], %21 {strides = array<i32>} : memref<256x72xbf16, #tpu.memory_space<vmem>>, vector<256x8xbf16>,
    %c0_47 = arith.constant 0 : index
    %c1_48 = arith.constant 1 : index
    %c2_49 = arith.constant 2 : index
    %c0_50 = arith.constant 0 : index
    %23 = vector.load %arg5[%c0_47, %c1_48, %c2_49, %c0_50] : memref<1x18x18x8xbf16, #tpu.memory_space<vmem>>, vector<1x16x16x8xbf16>
    %24 = vector.shape_cast %23 : vector<1x16x16x8xbf16> to vector<256x8xbf16>
    %c0_51 = arith.constant 0 : index
    %c40 = arith.constant 40 : index
    %25 = vector.load %arg6[%c0_51, %c40] : memref<256x72xbf16, #tpu.memory_space<vmem>>, vector<256x8xbf16>
    tpu.vector_store %arg6[%c0_51, %c40], %24 {strides = array<i32>} : memref<256x72xbf16, #tpu.memory_space<vmem>>, vector<256x8xbf16>,
    %c0_52 = arith.constant 0 : index
    %c2_53 = arith.constant 2 : index
    %c0_54 = arith.constant 0 : index
    %c0_55 = arith.constant 0 : index
    %26 = vector.load %arg5[%c0_52, %c2_53, %c0_54, %c0_55] : memref<1x18x18x8xbf16, #tpu.memory_space<vmem>>, vector<1x16x16x8xbf16>
    %27 = vector.shape_cast %26 : vector<1x16x16x8xbf16> to vector<256x8xbf16>
    %c0_56 = arith.constant 0 : index
    %c48 = arith.constant 48 : index
    %28 = vector.load %arg6[%c0_56, %c48] : memref<256x72xbf16, #tpu.memory_space<vmem>>, vector<256x8xbf16>
    tpu.vector_store %arg6[%c0_56, %c48], %27 {strides = array<i32>} : memref<256x72xbf16, #tpu.memory_space<vmem>>, vector<256x8xbf16>,
    %c0_57 = arith.constant 0 : index
    %c2_58 = arith.constant 2 : index
    %c1_59 = arith.constant 1 : index
    %c0_60 = arith.constant 0 : index
    %29 = vector.load %arg5[%c0_57, %c2_58, %c1_59, %c0_60] : memref<1x18x18x8xbf16, #tpu.memory_space<vmem>>, vector<1x16x16x8xbf16>
    %30 = vector.shape_cast %29 : vector<1x16x16x8xbf16> to vector<256x8xbf16>
    %c0_61 = arith.constant 0 : index
    %c56 = arith.constant 56 : index
    %31 = vector.load %arg6[%c0_61, %c56] : memref<256x72xbf16, #tpu.memory_space<vmem>>, vector<256x8xbf16>
    tpu.vector_store %arg6[%c0_61, %c56], %30 {strides = array<i32>} : memref<256x72xbf16, #tpu.memory_space<vmem>>, vector<256x8xbf16>,
    %c0_62 = arith.constant 0 : index
    %c2_63 = arith.constant 2 : index
    %c2_64 = arith.constant 2 : index
    %c0_65 = arith.constant 0 : index
    %32 = vector.load %arg5[%c0_62, %c2_63, %c2_64, %c0_65] : memref<1x18x18x8xbf16, #tpu.memory_space<vmem>>, vector<1x16x16x8xbf16>
    %33 = vector.shape_cast %32 : vector<1x16x16x8xbf16> to vector<256x8xbf16>
    %c0_66 = arith.constant 0 : index
    %c64 = arith.constant 64 : index
    %34 = vector.load %arg6[%c0_66, %c64] : memref<256x72xbf16, #tpu.memory_space<vmem>>, vector<256x8xbf16>
    tpu.vector_store %arg6[%c0_66, %c64], %33 {strides = array<i32>} : memref<256x72xbf16, #tpu.memory_space<vmem>>, vector<256x8xbf16>,
    %c0_67 = arith.constant 0 : index
    %c0_68 = arith.constant 0 : index
    %35 = vector.load %arg6[%c0_67, %c0_68] : memref<256x72xbf16, #tpu.memory_space<vmem>>, vector<256x72xbf16>
    %c0_69 = arith.constant 0 : index
    %c0_70 = arith.constant 0 : index
    %36 = vector.load %arg2[%c0_69, %c0_70] : memref<72x128xbf16, #tpu.memory_space<vmem>>, vector<72x128xbf16>
    %cst_71 = arith.constant dense<0.000000e+00> : vector<256x128xf32>
    %37 = tpu.matmul %35, %36, %cst_71 {dimension_numbers = #tpu.dot_dimension_numbers<[1], [0], [0], [1], [0, 0, 1, 1], [], []>} : vector<256x72xbf16>, vector<72x128xbf16>, vector<256x128xf32> -> vector<256x128xf32>
    %c0_72 = arith.constant 0 : index
    %c0_73 = arith.constant 0 : index
    %38 = vector.load %arg3[%c0_72, %c0_73] : memref<2x128xf32, #tpu.memory_space<vmem>>, vector<1x128xf32>
    %39 = vector.broadcast %38 : vector<1x128xf32> to vector<256x128xf32>
    %40 = arith.mulf %37, %39 : vector<256x128xf32>
    %c1_74 = arith.constant 1 : index
    %c0_75 = arith.constant 0 : index
    %41 = vector.load %arg3[%c1_74, %c0_75] : memref<2x128xf32, #tpu.memory_space<vmem>>, vector<1x128xf32>
    %42 = vector.broadcast %41 : vector<1x128xf32> to vector<256x128xf32>
    %43 = arith.addf %40, %42 : vector<256x128xf32>
    %cst_76 = arith.constant 0.000000e+00 : f32
    %44 = vector.broadcast %cst_76 : f32 to vector<256x128xf32>
    %45 = arith.maximumf %43, %44 : vector<256x128xf32>
    %46 = vector.shape_cast %45 : vector<256x128xf32> to vector<8x2x16x128xf32>
    %47 = vector.extract_strided_slice %46 {offsets = [0, 0, 0, 0], sizes = [8, 1, 16, 128], strides = [1, 1, 1, 1]} : vector<8x2x16x128xf32> to vector<8x1x16x128xf32>
    %48 = vector.shape_cast %47 : vector<8x1x16x128xf32> to vector<8x16x128xf32>
    %49 = vector.extract_strided_slice %46 {offsets = [0, 1, 0, 0], sizes = [8, 1, 16, 128], strides = [1, 1, 1, 1]} : vector<8x2x16x128xf32> to vector<8x1x16x128xf32>
    %50 = vector.shape_cast %49 : vector<8x1x16x128xf32> to vector<8x16x128xf32>
    %51 = arith.maximumf %48, %50 : vector<8x16x128xf32>
    %c0_77 = arith.constant 0 : index
    %c0_78 = arith.constant 0 : index
    %c0_79 = arith.constant 0 : index
    %52 = vector.load %arg7[%c0_77, %c0_78, %c0_79] : memref<8x16x128xf32, #tpu.memory_space<vmem>>, vector<8x16x128xf32>
    tpu.vector_store %arg7[%c0_77, %c0_78, %c0_79], %51 {strides = array<i32>} : memref<8x16x128xf32, #tpu.memory_space<vmem>>, vector<8x16x128xf32>,
    %c0_80 = arith.constant 0 : index
    %c0_81 = arith.constant 0 : index
    %c0_82 = arith.constant 0 : index
    %53 = tpu.strided_load %arg7[%c0_80, %c0_81, %c0_82] {strides = array<i32: 1, 2, 1>} : memref<8x16x128xf32, #tpu.memory_space<vmem>>, vector<8x8x128xf32>
    %c0_83 = arith.constant 0 : index
    %c1_84 = arith.constant 1 : index
    %c0_85 = arith.constant 0 : index
    %54 = tpu.strided_load %arg7[%c0_83, %c1_84, %c0_85] {strides = array<i32: 1, 2, 1>} : memref<8x16x128xf32, #tpu.memory_space<vmem>>, vector<8x8x128xf32>
    %55 = arith.maximumf %53, %54 : vector<8x8x128xf32>
    %56 = vector.shape_cast %55 : vector<8x8x128xf32> to vector<1x8x8x128xf32>
    %57 = arith.truncf %56 : vector<1x8x8x128xf32> to vector<1x8x8x128xbf16>
    %c0_86 = arith.constant 0 : index
    %c0_87 = arith.constant 0 : index
    %c0_88 = arith.constant 0 : index
    %c0_89 = arith.constant 0 : index
    %58 = vector.load %arg4[%c0_86, %c0_87, %c0_88, %c0_89] : memref<1x8x8x128xbf16, #tpu.memory_space<vmem>>, vector<1x8x8x128xbf16>
    tpu.vector_store %arg4[%c0_86, %c0_87, %c0_88, %c0_89], %57 {strides = array<i32>} : memref<1x8x8x128xbf16, #tpu.memory_space<vmem>>, vector<1x8x8x128xbf16>,
    return
  }
  func.func @transform_0(%arg0: i32) -> (i32, i32, i32, i32) {
    %c0_i32 = arith.constant 0 : i32
    %c0_i32_0 = arith.constant 0 : i32
    %c0_i32_1 = arith.constant 0 : i32
    %c0_i32_2 = arith.constant 0 : i32
    return %arg0, %c0_i32, %c0_i32_0, %c0_i32_1 : i32, i32, i32, i32
  }
  func.func @transform_1(%arg0: i32) -> (i32, i32) {
    %c0_i32 = arith.constant 0 : i32
    %c0_i32_0 = arith.constant 0 : i32
    %c0_i32_1 = arith.constant 0 : i32
    return %c0_i32, %c0_i32_0 : i32, i32
  }
  func.func @transform_2(%arg0: i32) -> (i32, i32) {
    %c0_i32 = arith.constant 0 : i32
    %c0_i32_0 = arith.constant 0 : i32
    %c0_i32_1 = arith.constant 0 : i32
    return %c0_i32, %c0_i32_0 : i32, i32
  }
  func.func @transform_3(%arg0: i32) -> (i32, i32, i32, i32) {
    %c0_i32 = arith.constant 0 : i32
    %c0_i32_0 = arith.constant 0 : i32
    %c0_i32_1 = arith.constant 0 : i32
    %c0_i32_2 = arith.constant 0 : i32
    return %arg0, %c0_i32, %c0_i32_0, %c0_i32_1 : i32, i32, i32, i32
  }
}

</mosaic_0001>

<llo_original>
// kernel: tpu_custom_call.1
$region0: #{tpu_custom_call.1}
  #allocation0 [shape = 'u32[]', space=smem, size = 0x4, offset = 0x4, fixed_abs, tag = 'smem constant byte address 0x4 - core index']
  #allocation1 [shape = 'u32[144,128]{1,0:T(1,128)}', space=vmem, size = 0x12000, scoped, tag = 'internal scratch']
  #allocation2 [shape = 'bf16[1,18,18,8]{3,2,1,0:T(8,128)(2,1)}', space=vmem, size = 0x1b000, scoped, tag = 'scratch operand']
  #allocation3 [shape = 'bf16[256,72]{1,0:T(16,128)(2,1)}', space=vmem, size = 0x10000, scoped, tag = 'scratch operand']
  #allocation4 [shape = 'f32[8,16,128]{2,1,0:T(8,128)}', space=vmem, size = 0x10000, scoped, tag = 'scratch operand']
  %s0 = inlined_call_operand.vmem [shape: bf16[2,16,16,8], index: 0, kind: input, shape index: {}]
  %s1 = inlined_call_operand.vmem [shape: bf16[72,128], index: 1, kind: input, shape index: {}]
  %s2 = inlined_call_operand.vmem [shape: f32[2,128], index: 2, kind: input, shape index: {}]
  %s3 = inlined_call_operand.hbm [shape: bf16[2,8,8,128], index: 3, kind: output, shape index: {}]
  %s4 = sld [smem:[#allocation0]]
  $region45: #{tpu_custom_call.1} parent=0
    _
  %s6 = ssub.s32 1, %s4
  %s7 = scalar_select 0, %s6, %s4
  $region1: #{tpu_custom_call.1} parent=0
    #allocation5 [shape = 'u8[32768]{0}', space=vmem, size = 0x8000, scoped, tag = 'output window, operand 0']
    #allocation6 [shape = 's32[2]{0}', space=sflag, size = 0x8, scoped, tag = 'scoped memory for tpu_custom_call.1']
    %8 = vsyncpa [#allocation6], 0
    %s9 = scalar_lea.sflag [#allocation6], 1
    %10 = vsyncpa %s9, 0
    loop: start=0, step=1, limit=4
    $region2: #{tpu_custom_call.1} parent=1 // loop_pre_header
      _
    $region3: #{tpu_custom_call.1} parent=1 // loop_header
      %s12 = sphi 0, %s16
      %p13 = scmp.ge.s32.totalorder %s12, 4
      %s22 = sphi 0, %s24
      %s25 = sphi 0, %s22
      %s26 = sphi 0, %s25
      %s42 = sphi 0, %s26
      %s46 = sphi 0, %s46
      %s48 = sphi 0, %s46
      %s49 = sphi 0, %s48
      %s63 = sphi 0, %s49
      %s67 = sphi 0, %s67
      %s69 = sphi 0, %s67
      %s70 = sphi 0, %s69
      %s84 = sphi 0, %s70
      %s90 = sphi 0, %s92
      %s93 = sphi 0, %s90
      %s94 = sphi 0, %s93
      %s110 = sphi 0, %s94
    $region4: #{tpu_custom_call.1} parent=1 // loop_header_branch
      %15 = sbr.rel (%p13) target = $region8
    $region5: #{tpu_custom_call.1} parent=1 // loop_body
      %s17 = ssub.s32 %s12, 1
      %s18 = ssub.s32 %s12, 2
      %s19 = sadd.s32 %s12, 1
      %s20 = ssub.s32 %s12, %s19
      %p21 = scmp.eq.s32.totalorder %s20, 0
      %s23 = sadd.s32 %s22, 1
      %s24 = scalar_select %p21, %s22, %s23
      %p27 = pneg %p21
      %p28 = scmp.eq.s32.totalorder %s12, 1
      %p29 = por %p27, %p28
      %p30 = scmp.ne.s32.totalorder %s22, %s25
      %p31 = scmp.eq.s32.totalorder %s12, 0
      %p32 = por %p30, %p31
      %p33 = scmp.ne.s32.totalorder %s22, %s25
      %p34 = scmp.eq.s32.totalorder %s17, 1
      %p35 = por %p33, %p34
      %p36 = scmp.ne.s32.totalorder %s25, %s26
      %p37 = scmp.eq.s32.totalorder %s17, 0
      %p38 = por %p36, %p37
      %p39 = scmp.ne.s32.totalorder %s25, %s26
      %p40 = scmp.eq.s32.totalorder %s18, 1
      %p41 = por %p39, %p40
      %p43 = scmp.ne.s32.totalorder %s26, %s42
      %p44 = scmp.eq.s32.totalorder %s18, 0
      %p45 = por %p43, %p44
      %s47 = sadd.s32 %s46, 1
      %p50 = scmp.eq.s32.totalorder %s12, 1
      %p51 = scmp.ne.s32.totalorder %s46, %s48
      %p52 = scmp.eq.s32.totalorder %s12, 0
      %p53 = por %p51, %p52
      %p54 = scmp.ne.s32.totalorder %s46, %s48
      %p55 = scmp.eq.s32.totalorder %s17, 1
      %p56 = por %p54, %p55
      %p57 = scmp.ne.s32.totalorder %s48, %s49
      %p58 = scmp.eq.s32.totalorder %s17, 0
      %p59 = por %p57, %p58
      %p60 = scmp.ne.s32.totalorder %s48, %s49
      %p61 = scmp.eq.s32.totalorder %s18, 1
      %p62 = por %p60, %p61
      %p64 = scmp.ne.s32.totalorder %s49, %s63
      %p65 = scmp.eq.s32.totalorder %s18, 0
      %p66 = por %p64, %p65
      %s68 = sadd.s32 %s67, 1
      %p71 = scmp.eq.s32.totalorder %s12, 1
      %p72 = scmp.ne.s32.totalorder %s67, %s69
      %p73 = scmp.eq.s32.totalorder %s12, 0
      %p74 = por %p72, %p73
      %p75 = scmp.ne.s32.totalorder %s67, %s69
      %p76 = scmp.eq.s32.totalorder %s17, 1
      %p77 = por %p75, %p76
      %p78 = scmp.ne.s32.totalorder %s69, %s70
      %p79 = scmp.eq.s32.totalorder %s17, 0
      %p80 = por %p78, %p79
      %p81 = scmp.ne.s32.totalorder %s69, %s70
      %p82 = scmp.eq.s32.totalorder %s18, 1
      %p83 = por %p81, %p82
      %p85 = scmp.ne.s32.totalorder %s70, %s84
      %p86 = scmp.eq.s32.totalorder %s18, 0
      %p87 = por %p85, %p86
      %s88 = ssub.s32 %s12, %s19
      %p89 = scmp.eq.s32.totalorder %s88, 0
      %s91 = sadd.s32 %s90, 1
      %s92 = scalar_select %p89, %s90, %s91
      %p95 = pneg %p89
      %p96 = scmp.eq.s32.totalorder %s12, 1
      %p97 = por %p95, %p96
      %p98 = scmp.ne.s32.totalorder %s90, %s93
      %p99 = scmp.eq.s32.totalorder %s12, 0
      %p100 = por %p98, %p99
      %p101 = scmp.ne.s32.totalorder %s90, %s93
      %p102 = scmp.eq.s32.totalorder %s17, 1
      %p103 = por %p101, %p102
      %p104 = scmp.ne.s32.totalorder %s93, %s94
      %p105 = scmp.eq.s32.totalorder %s17, 0
      %p106 = por %p104, %p105
      %p107 = scmp.ne.s32.totalorder %s93, %s94
      %p108 = scmp.eq.s32.totalorder %s18, 1
      %p109 = por %p107, %p108
      %p111 = scmp.ne.s32.totalorder %s94, %s110
      %p112 = scmp.eq.s32.totalorder %s18, 0
      %p113 = por %p111, %p112
      %p114 = scmp.le.s32.totalorder 1, %s12
      %p115 = scmp.lt.s32.totalorder %s12, 3
      %p116 = pnand %p114, %p115
      %p117 = pneg %p116
      // Predicated region
      $region9: #{tpu_custom_call.1} parent=5 // pred_check
        _
      $region10: #{tpu_custom_call.1} parent=5 // pred_check_branch
        %119 = sbr.rel (%p116) target = $region12
      $region11: #{tpu_custom_call.1} parent=5 // pred_region
        %s120 = ssub.s32 %s12, 1
        // Predicated region
        $region13: #{tpu_custom_call.1} parent=11 // pred_check
          %p121 = pneg %p59
        $region14: #{tpu_custom_call.1} parent=11 // pred_check_branch
          %123 = sbr.rel (%p121) target = $region16
        $region15: #{tpu_custom_call.1} parent=11 // pred_region
          _
        $region16: #{tpu_custom_call.1} parent=11 // pred_fallthru
          _
        // Predicated region
        $region17: #{tpu_custom_call.1} parent=11 // pred_check
          %p124 = pneg %p80
        $region18: #{tpu_custom_call.1} parent=11 // pred_check_branch
          %126 = sbr.rel (%p124) target = $region20
        $region19: #{tpu_custom_call.1} parent=11 // pred_region
          _
        $region20: #{tpu_custom_call.1} parent=11 // pred_fallthru
          _
      $region12: #{tpu_custom_call.1} parent=5 // pred_fallthru
        _
      %p127 = scmp.lt.s32.totalorder %s12, 2
      // Predicated region
      $region21: #{tpu_custom_call.1} parent=5 // pred_check
        %p128 = pneg %p127
      $region22: #{tpu_custom_call.1} parent=5 // pred_check_branch
        %130 = sbr.rel (%p128) target = $region24
      $region23: #{tpu_custom_call.1} parent=5 // pred_region
        // Predicated region
        $region25: #{tpu_custom_call.1} parent=23 // pred_check
          %p131 = pneg %p32
        $region26: #{tpu_custom_call.1} parent=23 // pred_check_branch
          %133 = sbr.rel (%p131) target = $region28
        $region27: #{tpu_custom_call.1} parent=23 // pred_region
          %p134 = scmp.lt.s32.totalorder %s12, 1
          %s135 = scalar_select %p134, %s12, 1
          %s136 = smul.addr %s135, 32
          %s137 = smul.addr %s136, 4
          %s138 = scalar_lea.vmem %s0, %s137
        $region28: #{tpu_custom_call.1} parent=23 // pred_fallthru
          _
      $region24: #{tpu_custom_call.1} parent=5 // pred_fallthru
        _
      %p139 = scmp.le.s32.totalorder 1, %s12
      %p140 = scmp.lt.s32.totalorder %s12, 3
      %p141 = pnand %p139, %p140
      %p142 = pneg %p141
      // Predicated region
      $region29: #{tpu_custom_call.1} parent=5 // pred_check
        _
      $region30: #{tpu_custom_call.1} parent=5 // pred_check_branch
        %144 = sbr.rel (%p141) target = $region32
      $region31: #{tpu_custom_call.1} parent=5 // pred_region
        %s145 = ssub.s32 %s12, 1
        %p146 = scmp.lt.s32.totalorder %s17, 1
        %s147 = scalar_select %p146, %s17, 1
        %s148 = smul.addr %s147, 32
        %s149 = smul.addr %s148, 4
        %s150 = scalar_lea.vmem %s0, %s149
        %p151 = pneg %p38
        %p152 = pneg %p35
        %p153 = pneg %p59
        %p154 = pneg %p56
        %p155 = pneg %p80
        %p156 = pneg %p77
        %p157 = pneg %p106
        %p158 = pneg %p103
        %s159 = sand.u32 %s93, 1
        %s160 = scalar_lea.sflag [#allocation6], %s159
        %s161 = sand.u32 %s93, 1
        %s162 = smul.addr %s161, 32
        %s163 = scalar_lea.vmem [#allocation5], %s162
        %p164 = scmp.lt.s32.totalorder %s17, 1
        %s165 = scalar_select %p164, %s17, 1
        %s166 = smul.addr %s165, 32
        %s167 = smul.addr %s166, 4
        %s168 = scalar_lea.vmem %s0, %s167
        %vm170 = vcmask 60416
        %171 = vst.msk [vmem:[#allocation2] sm:$0xf] %vm170, 0
        %172 = vst.msk [vmem:[#allocation2 + $0x4] sm:$0xf] %vm170, 0
        %vm173 = vcmask 57344
        %174 = vst.msk [vmem:[#allocation2 + $0x8] sm:$0x1] %vm173, 0
        %s175 = scalar_lea.vmem [#allocation2], 204
        %176 = vst.msk [vmem:[%s175] sm:$0xf] %vm170, 0
        %177 = vst.msk [vmem:[%s175 + $0x4] sm:$0xf] %vm170, 0
        %178 = vst.msk [vmem:[%s175 + $0x8] sm:$0x1] %vm173, 0
        %s179 = scalar_lea.vmem [#allocation2], 12
        %vm180 = vcmask 57344
        %vm181 = vsmask.f32 256
        %vm182 = vmand %vm180, %vm181
        %v183 = vld [vmem:[%s179] sm:$0x1]
        %v184 = vsel %vm182, 0, %v183
        %185 = vst [vmem:[%s179] sm:$0x1] %v184
        %v186 = vld [vmem:[%s179 + $0xc] sm:$0x1]
        %v187 = vsel %vm182, 0, %v186
        %188 = vst [vmem:[%s179 + $0xc] sm:$0x1] %v187
        %v189 = vld [vmem:[%s179 + $0x18] sm:$0x1]
        %v190 = vsel %vm182, 0, %v189
        %191 = vst [vmem:[%s179 + $0x18] sm:$0x1] %v190
        %v192 = vld [vmem:[%s179 + $0x24] sm:$0x1]
        %v193 = vsel %vm182, 0, %v192
        %194 = vst [vmem:[%s179 + $0x24] sm:$0x1] %v193
        %v195 = vld [vmem:[%s179 + $0x30] sm:$0x1]
        %v196 = vsel %vm182, 0, %v195
        %197 = vst [vmem:[%s179 + $0x30] sm:$0x1] %v196
        %v198 = vld [vmem:[%s179 + $0x3c] sm:$0x1]
        %v199 = vsel %vm182, 0, %v198
        %200 = vst [vmem:[%s179 + $0x3c] sm:$0x1] %v199
        %v201 = vld [vmem:[%s179 + $0x48] sm:$0x1]
        %v202 = vsel %vm182, 0, %v201
        %203 = vst [vmem:[%s179 + $0x48] sm:$0x1] %v202
        %v204 = vld [vmem:[%s179 + $0x54] sm:$0x1]
        %v205 = vsel %vm182, 0, %v204
        %206 = vst [vmem:[%s179 + $0x54] sm:$0x1] %v205
        %v207 = vld [vmem:[%s179 + $0x60] sm:$0x1]
        %v208 = vsel %vm182, 0, %v207
        %209 = vst [vmem:[%s179 + $0x60] sm:$0x1] %v208
        %v210 = vld [vmem:[%s179 + $0x6c] sm:$0x1]
        %v211 = vsel %vm182, 0, %v210
        %212 = vst [vmem:[%s179 + $0x6c] sm:$0x1] %v211
        %v213 = vld [vmem:[%s179 + $0x78] sm:$0x1]
        %v214 = vsel %vm182, 0, %v213
        %215 = vst [vmem:[%s179 + $0x78] sm:$0x1] %v214
        %v216 = vld [vmem:[%s179 + $0x84] sm:$0x1]
        %v217 = vsel %vm182, 0, %v216
        %218 = vst [vmem:[%s179 + $0x84] sm:$0x1] %v217
        %v219 = vld [vmem:[%s179 + $0x90] sm:$0x1]
        %v220 = vsel %vm182, 0, %v219
        %221 = vst [vmem:[%s179 + $0x90] sm:$0x1] %v220
        %v222 = vld [vmem:[%s179 + $0x9c] sm:$0x1]
        %v223 = vsel %vm182, 0, %v222
        %224 = vst [vmem:[%s179 + $0x9c] sm:$0x1] %v223
        %v225 = vld [vmem:[%s179 + $0xa8] sm:$0x1]
        %v226 = vsel %vm182, 0, %v225
        %227 = vst [vmem:[%s179 + $0xa8] sm:$0x1] %v226
        %v228 = vld [vmem:[%s179 + $0xb4] sm:$0x1]
        %v229 = vsel %vm182, 0, %v228
        %230 = vst [vmem:[%s179 + $0xb4] sm:$0x1] %v229
        %vm231 = vsmask.f32 7938
        %vm232 = vmand %vm180, %vm231
        %v233 = vld [vmem:[%s179 + $0x8] sm:$0x1]
        %v234 = vsel %vm232, 0, %v233
        %235 = vst [vmem:[%s179 + $0x8] sm:$0x1] %v234
        %v236 = vld [vmem:[%s179 + $0x14] sm:$0x1]
        %v237 = vsel %vm232, 0, %v236
        %238 = vst [vmem:[%s179 + $0x14] sm:$0x1] %v237
        %v239 = vld [vmem:[%s179 + $0x20] sm:$0x1]
        %v240 = vsel %vm232, 0, %v239
        %241 = vst [vmem:[%s179 + $0x20] sm:$0x1] %v240
        %v242 = vld [vmem:[%s179 + $0x2c] sm:$0x1]
        %v243 = vsel %vm232, 0, %v242
        %244 = vst [vmem:[%s179 + $0x2c] sm:$0x1] %v243
        %v245 = vld [vmem:[%s179 + $0x38] sm:$0x1]
        %v246 = vsel %vm232, 0, %v245
        %247 = vst [vmem:[%s179 + $0x38] sm:$0x1] %v246
        %v248 = vld [vmem:[%s179 + $0x44] sm:$0x1]
        %v249 = vsel %vm232, 0, %v248
        %250 = vst [vmem:[%s179 + $0x44] sm:$0x1] %v249
        %v251 = vld [vmem:[%s179 + $0x50] sm:$0x1]
        %v252 = vsel %vm232, 0, %v251
        %253 = vst [vmem:[%s179 + $0x50] sm:$0x1] %v252
        %v254 = vld [vmem:[%s179 + $0x5c] sm:$0x1]
        %v255 = vsel %vm232, 0, %v254
        %256 = vst [vmem:[%s179 + $0x5c] sm:$0x1] %v255
        %v257 = vld [vmem:[%s179 + $0x68] sm:$0x1]
        %v258 = vsel %vm232, 0, %v257
        %259 = vst [vmem:[%s179 + $0x68] sm:$0x1] %v258
        %v260 = vld [vmem:[%s179 + $0x74] sm:$0x1]
        %v261 = vsel %vm232, 0, %v260
        %262 = vst [vmem:[%s179 + $0x74] sm:$0x1] %v261
        %v263 = vld [vmem:[%s179 + $0x80] sm:$0x1]
        %v264 = vsel %vm232, 0, %v263
        %265 = vst [vmem:[%s179 + $0x80] sm:$0x1] %v264
        %v266 = vld [vmem:[%s179 + $0x8c] sm:$0x1]
        %v267 = vsel %vm232, 0, %v266
        %268 = vst [vmem:[%s179 + $0x8c] sm:$0x1] %v267
        %v269 = vld [vmem:[%s179 + $0x98] sm:$0x1]
        %v270 = vsel %vm232, 0, %v269
        %271 = vst [vmem:[%s179 + $0x98] sm:$0x1] %v270
        %v272 = vld [vmem:[%s179 + $0xa4] sm:$0x1]
        %v273 = vsel %vm232, 0, %v272
        %274 = vst [vmem:[%s179 + $0xa4] sm:$0x1] %v273
        %v275 = vld [vmem:[%s179 + $0xb0] sm:$0x1]
        %v276 = vsel %vm232, 0, %v275
        %277 = vst [vmem:[%s179 + $0xb0] sm:$0x1] %v276
        %v278 = vld [vmem:[%s179 + $0xbc] sm:$0x1]
        %v279 = vsel %vm232, 0, %v278
        %280 = vst [vmem:[%s179 + $0xbc] sm:$0x1] %v279
        %v281 = vld [vmem:[%s168] sm:$0xf]
        %v282 = vld [vmem:[%s168 + $0x4] sm:$0xf]
        %v283 = vld [vmem:[%s168 + $0x8] sm:$0xf]
        %v284 = vld [vmem:[%s168 + $0xc] sm:$0xf]
        %v285 = vld [vmem:[%s168 + $0x10] sm:$0xf]
        %v286 = vld [vmem:[%s168 + $0x14] sm:$0xf]
        %v287 = vld [vmem:[%s168 + $0x18] sm:$0xf]
        %v288 = vld [vmem:[%s168 + $0x1c] sm:$0xf]
        %v289 = vld [vmem:[%s168 + $0x20] sm:$0xf]
        %v290 = vld [vmem:[%s168 + $0x24] sm:$0xf]
        %v291 = vld [vmem:[%s168 + $0x28] sm:$0xf]
        %v292 = vld [vmem:[%s168 + $0x2c] sm:$0xf]
        %v293 = vld [vmem:[%s168 + $0x30] sm:$0xf]
        %v294 = vld [vmem:[%s168 + $0x34] sm:$0xf]
        %v295 = vld [vmem:[%s168 + $0x38] sm:$0xf]
        %v296 = vld [vmem:[%s168 + $0x3c] sm:$0xf]
        %v297 = vld [vmem:[%s168 + $0x40] sm:$0xf]
        %v298 = vld [vmem:[%s168 + $0x44] sm:$0xf]
        %v299 = vld [vmem:[%s168 + $0x48] sm:$0xf]
        %v300 = vld [vmem:[%s168 + $0x4c] sm:$0xf]
        %v301 = vld [vmem:[%s168 + $0x50] sm:$0xf]
        %v302 = vld [vmem:[%s168 + $0x54] sm:$0xf]
        %v303 = vld [vmem:[%s168 + $0x58] sm:$0xf]
        %v304 = vld [vmem:[%s168 + $0x5c] sm:$0xf]
        %v305 = vld [vmem:[%s168 + $0x60] sm:$0xf]
        %v306 = vld [vmem:[%s168 + $0x64] sm:$0xf]
        %v307 = vld [vmem:[%s168 + $0x68] sm:$0xf]
        %v308 = vld [vmem:[%s168 + $0x6c] sm:$0xf]
        %v309 = vld [vmem:[%s168 + $0x70] sm:$0xf]
        %v310 = vld [vmem:[%s168 + $0x74] sm:$0xf]
        %v311 = vld [vmem:[%s168 + $0x78] sm:$0xf]
        %v312 = vld [vmem:[%s168 + $0x7c] sm:$0xf]
        %vm313 = vsmask.f32 4368
        %vm314 = vmor %vm181, %vm313
        %v316 = vshrl.u32 %v281, 16
        %v318 = vrot.slane %v316, 7
        %v319 = vshll.u32 %v281, 16
        %v321 = vor.u32 %v318, %v319
        %v322 = vrot.slane %v318, 4
        %v324 = vshrl.u32 %v282, 16
        %v326 = vrot.slane %v324, 7
        %v327 = vshll.u32 %v282, 16
        %v329 = vor.u32 %v326, %v327
        %v330 = vsel %vm314, %v322, %v329
        %v331 = vrot.slane %v326, 4
        %v333 = vshrl.u32 %v283, 16
        %v335 = vrot.slane %v333, 7
        %v336 = vshll.u32 %v283, 16
        %v338 = vor.u32 %v335, %v336
        %v339 = vrot.slane %v335, 4
        %v341 = vshrl.u32 %v284, 16
        %v343 = vrot.slane %v341, 7
        %v344 = vshll.u32 %v284, 16
        %v346 = vor.u32 %v343, %v344
        %v347 = vsel %vm314, %v339, %v346
        %v348 = vrot.slane %v343, 4
        %v350 = vshrl.u32 %v285, 16
        %v352 = vrot.slane %v350, 7
        %v353 = vshll.u32 %v285, 16
        %v355 = vor.u32 %v352, %v353
        %v356 = vrot.slane %v352, 4
        %v358 = vshrl.u32 %v286, 16
        %v360 = vrot.slane %v358, 7
        %v361 = vshll.u32 %v286, 16
        %v363 = vor.u32 %v360, %v361
        %v364 = vsel %vm314, %v356, %v363
        %v365 = vrot.slane %v360, 4
        %v367 = vshrl.u32 %v287, 16
        %v369 = vrot.slane %v367, 7
        %v370 = vshll.u32 %v287, 16
        %v372 = vor.u32 %v369, %v370
        %v373 = vrot.slane %v369, 4
        %v375 = vshrl.u32 %v288, 16
        %v377 = vrot.slane %v375, 7
        %v378 = vshll.u32 %v288, 16
        %v380 = vor.u32 %v377, %v378
        %v381 = vsel %vm314, %v373, %v380
        %v382 = vrot.slane %v377, 4
        %v384 = vshrl.u32 %v289, 16
        %v386 = vrot.slane %v384, 7
        %v387 = vshll.u32 %v289, 16
        %v389 = vor.u32 %v386, %v387
        %v390 = vrot.slane %v386, 4
        %v392 = vshrl.u32 %v290, 16
        %v394 = vrot.slane %v392, 7
        %v395 = vshll.u32 %v290, 16
        %v397 = vor.u32 %v394, %v395
        %v398 = vsel %vm314, %v390, %v397
        %v399 = vrot.slane %v394, 4
        %v401 = vshrl.u32 %v291, 16
        %v403 = vrot.slane %v401, 7
        %v404 = vshll.u32 %v291, 16
        %v406 = vor.u32 %v403, %v404
        %v407 = vrot.slane %v403, 4
        %v409 = vshrl.u32 %v292, 16
        %v411 = vrot.slane %v409, 7
        %v412 = vshll.u32 %v292, 16
        %v414 = vor.u32 %v411, %v412
        %v415 = vsel %vm314, %v407, %v414
        %v416 = vrot.slane %v411, 4
        %v418 = vshrl.u32 %v293, 16
        %v420 = vrot.slane %v418, 7
        %v421 = vshll.u32 %v293, 16
        %v423 = vor.u32 %v420, %v421
        %v424 = vrot.slane %v420, 4
        %v426 = vshrl.u32 %v294, 16
        %v428 = vrot.slane %v426, 7
        %v429 = vshll.u32 %v294, 16
        %v431 = vor.u32 %v428, %v429
        %v432 = vsel %vm314, %v424, %v431
        %v433 = vrot.slane %v428, 4
        %v435 = vshrl.u32 %v295, 16
        %v437 = vrot.slane %v435, 7
        %v438 = vshll.u32 %v295, 16
        %v440 = vor.u32 %v437, %v438
        %v441 = vrot.slane %v437, 4
        %v443 = vshrl.u32 %v296, 16
        %v445 = vrot.slane %v443, 7
        %v446 = vshll.u32 %v296, 16
        %v448 = vor.u32 %v445, %v446
        %v449 = vsel %vm314, %v441, %v448
        %v450 = vrot.slane %v445, 4
        %v452 = vshrl.u32 %v297, 16
        %v454 = vrot.slane %v452, 7
        %v455 = vshll.u32 %v297, 16
        %v457 = vor.u32 %v454, %v455
        %v458 = vrot.slane %v454, 4
        %v460 = vshrl.u32 %v298, 16
        %v462 = vrot.slane %v460, 7
        %v463 = vshll.u32 %v298, 16
        %v465 = vor.u32 %v462, %v463
        %v466 = vsel %vm314, %v458, %v465
        %v467 = vrot.slane %v462, 4
        %v469 = vshrl.u32 %v299, 16
        %v471 = vrot.slane %v469, 7
        %v472 = vshll.u32 %v299, 16
        %v474 = vor.u32 %v471, %v472
        %v475 = vrot.slane %v471, 4
        %v477 = vshrl.u32 %v300, 16
        %v479 = vrot.slane %v477, 7
        %v480 = vshll.u32 %v300, 16
        %v482 = vor.u32 %v479, %v480
        %v483 = vsel %vm314, %v475, %v482
        %v484 = vrot.slane %v479, 4
        %v486 = vshrl.u32 %v301, 16
        %v488 = vrot.slane %v486, 7
        %v489 = vshll.u32 %v301, 16
        %v491 = vor.u32 %v488, %v489
        %v492 = vrot.slane %v488, 4
        %v494 = vshrl.u32 %v302, 16
        %v496 = vrot.slane %v494, 7
        %v497 = vshll.u32 %v302, 16
        %v499 = vor.u32 %v496, %v497
        %v500 = vsel %vm314, %v492, %v499
        %v501 = vrot.slane %v496, 4
        %v503 = vshrl.u32 %v303, 16
        %v505 = vrot.slane %v503, 7
        %v506 = vshll.u32 %v303, 16
        %v508 = vor.u32 %v505, %v506
        %v509 = vrot.slane %v505, 4
        %v511 = vshrl.u32 %v304, 16
        %v513 = vrot.slane %v511, 7
        %v514 = vshll.u32 %v304, 16
        %v516 = vor.u32 %v513, %v514
        %v517 = vsel %vm314, %v509, %v516
        %v518 = vrot.slane %v513, 4
        %v520 = vshrl.u32 %v305, 16
        %v522 = vrot.slane %v520, 7
        %v523 = vshll.u32 %v305, 16
        %v525 = vor.u32 %v522, %v523
        %v526 = vrot.slane %v522, 4
        %v528 = vshrl.u32 %v306, 16
        %v530 = vrot.slane %v528, 7
        %v531 = vshll.u32 %v306, 16
        %v533 = vor.u32 %v530, %v531
        %v534 = vsel %vm314, %v526, %v533
        %v535 = vrot.slane %v530, 4
        %v537 = vshrl.u32 %v307, 16
        %v539 = vrot.slane %v537, 7
        %v540 = vshll.u32 %v307, 16
        %v542 = vor.u32 %v539, %v540
        %v543 = vrot.slane %v539, 4
        %v545 = vshrl.u32 %v308, 16
        %v547 = vrot.slane %v545, 7
        %v548 = vshll.u32 %v308, 16
        %v550 = vor.u32 %v547, %v548
        %v551 = vsel %vm314, %v543, %v550
        %v552 = vrot.slane %v547, 4
        %v554 = vshrl.u32 %v309, 16
        %v556 = vrot.slane %v554, 7
        %v557 = vshll.u32 %v309, 16
        %v559 = vor.u32 %v556, %v557
        %v560 = vrot.slane %v556, 4
        %v562 = vshrl.u32 %v310, 16
        %v564 = vrot.slane %v562, 7
        %v565 = vshll.u32 %v310, 16
        %v567 = vor.u32 %v564, %v565
        %v568 = vsel %vm314, %v560, %v567
        %v569 = vrot.slane %v564, 4
        %v571 = vshrl.u32 %v311, 16
        %v573 = vrot.slane %v571, 7
        %v574 = vshll.u32 %v311, 16
        %v576 = vor.u32 %v573, %v574
        %v577 = vrot.slane %v573, 4
        %v579 = vshrl.u32 %v312, 16
        %v581 = vrot.slane %v579, 7
        %v582 = vshll.u32 %v312, 16
        %v584 = vor.u32 %v581, %v582
        %v585 = vsel %vm314, %v577, %v584
        %v586 = vrot.slane %v581, 4
        %vm635 = vcmask 60416
        %vm636 = vmand %vm635, %vm231
        %v637 = vld [vmem:[%s179] sm:$0xf]
        %v638 = vsel %vm636, %v321, %v637
        %639 = vst [vmem:[%s179] sm:$0xf] %v638
        %640 = vst.msk [vmem:[%s179 + $0x4] sm:$0xf] %vm170, %v330
        %v641 = vld [vmem:[%s179 + $0x8] sm:$0x1]
        %v642 = vsel %vm182, %v331, %v641
        %643 = vst [vmem:[%s179 + $0x8] sm:$0x1] %v642
        %v644 = vld [vmem:[%s179 + $0xc] sm:$0xf]
        %v645 = vsel %vm636, %v338, %v644
        %646 = vst [vmem:[%s179 + $0xc] sm:$0xf] %v645
        %647 = vst.msk [vmem:[%s179 + $0x10] sm:$0xf] %vm170, %v347
        %v648 = vld [vmem:[%s179 + $0x14] sm:$0x1]
        %v649 = vsel %vm182, %v348, %v648
        %650 = vst [vmem:[%s179 + $0x14] sm:$0x1] %v649
        %v651 = vld [vmem:[%s179 + $0x18] sm:$0xf]
        %v652 = vsel %vm636, %v355, %v651
        %653 = vst [vmem:[%s179 + $0x18] sm:$0xf] %v652
        %654 = vst.msk [vmem:[%s179 + $0x1c] sm:$0xf] %vm170, %v364
        %v655 = vld [vmem:[%s179 + $0x20] sm:$0x1]
        %v656 = vsel %vm182, %v365, %v655
        %657 = vst [vmem:[%s179 + $0x20] sm:$0x1] %v656
        %v658 = vld [vmem:[%s179 + $0x24] sm:$0xf]
        %v659 = vsel %vm636, %v372, %v658
        %660 = vst [vmem:[%s179 + $0x24] sm:$0xf] %v659
        %661 = vst.msk [vmem:[%s179 + $0x28] sm:$0xf] %vm170, %v381
        %v662 = vld [vmem:[%s179 + $0x2c] sm:$0x1]
        %v663 = vsel %vm182, %v382, %v662
        %664 = vst [vmem:[%s179 + $0x2c] sm:$0x1] %v663
        %v665 = vld [vmem:[%s179 + $0x30] sm:$0xf]
        %v666 = vsel %vm636, %v389, %v665
        %667 = vst [vmem:[%s179 + $0x30] sm:$0xf] %v666
        %668 = vst.msk [vmem:[%s179 + $0x34] sm:$0xf] %vm170, %v398
        %v669 = vld [vmem:[%s179 + $0x38] sm:$0x1]
        %v670 = vsel %vm182, %v399, %v669
        %671 = vst [vmem:[%s179 + $0x38] sm:$0x1] %v670
        %v672 = vld [vmem:[%s179 + $0x3c] sm:$0xf]
        %v673 = vsel %vm636, %v406, %v672
        %674 = vst [vmem:[%s179 + $0x3c] sm:$0xf] %v673
        %675 = vst.msk [vmem:[%s179 + $0x40] sm:$0xf] %vm170, %v415
        %v676 = vld [vmem:[%s179 + $0x44] sm:$0x1]
        %v677 = vsel %vm182, %v416, %v676
        %678 = vst [vmem:[%s179 + $0x44] sm:$0x1] %v677
        %v679 = vld [vmem:[%s179 + $0x48] sm:$0xf]
        %v680 = vsel %vm636, %v423, %v679
        %681 = vst [vmem:[%s179 + $0x48] sm:$0xf] %v680
        %682 = vst.msk [vmem:[%s179 + $0x4c] sm:$0xf] %vm170, %v432
        %v683 = vld [vmem:[%s179 + $0x50] sm:$0x1]
        %v684 = vsel %vm182, %v433, %v683
        %685 = vst [vmem:[%s179 + $0x50] sm:$0x1] %v684
        %v686 = vld [vmem:[%s179 + $0x54] sm:$0xf]
        %v687 = vsel %vm636, %v440, %v686
        %688 = vst [vmem:[%s179 + $0x54] sm:$0xf] %v687
        %689 = vst.msk [vmem:[%s179 + $0x58] sm:$0xf] %vm170, %v449
        %v690 = vld [vmem:[%s179 + $0x5c] sm:$0x1]
        %v691 = vsel %vm182, %v450, %v690
        %692 = vst [vmem:[%s179 + $0x5c] sm:$0x1] %v691
        %v693 = vld [vmem:[%s179 + $0x60] sm:$0xf]
        %v694 = vsel %vm636, %v457, %v693
        %695 = vst [vmem:[%s179 + $0x60] sm:$0xf] %v694
        %696 = vst.msk [vmem:[%s179 + $0x64] sm:$0xf] %vm170, %v466
        %v697 = vld [vmem:[%s179 + $0x68] sm:$0x1]
        %v698 = vsel %vm182, %v467, %v697
        %699 = vst [vmem:[%s179 + $0x68] sm:$0x1] %v698
        %v700 = vld [vmem:[%s179 + $0x6c] sm:$0xf]
        %v701 = vsel %vm636, %v474, %v700
        %702 = vst [vmem:[%s179 + $0x6c] sm:$0xf] %v701
        %703 = vst.msk [vmem:[%s179 + $0x70] sm:$0xf] %vm170, %v483
        %v704 = vld [vmem:[%s179 + $0x74] sm:$0x1]
        %v705 = vsel %vm182, %v484, %v704
        %706 = vst [vmem:[%s179 + $0x74] sm:$0x1] %v705
        %v707 = vld [vmem:[%s179 + $0x78] sm:$0xf]
        %v708 = vsel %vm636, %v491, %v707
        %709 = vst [vmem:[%s179 + $0x78] sm:$0xf] %v708
        %710 = vst.msk [vmem:[%s179 + $0x7c] sm:$0xf] %vm170, %v500
        %v711 = vld [vmem:[%s179 + $0x80] sm:$0x1]
        %v712 = vsel %vm182, %v501, %v711
        %713 = vst [vmem:[%s179 + $0x80] sm:$0x1] %v712
        %v714 = vld [vmem:[%s179 + $0x84] sm:$0xf]
        %v715 = vsel %vm636, %v508, %v714
        %716 = vst [vmem:[%s179 + $0x84] sm:$0xf] %v715
        %717 = vst.msk [vmem:[%s179 + $0x88] sm:$0xf] %vm170, %v517
        %v718 = vld [vmem:[%s179 + $0x8c] sm:$0x1]
        %v719 = vsel %vm182, %v518, %v718
        %720 = vst [vmem:[%s179 + $0x8c] sm:$0x1] %v719
        %v721 = vld [vmem:[%s179 + $0x90] sm:$0xf]
        %v722 = vsel %vm636, %v525, %v721
        %723 = vst [vmem:[%s179 + $0x90] sm:$0xf] %v722
        %724 = vst.msk [vmem:[%s179 + $0x94] sm:$0xf] %vm170, %v534
        %v725 = vld [vmem:[%s179 + $0x98] sm:$0x1]
        %v726 = vsel %vm182, %v535, %v725
        %727 = vst [vmem:[%s179 + $0x98] sm:$0x1] %v726
        %v728 = vld [vmem:[%s179 + $0x9c] sm:$0xf]
        %v729 = vsel %vm636, %v542, %v728
        %730 = vst [vmem:[%s179 + $0x9c] sm:$0xf] %v729
        %731 = vst.msk [vmem:[%s179 + $0xa0] sm:$0xf] %vm170, %v551
        %v732 = vld [vmem:[%s179 + $0xa4] sm:$0x1]
        %v733 = vsel %vm182, %v552, %v732
        %734 = vst [vmem:[%s179 + $0xa4] sm:$0x1] %v733
        %v735 = vld [vmem:[%s179 + $0xa8] sm:$0xf]
        %v736 = vsel %vm636, %v559, %v735
        %737 = vst [vmem:[%s179 + $0xa8] sm:$0xf] %v736
        %738 = vst.msk [vmem:[%s179 + $0xac] sm:$0xf] %vm170, %v568
        %v739 = vld [vmem:[%s179 + $0xb0] sm:$0x1]
        %v740 = vsel %vm182, %v569, %v739
        %741 = vst [vmem:[%s179 + $0xb0] sm:$0x1] %v740
        %v742 = vld [vmem:[%s179 + $0xb4] sm:$0xf]
        %v743 = vsel %vm636, %v576, %v742
        %744 = vst [vmem:[%s179 + $0xb4] sm:$0xf] %v743
        %745 = vst.msk [vmem:[%s179 + $0xb8] sm:$0xf] %vm170, %v585
        %v746 = vld [vmem:[%s179 + $0xbc] sm:$0x1]
        %v747 = vsel %vm182, %v586, %v746
        %748 = vst [vmem:[%s179 + $0xbc] sm:$0x1] %v747
        %v749 = vld [vmem:[#allocation2] sm:$0xf]
        %v750 = vld [vmem:[#allocation2 + $0x4] sm:$0xf]
        %v751 = vld [vmem:[#allocation2 + $0xc] sm:$0xf]
        %v752 = vld [vmem:[#allocation2 + $0x10] sm:$0xf]
        %v753 = vld [vmem:[#allocation2 + $0x18] sm:$0xf]
        %v754 = vld [vmem:[#allocation2 + $0x1c] sm:$0xf]
        %v755 = vld [vmem:[#allocation2 + $0x24] sm:$0xf]
        %v756 = vld [vmem:[#allocation2 + $0x28] sm:$0xf]
        %v757 = vld [vmem:[#allocation2 + $0x30] sm:$0xf]
        %v758 = vld [vmem:[#allocation2 + $0x34] sm:$0xf]
        %v759 = vld [vmem:[#allocation2 + $0x3c] sm:$0xf]
        %v760 = vld [vmem:[#allocation2 + $0x40] sm:$0xf]
        %v761 = vld [vmem:[#allocation2 + $0x48] sm:$0xf]
        %v762 = vld [vmem:[#allocation2 + $0x4c] sm:$0xf]
        %v763 = vld [vmem:[#allocation2 + $0x54] sm:$0xf]
        %v764 = vld [vmem:[#allocation2 + $0x58] sm:$0xf]
        %v765 = vld [vmem:[#allocation2 + $0x60] sm:$0xf]
        %v766 = vld [vmem:[#allocation2 + $0x64] sm:$0xf]
        %v767 = vld [vmem:[#allocation2 + $0x6c] sm:$0xf]
        %v768 = vld [vmem:[#allocation2 + $0x70] sm:$0xf]
        %v769 = vld [vmem:[#allocation2 + $0x78] sm:$0xf]
        %v770 = vld [vmem:[#allocation2 + $0x7c] sm:$0xf]
        %v771 = vld [vmem:[#allocation2 + $0x84] sm:$0xf]
        %v772 = vld [vmem:[#allocation2 + $0x88] sm:$0xf]
        %v773 = vld [vmem:[#allocation2 + $0x90] sm:$0xf]
        %v774 = vld [vmem:[#allocation2 + $0x94] sm:$0xf]
        %v775 = vld [vmem:[#allocation2 + $0x9c] sm:$0xf]
        %v776 = vld [vmem:[#allocation2 + $0xa0] sm:$0xf]
        %v777 = vld [vmem:[#allocation2 + $0xa8] sm:$0xf]
        %v778 = vld [vmem:[#allocation2 + $0xac] sm:$0xf]
        %v779 = vld [vmem:[#allocation2 + $0xb4] sm:$0xf]
        %v780 = vld [vmem:[#allocation2 + $0xb8] sm:$0xf]
        %v813 = vunpack.c.l.b16 %v749
        %v814 = vunpack.c.l.b16 %v750
        %v815 = vunpack.c.l.b16 %v751
        %v816 = vunpack.c.l.b16 %v752
        %v817 = vunpack.c.l.b16 %v753
        %v818 = vunpack.c.l.b16 %v754
        %v819 = vunpack.c.l.b16 %v755
        %v820 = vunpack.c.l.b16 %v756
        %v821 = vunpack.c.l.b16 %v757
        %v822 = vunpack.c.l.b16 %v758
        %v823 = vunpack.c.l.b16 %v759
        %v824 = vunpack.c.l.b16 %v760
        %v825 = vunpack.c.l.b16 %v761
        %v826 = vunpack.c.l.b16 %v762
        %v827 = vunpack.c.l.b16 %v763
        %v828 = vunpack.c.l.b16 %v764
        %v829 = vunpack.c.l.b16 %v765
        %v830 = vunpack.c.l.b16 %v766
        %v831 = vunpack.c.l.b16 %v767
        %v832 = vunpack.c.l.b16 %v768
        %v833 = vunpack.c.l.b16 %v769
        %v834 = vunpack.c.l.b16 %v770
        %v835 = vunpack.c.l.b16 %v771
        %v836 = vunpack.c.l.b16 %v772
        %v837 = vunpack.c.l.b16 %v773
        %v838 = vunpack.c.l.b16 %v774
        %v839 = vunpack.c.l.b16 %v775
        %v840 = vunpack.c.l.b16 %v776
        %v841 = vunpack.c.l.b16 %v777
        %v842 = vunpack.c.l.b16 %v778
        %v843 = vunpack.c.l.b16 %v779
        %v844 = vunpack.c.l.b16 %v780
        %v845 = vpack.c.b16 %v814, %v813
        %v846 = vpack.c.b16 %v816, %v815
        %v847 = vpack.c.b16 %v818, %v817
        %v848 = vpack.c.b16 %v820, %v819
        %v849 = vpack.c.b16 %v822, %v821
        %v850 = vpack.c.b16 %v824, %v823
        %v851 = vpack.c.b16 %v826, %v825
        %v852 = vpack.c.b16 %v828, %v827
        %v853 = vpack.c.b16 %v830, %v829
        %v854 = vpack.c.b16 %v832, %v831
        %v855 = vpack.c.b16 %v834, %v833
        %v856 = vpack.c.b16 %v836, %v835
        %v857 = vpack.c.b16 %v838, %v837
        %v858 = vpack.c.b16 %v840, %v839
        %v859 = vpack.c.b16 %v842, %v841
        %v860 = vpack.c.b16 %v844, %v843
        %vm877 = vcmask 64512
        %878 = vst.msk [vmem:[#allocation3] sm:$0xff] %vm877, %v845
        %879 = vst.msk [vmem:[#allocation3 + $0x8] sm:$0xff] %vm877, %v846
        %880 = vst.msk [vmem:[#allocation3 + $0x10] sm:$0xff] %vm877, %v847
        %881 = vst.msk [vmem:[#allocation3 + $0x18] sm:$0xff] %vm877, %v848
        %882 = vst.msk [vmem:[#allocation3 + $0x20] sm:$0xff] %vm877, %v849
        %883 = vst.msk [vmem:[#allocation3 + $0x28] sm:$0xff] %vm877, %v850
        %884 = vst.msk [vmem:[#allocation3 + $0x30] sm:$0xff] %vm877, %v851
        %885 = vst.msk [vmem:[#allocation3 + $0x38] sm:$0xff] %vm877, %v852
        %886 = vst.msk [vmem:[#allocation3 + $0x40] sm:$0xff] %vm877, %v853
        %887 = vst.msk [vmem:[#allocation3 + $0x48] sm:$0xff] %vm877, %v854
        %888 = vst.msk [vmem:[#allocation3 + $0x50] sm:$0xff] %vm877, %v855
        %889 = vst.msk [vmem:[#allocation3 + $0x58] sm:$0xff] %vm877, %v856
        %890 = vst.msk [vmem:[#allocation3 + $0x60] sm:$0xff] %vm877, %v857
        %891 = vst.msk [vmem:[#allocation3 + $0x68] sm:$0xff] %vm877, %v858
        %892 = vst.msk [vmem:[#allocation3 + $0x70] sm:$0xff] %vm877, %v859
        %893 = vst.msk [vmem:[#allocation3 + $0x78] sm:$0xff] %vm877, %v860
        %v894 = vld [vmem:[#allocation2] sm:$0xf]
        %v895 = vld [vmem:[#allocation2 + $0x4] sm:$0xf]
        %v896 = vld [vmem:[#allocation2 + $0x8] sm:$0x1]
        %v897 = vld [vmem:[#allocation2 + $0xc] sm:$0xf]
        %v898 = vld [vmem:[#allocation2 + $0x10] sm:$0xf]
        %v899 = vld [vmem:[#allocation2 + $0x14] sm:$0x1]
        %v900 = vld [vmem:[#allocation2 + $0x18] sm:$0xf]
        %v901 = vld [vmem:[#allocation2 + $0x1c] sm:$0xf]
        %v902 = vld [vmem:[#allocation2 + $0x20] sm:$0x1]
        %v903 = vld [vmem:[#allocation2 + $0x24] sm:$0xf]
        %v904 = vld [vmem:[#allocation2 + $0x28] sm:$0xf]
        %v905 = vld [vmem:[#allocation2 + $0x2c] sm:$0x1]
        %v906 = vld [vmem:[#allocation2 + $0x30] sm:$0xf]
        %v907 = vld [vmem:[#allocation2 + $0x34] sm:$0xf]
        %v908 = vld [vmem:[#allocation2 + $0x38] sm:$0x1]
        %v909 = vld [vmem:[#allocation2 + $0x3c] sm:$0xf]
        %v910 = vld [vmem:[#allocation2 + $0x40] sm:$0xf]
        %v911 = vld [vmem:[#allocation2 + $0x44] sm:$0x1]
        %v912 = vld [vmem:[#allocation2 + $0x48] sm:$0xf]
        %v913 = vld [vmem:[#allocation2 + $0x4c] sm:$0xf]
        %v914 = vld [vmem:[#allocation2 + $0x50] sm:$0x1]
        %v915 = vld [vmem:[#allocation2 + $0x54] sm:$0xf]
        %v916 = vld [vmem:[#allocation2 + $0x58] sm:$0xf]
        %v917 = vld [vmem:[#allocation2 + $0x5c] sm:$0x1]
        %v918 = vld [vmem:[#allocation2 + $0x60] sm:$0xf]
        %v919 = vld [vmem:[#allocation2 + $0x64] sm:$0xf]
        %v920 = vld [vmem:[#allocation2 + $0x68] sm:$0x1]
        %v921 = vld [vmem:[#allocation2 + $0x6c] sm:$0xf]
        %v922 = vld [vmem:[#allocation2 + $0x70] sm:$0xf]
        %v923 = vld [vmem:[#allocation2 + $0x74] sm:$0x1]
        %v924 = vld [vmem:[#allocation2 + $0x78] sm:$0xf]
        %v925 = vld [vmem:[#allocation2 + $0x7c] sm:$0xf]
        %v926 = vld [vmem:[#allocation2 + $0x80] sm:$0x1]
        %v927 = vld [vmem:[#allocation2 + $0x84] sm:$0xf]
        %v928 = vld [vmem:[#allocation2 + $0x88] sm:$0xf]
        %v929 = vld [vmem:[#allocation2 + $0x8c] sm:$0x1]
        %v930 = vld [vmem:[#allocation2 + $0x90] sm:$0xf]
        %v931 = vld [vmem:[#allocation2 + $0x94] sm:$0xf]
        %v932 = vld [vmem:[#allocation2 + $0x98] sm:$0x1]
        %v933 = vld [vmem:[#allocation2 + $0x9c] sm:$0xf]
        %v934 = vld [vmem:[#allocation2 + $0xa0] sm:$0xf]
        %v935 = vld [vmem:[#allocation2 + $0xa4] sm:$0x1]
        %v936 = vld [vmem:[#allocation2 + $0xa8] sm:$0xf]
        %v937 = vld [vmem:[#allocation2 + $0xac] sm:$0xf]
        %v938 = vld [vmem:[#allocation2 + $0xb0] sm:$0x1]
        %v939 = vld [vmem:[#allocation2 + $0xb4] sm:$0xf]
        %v940 = vld [vmem:[#allocation2 + $0xb8] sm:$0xf]
        %v941 = vld [vmem:[#allocation2 + $0xbc] sm:$0x1]
        %vm942 = vsmask.f32 3328
        %vm943 = vsmask.f32 7440
        %vm944 = vmor %vm942, %vm943
        %v946 = vshrl.u32 %v894, 16
        %v948 = vrot.slane %v946, 4
        %v949 = vshll.u32 %v894, 16
        %v951 = vrot.slane %v949, 5
        %v952 = vor.u32 %v948, %v951
        %v953 = vrot.slane %v952, 4
        %v955 = vshll.u32 %v895, 16
        %v957 = vrot.slane %v955, 5
        %v958 = vsel %vm944, %v953, %v957
        %v959 = vshrl.u32 %v895, 16
        %v961 = vrot.slane %v959, 4
        %v962 = vor.u32 %v961, %v957
        %v963 = vrot.slane %v962, 4
        %v965 = vshll.u32 %v896, 16
        %v967 = vrot.slane %v965, 5
        %v968 = vsel %vm944, %v963, %v967
        %v970 = vshrl.u32 %v897, 16
        %v972 = vrot.slane %v970, 4
        %v973 = vshll.u32 %v897, 16
        %v975 = vrot.slane %v973, 5
        %v976 = vor.u32 %v972, %v975
        %v977 = vrot.slane %v976, 4
        %v979 = vshll.u32 %v898, 16
        %v981 = vrot.slane %v979, 5
        %v982 = vsel %vm944, %v977, %v981
        %v983 = vshrl.u32 %v898, 16
        %v985 = vrot.slane %v983, 4
        %v986 = vor.u32 %v985, %v981
        %v987 = vrot.slane %v986, 4
        %v989 = vshll.u32 %v899, 16
        %v991 = vrot.slane %v989, 5
        %v992 = vsel %vm944, %v987, %v991
        %v994 = vshrl.u32 %v900, 16
        %v996 = vrot.slane %v994, 4
        %v997 = vshll.u32 %v900, 16
        %v999 = vrot.slane %v997, 5
        %v1000 = vor.u32 %v996, %v999
        %v1001 = vrot.slane %v1000, 4
        %v1003 = vshll.u32 %v901, 16
        %v1005 = vrot.slane %v1003, 5
        %v1006 = vsel %vm944, %v1001, %v1005
        %v1007 = vshrl.u32 %v901, 16
        %v1009 = vrot.slane %v1007, 4
        %v1010 = vor.u32 %v1009, %v1005
        %v1011 = vrot.slane %v1010, 4
        %v1013 = vshll.u32 %v902, 16
        %v1015 = vrot.slane %v1013, 5
        %v1016 = vsel %vm944, %v1011, %v1015
        %v1018 = vshrl.u32 %v903, 16
        %v1020 = vrot.slane %v1018, 4
        %v1021 = vshll.u32 %v903, 16
        %v1023 = vrot.slane %v1021, 5
        %v1024 = vor.u32 %v1020, %v1023
        %v1025 = vrot.slane %v1024, 4
        %v1027 = vshll.u32 %v904, 16
        %v1029 = vrot.slane %v1027, 5
        %v1030 = vsel %vm944, %v1025, %v1029
        %v1031 = vshrl.u32 %v904, 16
        %v1033 = vrot.slane %v1031, 4
        %v1034 = vor.u32 %v1033, %v1029
        %v1035 = vrot.slane %v1034, 4
        %v1037 = vshll.u32 %v905, 16
        %v1039 = vrot.slane %v1037, 5
        %v1040 = vsel %vm944, %v1035, %v1039
        %v1042 = vshrl.u32 %v906, 16
        %v1044 = vrot.slane %v1042, 4
        %v1045 = vshll.u32 %v906, 16
        %v1047 = vrot.slane %v1045, 5
        %v1048 = vor.u32 %v1044, %v1047
        %v1049 = vrot.slane %v1048, 4
        %v1051 = vshll.u32 %v907, 16
        %v1053 = vrot.slane %v1051, 5
        %v1054 = vsel %vm944, %v1049, %v1053
        %v1055 = vshrl.u32 %v907, 16
        %v1057 = vrot.slane %v1055, 4
        %v1058 = vor.u32 %v1057, %v1053
        %v1059 = vrot.slane %v1058, 4
        %v1061 = vshll.u32 %v908, 16
        %v1063 = vrot.slane %v1061, 5
        %v1064 = vsel %vm944, %v1059, %v1063
        %v1066 = vshrl.u32 %v909, 16
        %v1068 = vrot.slane %v1066, 4
        %v1069 = vshll.u32 %v909, 16
        %v1071 = vrot.slane %v1069, 5
        %v1072 = vor.u32 %v1068, %v1071
        %v1073 = vrot.slane %v1072, 4
        %v1075 = vshll.u32 %v910, 16
        %v1077 = vrot.slane %v1075, 5
        %v1078 = vsel %vm944, %v1073, %v1077
        %v1079 = vshrl.u32 %v910, 16
        %v1081 = vrot.slane %v1079, 4
        %v1082 = vor.u32 %v1081, %v1077
        %v1083 = vrot.slane %v1082, 4
        %v1085 = vshll.u32 %v911, 16
        %v1087 = vrot.slane %v1085, 5
        %v1088 = vsel %vm944, %v1083, %v1087
        %v1090 = vshrl.u32 %v912, 16
        %v1092 = vrot.slane %v1090, 4
        %v1093 = vshll.u32 %v912, 16
        %v1095 = vrot.slane %v1093, 5
        %v1096 = vor.u32 %v1092, %v1095
        %v1097 = vrot.slane %v1096, 4
        %v1099 = vshll.u32 %v913, 16
        %v1101 = vrot.slane %v1099, 5
        %v1102 = vsel %vm944, %v1097, %v1101
        %v1103 = vshrl.u32 %v913, 16
        %v1105 = vrot.slane %v1103, 4
        %v1106 = vor.u32 %v1105, %v1101
        %v1107 = vrot.slane %v1106, 4
        %v1109 = vshll.u32 %v914, 16
        %v1111 = vrot.slane %v1109, 5
        %v1112 = vsel %vm944, %v1107, %v1111
        %v1114 = vshrl.u32 %v915, 16
        %v1116 = vrot.slane %v1114, 4
        %v1117 = vshll.u32 %v915, 16
        %v1119 = vrot.slane %v1117, 5
        %v1120 = vor.u32 %v1116, %v1119
        %v1121 = vrot.slane %v1120, 4
        %v1123 = vshll.u32 %v916, 16
        %v1125 = vrot.slane %v1123, 5
        %v1126 = vsel %vm944, %v1121, %v1125
        %v1127 = vshrl.u32 %v916, 16
        %v1129 = vrot.slane %v1127, 4
        %v1130 = vor.u32 %v1129, %v1125
        %v1131 = vrot.slane %v1130, 4
        %v1133 = vshll.u32 %v917, 16
        %v1135 = vrot.slane %v1133, 5
        %v1136 = vsel %vm944, %v1131, %v1135
        %v1138 = vshrl.u32 %v918, 16
        %v1140 = vrot.slane %v1138, 4
        %v1141 = vshll.u32 %v918, 16
        %v1143 = vrot.slane %v1141, 5
        %v1144 = vor.u32 %v1140, %v1143
        %v1145 = vrot.slane %v1144, 4
        %v1147 = vshll.u32 %v919, 16
        %v1149 = vrot.slane %v1147, 5
        %v1150 = vsel %vm944, %v1145, %v1149
        %v1151 = vshrl.u32 %v919, 16
        %v1153 = vrot.slane %v1151, 4
        %v1154 = vor.u32 %v1153, %v1149
        %v1155 = vrot.slane %v1154, 4
        %v1157 = vshll.u32 %v920, 16
        %v1159 = vrot.slane %v1157, 5
        %v1160 = vsel %vm944, %v1155, %v1159
        %v1162 = vshrl.u32 %v921, 16
        %v1164 = vrot.slane %v1162, 4
        %v1165 = vshll.u32 %v921, 16
        %v1167 = vrot.slane %v1165, 5
        %v1168 = vor.u32 %v1164, %v1167
        %v1169 = vrot.slane %v1168, 4
        %v1171 = vshll.u32 %v922, 16
        %v1173 = vrot.slane %v1171, 5
        %v1174 = vsel %vm944, %v1169, %v1173
        %v1175 = vshrl.u32 %v922, 16
        %v1177 = vrot.slane %v1175, 4
        %v1178 = vor.u32 %v1177, %v1173
        %v1179 = vrot.slane %v1178, 4
        %v1181 = vshll.u32 %v923, 16
        %v1183 = vrot.slane %v1181, 5
        %v1184 = vsel %vm944, %v1179, %v1183
        %v1186 = vshrl.u32 %v924, 16
        %v1188 = vrot.slane %v1186, 4
        %v1189 = vshll.u32 %v924, 16
        %v1191 = vrot.slane %v1189, 5
        %v1192 = vor.u32 %v1188, %v1191
        %v1193 = vrot.slane %v1192, 4
        %v1195 = vshll.u32 %v925, 16
        %v1197 = vrot.slane %v1195, 5
        %v1198 = vsel %vm944, %v1193, %v1197
        %v1199 = vshrl.u32 %v925, 16
        %v1201 = vrot.slane %v1199, 4
        %v1202 = vor.u32 %v1201, %v1197
        %v1203 = vrot.slane %v1202, 4
        %v1205 = vshll.u32 %v926, 16
        %v1207 = vrot.slane %v1205, 5
        %v1208 = vsel %vm944, %v1203, %v1207
        %v1210 = vshrl.u32 %v927, 16
        %v1212 = vrot.slane %v1210, 4
        %v1213 = vshll.u32 %v927, 16
        %v1215 = vrot.slane %v1213, 5
        %v1216 = vor.u32 %v1212, %v1215
        %v1217 = vrot.slane %v1216, 4
        %v1219 = vshll.u32 %v928, 16
        %v1221 = vrot.slane %v1219, 5
        %v1222 = vsel %vm944, %v1217, %v1221
        %v1223 = vshrl.u32 %v928, 16
        %v1225 = vrot.slane %v1223, 4
        %v1226 = vor.u32 %v1225, %v1221
        %v1227 = vrot.slane %v1226, 4
        %v1229 = vshll.u32 %v929, 16
        %v1231 = vrot.slane %v1229, 5
        %v1232 = vsel %vm944, %v1227, %v1231
        %v1234 = vshrl.u32 %v930, 16
        %v1236 = vrot.slane %v1234, 4
        %v1237 = vshll.u32 %v930, 16
        %v1239 = vrot.slane %v1237, 5
        %v1240 = vor.u32 %v1236, %v1239
        %v1241 = vrot.slane %v1240, 4
        %v1243 = vshll.u32 %v931, 16
        %v1245 = vrot.slane %v1243, 5
        %v1246 = vsel %vm944, %v1241, %v1245
        %v1247 = vshrl.u32 %v931, 16
        %v1249 = vrot.slane %v1247, 4
        %v1250 = vor.u32 %v1249, %v1245
        %v1251 = vrot.slane %v1250, 4
        %v1253 = vshll.u32 %v932, 16
        %v1255 = vrot.slane %v1253, 5
        %v1256 = vsel %vm944, %v1251, %v1255
        %v1258 = vshrl.u32 %v933, 16
        %v1260 = vrot.slane %v1258, 4
        %v1261 = vshll.u32 %v933, 16
        %v1263 = vrot.slane %v1261, 5
        %v1264 = vor.u32 %v1260, %v1263
        %v1265 = vrot.slane %v1264, 4
        %v1267 = vshll.u32 %v934, 16
        %v1269 = vrot.slane %v1267, 5
        %v1270 = vsel %vm944, %v1265, %v1269
        %v1271 = vshrl.u32 %v934, 16
        %v1273 = vrot.slane %v1271, 4
        %v1274 = vor.u32 %v1273, %v1269
        %v1275 = vrot.slane %v1274, 4
        %v1277 = vshll.u32 %v935, 16
        %v1279 = vrot.slane %v1277, 5
        %v1280 = vsel %vm944, %v1275, %v1279
        %v1282 = vshrl.u32 %v936, 16
        %v1284 = vrot.slane %v1282, 4
        %v1285 = vshll.u32 %v936, 16
        %v1287 = vrot.slane %v1285, 5
        %v1288 = vor.u32 %v1284, %v1287
        %v1289 = vrot.slane %v1288, 4
        %v1291 = vshll.u32 %v937, 16
        %v1293 = vrot.slane %v1291, 5
        %v1294 = vsel %vm944, %v1289, %v1293
        %v1295 = vshrl.u32 %v937, 16
        %v1297 = vrot.slane %v1295, 4
        %v1298 = vor.u32 %v1297, %v1293
        %v1299 = vrot.slane %v1298, 4
        %v1301 = vshll.u32 %v938, 16
        %v1303 = vrot.slane %v1301, 5
        %v1304 = vsel %vm944, %v1299, %v1303
        %v1306 = vshrl.u32 %v939, 16
        %v1308 = vrot.slane %v1306, 4
        %v1309 = vshll.u32 %v939, 16
        %v1311 = vrot.slane %v1309, 5
        %v1312 = vor.u32 %v1308, %v1311
        %v1313 = vrot.slane %v1312, 4
        %v1315 = vshll.u32 %v940, 16
        %v1317 = vrot.slane %v1315, 5
        %v1318 = vsel %vm944, %v1313, %v1317
        %v1319 = vshrl.u32 %v940, 16
        %v1321 = vrot.slane %v1319, 4
        %v1322 = vor.u32 %v1321, %v1317
        %v1323 = vrot.slane %v1322, 4
        %v1325 = vshll.u32 %v941, 16
        %v1327 = vrot.slane %v1325, 5
        %v1328 = vsel %vm944, %v1323, %v1327
        %v1329 = vunpack.c.l.b16 %v958
        %v1330 = vunpack.c.l.b16 %v968
        %v1331 = vunpack.c.l.b16 %v982
        %v1332 = vunpack.c.l.b16 %v992
        %v1333 = vunpack.c.l.b16 %v1006
        %v1334 = vunpack.c.l.b16 %v1016
        %v1335 = vunpack.c.l.b16 %v1030
        %v1336 = vunpack.c.l.b16 %v1040
        %v1337 = vunpack.c.l.b16 %v1054
        %v1338 = vunpack.c.l.b16 %v1064
        %v1339 = vunpack.c.l.b16 %v1078
        %v1340 = vunpack.c.l.b16 %v1088
        %v1341 = vunpack.c.l.b16 %v1102
        %v1342 = vunpack.c.l.b16 %v1112
        %v1343 = vunpack.c.l.b16 %v1126
        %v1344 = vunpack.c.l.b16 %v1136
        %v1345 = vunpack.c.l.b16 %v1150
        %v1346 = vunpack.c.l.b16 %v1160
        %v1347 = vunpack.c.l.b16 %v1174
        %v1348 = vunpack.c.l.b16 %v1184
        %v1349 = vunpack.c.l.b16 %v1198
        %v1350 = vunpack.c.l.b16 %v1208
        %v1351 = vunpack.c.l.b16 %v1222
        %v1352 = vunpack.c.l.b16 %v1232
        %v1353 = vunpack.c.l.b16 %v1246
        %v1354 = vunpack.c.l.b16 %v1256
        %v1355 = vunpack.c.l.b16 %v1270
        %v1356 = vunpack.c.l.b16 %v1280
        %v1357 = vunpack.c.l.b16 %v1294
        %v1358 = vunpack.c.l.b16 %v1304
        %v1359 = vunpack.c.l.b16 %v1318
        %v1360 = vunpack.c.l.b16 %v1328
        %v1361 = vpack.c.b16 %v1330, %v1329
        %v1362 = vpack.c.b16 %v1332, %v1331
        %v1363 = vpack.c.b16 %v1334, %v1333
        %v1364 = vpack.c.b16 %v1336, %v1335
        %v1365 = vpack.c.b16 %v1338, %v1337
        %v1366 = vpack.c.b16 %v1340, %v1339
        %v1367 = vpack.c.b16 %v1342, %v1341
        %v1368 = vpack.c.b16 %v1344, %v1343
        %v1369 = vpack.c.b16 %v1346, %v1345
        %v1370 = vpack.c.b16 %v1348, %v1347
        %v1371 = vpack.c.b16 %v1350, %v1349
        %v1372 = vpack.c.b16 %v1352, %v1351
        %v1373 = vpack.c.b16 %v1354, %v1353
        %v1374 = vpack.c.b16 %v1356, %v1355
        %v1375 = vpack.c.b16 %v1358, %v1357
        %v1376 = vpack.c.b16 %v1360, %v1359
        %1377 = vrot.lane.b32.xlu0 %v1361, 8
        %v1378 = vpop.permute.xlu0 %1377
        %1379 = vrot.lane.b32.xlu0 %v1362, 8
        %v1380 = vpop.permute.xlu0 %1379
        %1381 = vrot.lane.b32.xlu0 %v1363, 8
        %v1382 = vpop.permute.xlu0 %1381
        %1383 = vrot.lane.b32.xlu0 %v1364, 8
        %v1384 = vpop.permute.xlu0 %1383
        %1385 = vrot.lane.b32.xlu0 %v1365, 8
        %v1386 = vpop.permute.xlu0 %1385
        %1387 = vrot.lane.b32.xlu0 %v1366, 8
        %v1388 = vpop.permute.xlu0 %1387
        %1389 = vrot.lane.b32.xlu0 %v1367, 8
        %v1390 = vpop.permute.xlu0 %1389
        %1391 = vrot.lane.b32.xlu0 %v1368, 8
        %v1392 = vpop.permute.xlu0 %1391
        %1393 = vrot.lane.b32.xlu0 %v1369, 8
        %v1394 = vpop.permute.xlu0 %1393
        %1395 = vrot.lane.b32.xlu0 %v1370, 8
        %v1396 = vpop.permute.xlu0 %1395
        %1397 = vrot.lane.b32.xlu0 %v1371, 8
        %v1398 = vpop.permute.xlu0 %1397
        %1399 = vrot.lane.b32.xlu0 %v1372, 8
        %v1400 = vpop.permute.xlu0 %1399
        %1401 = vrot.lane.b32.xlu0 %v1373, 8
        %v1402 = vpop.permute.xlu0 %1401
        %1403 = vrot.lane.b32.xlu0 %v1374, 8
        %v1404 = vpop.permute.xlu0 %1403
        %1405 = vrot.lane.b32.xlu0 %v1375, 8
        %v1406 = vpop.permute.xlu0 %1405
        %1407 = vrot.lane.b32.xlu0 %v1376, 8
        %v1408 = vpop.permute.xlu0 %1407
        %vm1425 = vcmask 130112
        %1426 = vst.msk [vmem:[#allocation3] sm:$0xff] %vm1425, %v1378
        %1427 = vst.msk [vmem:[#allocation3 + $0x8] sm:$0xff] %vm1425, %v1380
        %1428 = vst.msk [vmem:[#allocation3 + $0x10] sm:$0xff] %vm1425, %v1382
        %1429 = vst.msk [vmem:[#allocation3 + $0x18] sm:$0xff] %vm1425, %v1384
        %1430 = vst.msk [vmem:[#allocation3 + $0x20] sm:$0xff] %vm1425, %v1386
        %1431 = vst.msk [vmem:[#allocation3 + $0x28] sm:$0xff] %vm1425, %v1388
        %1432 = vst.msk [vmem:[#allocation3 + $0x30] sm:$0xff] %vm1425, %v1390
        %1433 = vst.msk [vmem:[#allocation3 + $0x38] sm:$0xff] %vm1425, %v1392
        %1434 = vst.msk [vmem:[#allocation3 + $0x40] sm:$0xff] %vm1425, %v1394
        %1435 = vst.msk [vmem:[#allocation3 + $0x48] sm:$0xff] %vm1425, %v1396
        %1436 = vst.msk [vmem:[#allocation3 + $0x50] sm:$0xff] %vm1425, %v1398
        %1437 = vst.msk [vmem:[#allocation3 + $0x58] sm:$0xff] %vm1425, %v1400
        %1438 = vst.msk [vmem:[#allocation3 + $0x60] sm:$0xff] %vm1425, %v1402
        %1439 = vst.msk [vmem:[#allocation3 + $0x68] sm:$0xff] %vm1425, %v1404
        %1440 = vst.msk [vmem:[#allocation3 + $0x70] sm:$0xff] %vm1425, %v1406
        %1441 = vst.msk [vmem:[#allocation3 + $0x78] sm:$0xff] %vm1425, %v1408
        %v1442 = vld [vmem:[#allocation2] sm:$0xe]
        %v1443 = vld [vmem:[#allocation2 + $0x4] sm:$0xf]
        %v1444 = vld [vmem:[#allocation2 + $0x8] sm:$0x1]
        %v1445 = vld [vmem:[#allocation2 + $0xc] sm:$0xe]
        %v1446 = vld [vmem:[#allocation2 + $0x10] sm:$0xf]
        %v1447 = vld [vmem:[#allocation2 + $0x14] sm:$0x1]
        %v1448 = vld [vmem:[#allocation2 + $0x18] sm:$0xe]
        %v1449 = vld [vmem:[#allocation2 + $0x1c] sm:$0xf]
        %v1450 = vld [vmem:[#allocation2 + $0x20] sm:$0x1]
        %v1451 = vld [vmem:[#allocation2 + $0x24] sm:$0xe]
        %v1452 = vld [vmem:[#allocation2 + $0x28] sm:$0xf]
        %v1453 = vld [vmem:[#allocation2 + $0x2c] sm:$0x1]
        %v1454 = vld [vmem:[#allocation2 + $0x30] sm:$0xe]
        %v1455 = vld [vmem:[#allocation2 + $0x34] sm:$0xf]
        %v1456 = vld [vmem:[#allocation2 + $0x38] sm:$0x1]
        %v1457 = vld [vmem:[#allocation2 + $0x3c] sm:$0xe]
        %v1458 = vld [vmem:[#allocation2 + $0x40] sm:$0xf]
        %v1459 = vld [vmem:[#allocation2 + $0x44] sm:$0x1]
        %v1460 = vld [vmem:[#allocation2 + $0x48] sm:$0xe]
        %v1461 = vld [vmem:[#allocation2 + $0x4c] sm:$0xf]
        %v1462 = vld [vmem:[#allocation2 + $0x50] sm:$0x1]
        %v1463 = vld [vmem:[#allocation2 + $0x54] sm:$0xe]
        %v1464 = vld [vmem:[#allocation2 + $0x58] sm:$0xf]
        %v1465 = vld [vmem:[#allocation2 + $0x5c] sm:$0x1]
        %v1466 = vld [vmem:[#allocation2 + $0x60] sm:$0xe]
        %v1467 = vld [vmem:[#allocation2 + $0x64] sm:$0xf]
        %v1468 = vld [vmem:[#allocation2 + $0x68] sm:$0x1]
        %v1469 = vld [vmem:[#allocation2 + $0x6c] sm:$0xe]
        %v1470 = vld [vmem:[#allocation2 + $0x70] sm:$0xf]
        %v1471 = vld [vmem:[#allocation2 + $0x74] sm:$0x1]
        %v1472 = vld [vmem:[#allocation2 + $0x78] sm:$0xe]
        %v1473 = vld [vmem:[#allocation2 + $0x7c] sm:$0xf]
        %v1474 = vld [vmem:[#allocation2 + $0x80] sm:$0x1]
        %v1475 = vld [vmem:[#allocation2 + $0x84] sm:$0xe]
        %v1476 = vld [vmem:[#allocation2 + $0x88] sm:$0xf]
        %v1477 = vld [vmem:[#allocation2 + $0x8c] sm:$0x1]
        %v1478 = vld [vmem:[#allocation2 + $0x90] sm:$0xe]
        %v1479 = vld [vmem:[#allocation2 + $0x94] sm:$0xf]
        %v1480 = vld [vmem:[#allocation2 + $0x98] sm:$0x1]
        %v1481 = vld [vmem:[#allocation2 + $0x9c] sm:$0xe]
        %v1482 = vld [vmem:[#allocation2 + $0xa0] sm:$0xf]
        %v1483 = vld [vmem:[#allocation2 + $0xa4] sm:$0x1]
        %v1484 = vld [vmem:[#allocation2 + $0xa8] sm:$0xe]
        %v1485 = vld [vmem:[#allocation2 + $0xac] sm:$0xf]
        %v1486 = vld [vmem:[#allocation2 + $0xb0] sm:$0x1]
        %v1487 = vld [vmem:[#allocation2 + $0xb4] sm:$0xe]
        %v1488 = vld [vmem:[#allocation2 + $0xb8] sm:$0xf]
        %v1489 = vld [vmem:[#allocation2 + $0xbc] sm:$0x1]
        %vm1538 = vcmask 1042432
        %vm1539 = vcmask 1046532
        %vm1540 = vmor %vm1538, %vm1539
        %v1541 = vrot.slane %v1442, 5
        %v1542 = vrot.slane %v1541, 4
        %v1543 = vrot.slane %v1443, 5
        %v1544 = vsel %vm1540, %v1542, %v1543
        %v1545 = vrot.slane %v1543, 4
        %v1546 = vrot.slane %v1444, 5
        %v1547 = vsel %vm1540, %v1545, %v1546
        %v1548 = vrot.slane %v1445, 5
        %v1549 = vrot.slane %v1548, 4
        %v1550 = vrot.slane %v1446, 5
        %v1551 = vsel %vm1540, %v1549, %v1550
        %v1552 = vrot.slane %v1550, 4
        %v1553 = vrot.slane %v1447, 5
        %v1554 = vsel %vm1540, %v1552, %v1553
        %v1555 = vrot.slane %v1448, 5
        %v1556 = vrot.slane %v1555, 4
        %v1557 = vrot.slane %v1449, 5
        %v1558 = vsel %vm1540, %v1556, %v1557
        %v1559 = vrot.slane %v1557, 4
        %v1560 = vrot.slane %v1450, 5
        %v1561 = vsel %vm1540, %v1559, %v1560
        %v1562 = vrot.slane %v1451, 5
        %v1563 = vrot.slane %v1562, 4
        %v1564 = vrot.slane %v1452, 5
        %v1565 = vsel %vm1540, %v1563, %v1564
        %v1566 = vrot.slane %v1564, 4
        %v1567 = vrot.slane %v1453, 5
        %v1568 = vsel %vm1540, %v1566, %v1567
        %v1569 = vrot.slane %v1454, 5
        %v1570 = vrot.slane %v1569, 4
        %v1571 = vrot.slane %v1455, 5
        %v1572 = vsel %vm1540, %v1570, %v1571
        %v1573 = vrot.slane %v1571, 4
        %v1574 = vrot.slane %v1456, 5
        %v1575 = vsel %vm1540, %v1573, %v1574
        %v1576 = vrot.slane %v1457, 5
        %v1577 = vrot.slane %v1576, 4
        %v1578 = vrot.slane %v1458, 5
        %v1579 = vsel %vm1540, %v1577, %v1578
        %v1580 = vrot.slane %v1578, 4
        %v1581 = vrot.slane %v1459, 5
        %v1582 = vsel %vm1540, %v1580, %v1581
        %v1583 = vrot.slane %v1460, 5
        %v1584 = vrot.slane %v1583, 4
        %v1585 = vrot.slane %v1461, 5
        %v1586 = vsel %vm1540, %v1584, %v1585
        %v1587 = vrot.slane %v1585, 4
        %v1588 = vrot.slane %v1462, 5
        %v1589 = vsel %vm1540, %v1587, %v1588
        %v1590 = vrot.slane %v1463, 5
        %v1591 = vrot.slane %v1590, 4
        %v1592 = vrot.slane %v1464, 5
        %v1593 = vsel %vm1540, %v1591, %v1592
        %v1594 = vrot.slane %v1592, 4
        %v1595 = vrot.slane %v1465, 5
        %v1596 = vsel %vm1540, %v1594, %v1595
        %v1597 = vrot.slane %v1466, 5
        %v1598 = vrot.slane %v1597, 4
        %v1599 = vrot.slane %v1467, 5
        %v1600 = vsel %vm1540, %v1598, %v1599
        %v1601 = vrot.slane %v1599, 4
        %v1602 = vrot.slane %v1468, 5
        %v1603 = vsel %vm1540, %v1601, %v1602
        %v1604 = vrot.slane %v1469, 5
        %v1605 = vrot.slane %v1604, 4
        %v1606 = vrot.slane %v1470, 5
        %v1607 = vsel %vm1540, %v1605, %v1606
        %v1608 = vrot.slane %v1606, 4
        %v1609 = vrot.slane %v1471, 5
        %v1610 = vsel %vm1540, %v1608, %v1609
        %v1611 = vrot.slane %v1472, 5
        %v1612 = vrot.slane %v1611, 4
        %v1613 = vrot.slane %v1473, 5
        %v1614 = vsel %vm1540, %v1612, %v1613
        %v1615 = vrot.slane %v1613, 4
        %v1616 = vrot.slane %v1474, 5
        %v1617 = vsel %vm1540, %v1615, %v1616
        %v1618 = vrot.slane %v1475, 5
        %v1619 = vrot.slane %v1618, 4
        %v1620 = vrot.slane %v1476, 5
        %v1621 = vsel %vm1540, %v1619, %v1620
        %v1622 = vrot.slane %v1620, 4
        %v1623 = vrot.slane %v1477, 5
        %v1624 = vsel %vm1540, %v1622, %v1623
        %v1625 = vrot.slane %v1478, 5
        %v1626 = vrot.slane %v1625, 4
        %v1627 = vrot.slane %v1479, 5
        %v1628 = vsel %vm1540, %v1626, %v1627
        %v1629 = vrot.slane %v1627, 4
        %v1630 = vrot.slane %v1480, 5
        %v1631 = vsel %vm1540, %v1629, %v1630
        %v1632 = vrot.slane %v1481, 5
        %v1633 = vrot.slane %v1632, 4
        %v1634 = vrot.slane %v1482, 5
        %v1635 = vsel %vm1540, %v1633, %v1634
        %v1636 = vrot.slane %v1634, 4
        %v1637 = vrot.slane %v1483, 5
        %v1638 = vsel %vm1540, %v1636, %v1637
        %v1639 = vrot.slane %v1484, 5
        %v1640 = vrot.slane %v1639, 4
        %v1641 = vrot.slane %v1485, 5
        %v1642 = vsel %vm1540, %v1640, %v1641
        %v1643 = vrot.slane %v1641, 4
        %v1644 = vrot.slane %v1486, 5
        %v1645 = vsel %vm1540, %v1643, %v1644
        %v1646 = vrot.slane %v1487, 5
        %v1647 = vrot.slane %v1646, 4
        %v1648 = vrot.slane %v1488, 5
        %v1649 = vsel %vm1540, %v1647, %v1648
        %v1650 = vrot.slane %v1648, 4
        %v1651 = vrot.slane %v1489, 5
        %v1652 = vsel %vm1540, %v1650, %v1651
        %v1653 = vunpack.c.l.b16 %v1544
        %v1654 = vunpack.c.l.b16 %v1547
        %v1655 = vunpack.c.l.b16 %v1551
        %v1656 = vunpack.c.l.b16 %v1554
        %v1657 = vunpack.c.l.b16 %v1558
        %v1658 = vunpack.c.l.b16 %v1561
        %v1659 = vunpack.c.l.b16 %v1565
        %v1660 = vunpack.c.l.b16 %v1568
        %v1661 = vunpack.c.l.b16 %v1572
        %v1662 = vunpack.c.l.b16 %v1575
        %v1663 = vunpack.c.l.b16 %v1579
        %v1664 = vunpack.c.l.b16 %v1582
        %v1665 = vunpack.c.l.b16 %v1586
        %v1666 = vunpack.c.l.b16 %v1589
        %v1667 = vunpack.c.l.b16 %v1593
        %v1668 = vunpack.c.l.b16 %v1596
        %v1669 = vunpack.c.l.b16 %v1600
        %v1670 = vunpack.c.l.b16 %v1603
        %v1671 = vunpack.c.l.b16 %v1607
        %v1672 = vunpack.c.l.b16 %v1610
        %v1673 = vunpack.c.l.b16 %v1614
        %v1674 = vunpack.c.l.b16 %v1617
        %v1675 = vunpack.c.l.b16 %v1621
        %v1676 = vunpack.c.l.b16 %v1624
        %v1677 = vunpack.c.l.b16 %v1628
        %v1678 = vunpack.c.l.b16 %v1631
        %v1679 = vunpack.c.l.b16 %v1635
        %v1680 = vunpack.c.l.b16 %v1638
        %v1681 = vunpack.c.l.b16 %v1642
        %v1682 = vunpack.c.l.b16 %v1645
        %v1683 = vunpack.c.l.b16 %v1649
        %v1684 = vunpack.c.l.b16 %v1652
        %v1685 = vpack.c.b16 %v1654, %v1653
        %v1686 = vpack.c.b16 %v1656, %v1655
        %v1687 = vpack.c.b16 %v1658, %v1657
        %v1688 = vpack.c.b16 %v1660, %v1659
        %v1689 = vpack.c.b16 %v1662, %v1661
        %v1690 = vpack.c.b16 %v1664, %v1663
        %v1691 = vpack.c.b16 %v1666, %v1665
        %v1692 = vpack.c.b16 %v1668, %v1667
        %v1693 = vpack.c.b16 %v1670, %v1669
        %v1694 = vpack.c.b16 %v1672, %v1671
        %v1695 = vpack.c.b16 %v1674, %v1673
        %v1696 = vpack.c.b16 %v1676, %v1675
        %v1697 = vpack.c.b16 %v1678, %v1677
        %v1698 = vpack.c.b16 %v1680, %v1679
        %v1699 = vpack.c.b16 %v1682, %v1681
        %v1700 = vpack.c.b16 %v1684, %v1683
        %1701 = vrot.lane.b32.xlu0 %v1685, 16
        %v1702 = vpop.permute.xlu0 %1701
        %1703 = vrot.lane.b32.xlu0 %v1686, 16
        %v1704 = vpop.permute.xlu0 %1703
        %1705 = vrot.lane.b32.xlu0 %v1687, 16
        %v1706 = vpop.permute.xlu0 %1705
        %1707 = vrot.lane.b32.xlu0 %v1688, 16
        %v1708 = vpop.permute.xlu0 %1707
        %1709 = vrot.lane.b32.xlu0 %v1689, 16
        %v1710 = vpop.permute.xlu0 %1709
        %1711 = vrot.lane.b32.xlu0 %v1690, 16
        %v1712 = vpop.permute.xlu0 %1711
        %1713 = vrot.lane.b32.xlu0 %v1691, 16
        %v1714 = vpop.permute.xlu0 %1713
        %1715 = vrot.lane.b32.xlu0 %v1692, 16
        %v1716 = vpop.permute.xlu0 %1715
        %1717 = vrot.lane.b32.xlu0 %v1693, 16
        %v1718 = vpop.permute.xlu0 %1717
        %1719 = vrot.lane.b32.xlu0 %v1694, 16
        %v1720 = vpop.permute.xlu0 %1719
        %1721 = vrot.lane.b32.xlu0 %v1695, 16
        %v1722 = vpop.permute.xlu0 %1721
        %1723 = vrot.lane.b32.xlu0 %v1696, 16
        %v1724 = vpop.permute.xlu0 %1723
        %1725 = vrot.lane.b32.xlu0 %v1697, 16
        %v1726 = vpop.permute.xlu0 %1725
        %1727 = vrot.lane.b32.xlu0 %v1698, 16
        %v1728 = vpop.permute.xlu0 %1727
        %1729 = vrot.lane.b32.xlu0 %v1699, 16
        %v1730 = vpop.permute.xlu0 %1729
        %1731 = vrot.lane.b32.xlu0 %v1700, 16
        %v1732 = vpop.permute.xlu0 %1731
        %vm1749 = vcmask 195712
        %1750 = vst.msk [vmem:[#allocation3] sm:$0xff] %vm1749, %v1702
        %1751 = vst.msk [vmem:[#allocation3 + $0x8] sm:$0xff] %vm1749, %v1704
        %1752 = vst.msk [vmem:[#allocation3 + $0x10] sm:$0xff] %vm1749, %v1706
        %1753 = vst.msk [vmem:[#allocation3 + $0x18] sm:$0xff] %vm1749, %v1708
        %1754 = vst.msk [vmem:[#allocation3 + $0x20] sm:$0xff] %vm1749, %v1710
        %1755 = vst.msk [vmem:[#allocation3 + $0x28] sm:$0xff] %vm1749, %v1712
        %1756 = vst.msk [vmem:[#allocation3 + $0x30] sm:$0xff] %vm1749, %v1714
        %1757 = vst.msk [vmem:[#allocation3 + $0x38] sm:$0xff] %vm1749, %v1716
        %1758 = vst.msk [vmem:[#allocation3 + $0x40] sm:$0xff] %vm1749, %v1718
        %1759 = vst.msk [vmem:[#allocation3 + $0x48] sm:$0xff] %vm1749, %v1720
        %1760 = vst.msk [vmem:[#allocation3 + $0x50] sm:$0xff] %vm1749, %v1722
        %1761 = vst.msk [vmem:[#allocation3 + $0x58] sm:$0xff] %vm1749, %v1724
        %1762 = vst.msk [vmem:[#allocation3 + $0x60] sm:$0xff] %vm1749, %v1726
        %1763 = vst.msk [vmem:[#allocation3 + $0x68] sm:$0xff] %vm1749, %v1728
        %1764 = vst.msk [vmem:[#allocation3 + $0x70] sm:$0xff] %vm1749, %v1730
        %1765 = vst.msk [vmem:[#allocation3 + $0x78] sm:$0xff] %vm1749, %v1732
        %v1766 = vld [vmem:[%s179] sm:$0xf]
        %v1767 = vld [vmem:[%s179 + $0x4] sm:$0xf]
        %v1768 = vld [vmem:[%s179 + $0xc] sm:$0xf]
        %v1769 = vld [vmem:[%s179 + $0x10] sm:$0xf]
        %v1770 = vld [vmem:[%s179 + $0x18] sm:$0xf]
        %v1771 = vld [vmem:[%s179 + $0x1c] sm:$0xf]
        %v1772 = vld [vmem:[%s179 + $0x24] sm:$0xf]
        %v1773 = vld [vmem:[%s179 + $0x28] sm:$0xf]
        %v1774 = vld [vmem:[%s179 + $0x30] sm:$0xf]
        %v1775 = vld [vmem:[%s179 + $0x34] sm:$0xf]
        %v1776 = vld [vmem:[%s179 + $0x3c] sm:$0xf]
        %v1777 = vld [vmem:[%s179 + $0x40] sm:$0xf]
        %v1778 = vld [vmem:[%s179 + $0x48] sm:$0xf]
        %v1779 = vld [vmem:[%s179 + $0x4c] sm:$0xf]
        %v1780 = vld [vmem:[%s179 + $0x54] sm:$0xf]
        %v1781 = vld [vmem:[%s179 + $0x58] sm:$0xf]
        %v1782 = vld [vmem:[%s179 + $0x60] sm:$0xf]
        %v1783 = vld [vmem:[%s179 + $0x64] sm:$0xf]
        %v1784 = vld [vmem:[%s179 + $0x6c] sm:$0xf]
        %v1785 = vld [vmem:[%s179 + $0x70] sm:$0xf]
        %v1786 = vld [vmem:[%s179 + $0x78] sm:$0xf]
        %v1787 = vld [vmem:[%s179 + $0x7c] sm:$0xf]
        %v1788 = vld [vmem:[%s179 + $0x84] sm:$0xf]
        %v1789 = vld [vmem:[%s179 + $0x88] sm:$0xf]
        %v1790 = vld [vmem:[%s179 + $0x90] sm:$0xf]
        %v1791 = vld [vmem:[%s179 + $0x94] sm:$0xf]
        %v1792 = vld [vmem:[%s179 + $0x9c] sm:$0xf]
        %v1793 = vld [vmem:[%s179 + $0xa0] sm:$0xf]
        %v1794 = vld [vmem:[%s179 + $0xa8] sm:$0xf]
        %v1795 = vld [vmem:[%s179 + $0xac] sm:$0xf]
        %v1796 = vld [vmem:[%s179 + $0xb4] sm:$0xf]
        %v1797 = vld [vmem:[%s179 + $0xb8] sm:$0xf]
        %v1830 = vunpack.c.l.b16 %v1766
        %v1831 = vunpack.c.l.b16 %v1767
        %v1832 = vunpack.c.l.b16 %v1768
        %v1833 = vunpack.c.l.b16 %v1769
        %v1834 = vunpack.c.l.b16 %v1770
        %v1835 = vunpack.c.l.b16 %v1771
        %v1836 = vunpack.c.l.b16 %v1772
        %v1837 = vunpack.c.l.b16 %v1773
        %v1838 = vunpack.c.l.b16 %v1774
        %v1839 = vunpack.c.l.b16 %v1775
        %v1840 = vunpack.c.l.b16 %v1776
        %v1841 = vunpack.c.l.b16 %v1777
        %v1842 = vunpack.c.l.b16 %v1778
        %v1843 = vunpack.c.l.b16 %v1779
        %v1844 = vunpack.c.l.b16 %v1780
        %v1845 = vunpack.c.l.b16 %v1781
        %v1846 = vunpack.c.l.b16 %v1782
        %v1847 = vunpack.c.l.b16 %v1783
        %v1848 = vunpack.c.l.b16 %v1784
        %v1849 = vunpack.c.l.b16 %v1785
        %v1850 = vunpack.c.l.b16 %v1786
        %v1851 = vunpack.c.l.b16 %v1787
        %v1852 = vunpack.c.l.b16 %v1788
        %v1853 = vunpack.c.l.b16 %v1789
        %v1854 = vunpack.c.l.b16 %v1790
        %v1855 = vunpack.c.l.b16 %v1791
        %v1856 = vunpack.c.l.b16 %v1792
        %v1857 = vunpack.c.l.b16 %v1793
        %v1858 = vunpack.c.l.b16 %v1794
        %v1859 = vunpack.c.l.b16 %v1795
        %v1860 = vunpack.c.l.b16 %v1796
        %v1861 = vunpack.c.l.b16 %v1797
        %v1862 = vpack.c.b16 %v1831, %v1830
        %v1863 = vpack.c.b16 %v1833, %v1832
        %v1864 = vpack.c.b16 %v1835, %v1834
        %v1865 = vpack.c.b16 %v1837, %v1836
        %v1866 = vpack.c.b16 %v1839, %v1838
        %v1867 = vpack.c.b16 %v1841, %v1840
        %v1868 = vpack.c.b16 %v1843, %v1842
        %v1869 = vpack.c.b16 %v1845, %v1844
        %v1870 = vpack.c.b16 %v1847, %v1846
        %v1871 = vpack.c.b16 %v1849, %v1848
        %v1872 = vpack.c.b16 %v1851, %v1850
        %v1873 = vpack.c.b16 %v1853, %v1852
        %v1874 = vpack.c.b16 %v1855, %v1854
        %v1875 = vpack.c.b16 %v1857, %v1856
        %v1876 = vpack.c.b16 %v1859, %v1858
        %v1877 = vpack.c.b16 %v1861, %v1860
        %1878 = vrot.lane.b32.xlu0 %v1862, 24
        %v1879 = vpop.permute.xlu0 %1878
        %1880 = vrot.lane.b32.xlu0 %v1863, 24
        %v1881 = vpop.permute.xlu0 %1880
        %1882 = vrot.lane.b32.xlu0 %v1864, 24
        %v1883 = vpop.permute.xlu0 %1882
        %1884 = vrot.lane.b32.xlu0 %v1865, 24
        %v1885 = vpop.permute.xlu0 %1884
        %1886 = vrot.lane.b32.xlu0 %v1866, 24
        %v1887 = vpop.permute.xlu0 %1886
        %1888 = vrot.lane.b32.xlu0 %v1867, 24
        %v1889 = vpop.permute.xlu0 %1888
        %1890 = vrot.lane.b32.xlu0 %v1868, 24
        %v1891 = vpop.permute.xlu0 %1890
        %1892 = vrot.lane.b32.xlu0 %v1869, 24
        %v1893 = vpop.permute.xlu0 %1892
        %1894 = vrot.lane.b32.xlu0 %v1870, 24
        %v1895 = vpop.permute.xlu0 %1894
        %1896 = vrot.lane.b32.xlu0 %v1871, 24
        %v1897 = vpop.permute.xlu0 %1896
        %1898 = vrot.lane.b32.xlu0 %v1872, 24
        %v1899 = vpop.permute.xlu0 %1898
        %1900 = vrot.lane.b32.xlu0 %v1873, 24
        %v1901 = vpop.permute.xlu0 %1900
        %1902 = vrot.lane.b32.xlu0 %v1874, 24
        %v1903 = vpop.permute.xlu0 %1902
        %1904 = vrot.lane.b32.xlu0 %v1875, 24
        %v1905 = vpop.permute.xlu0 %1904
        %1906 = vrot.lane.b32.xlu0 %v1876, 24
        %v1907 = vpop.permute.xlu0 %1906
        %1908 = vrot.lane.b32.xlu0 %v1877, 24
        %v1909 = vpop.permute.xlu0 %1908
        %vm1926 = vcmask 261312
        %1927 = vst.msk [vmem:[#allocation3] sm:$0xff] %vm1926, %v1879
        %1928 = vst.msk [vmem:[#allocation3 + $0x8] sm:$0xff] %vm1926, %v1881
        %1929 = vst.msk [vmem:[#allocation3 + $0x10] sm:$0xff] %vm1926, %v1883
        %1930 = vst.msk [vmem:[#allocation3 + $0x18] sm:$0xff] %vm1926, %v1885
        %1931 = vst.msk [vmem:[#allocation3 + $0x20] sm:$0xff] %vm1926, %v1887
        %1932 = vst.msk [vmem:[#allocation3 + $0x28] sm:$0xff] %vm1926, %v1889
        %1933 = vst.msk [vmem:[#allocation3 + $0x30] sm:$0xff] %vm1926, %v1891
        %1934 = vst.msk [vmem:[#allocation3 + $0x38] sm:$0xff] %vm1926, %v1893
        %1935 = vst.msk [vmem:[#allocation3 + $0x40] sm:$0xff] %vm1926, %v1895
        %1936 = vst.msk [vmem:[#allocation3 + $0x48] sm:$0xff] %vm1926, %v1897
        %1937 = vst.msk [vmem:[#allocation3 + $0x50] sm:$0xff] %vm1926, %v1899
        %1938 = vst.msk [vmem:[#allocation3 + $0x58] sm:$0xff] %vm1926, %v1901
        %1939 = vst.msk [vmem:[#allocation3 + $0x60] sm:$0xff] %vm1926, %v1903
        %1940 = vst.msk [vmem:[#allocation3 + $0x68] sm:$0xff] %vm1926, %v1905
        %1941 = vst.msk [vmem:[#allocation3 + $0x70] sm:$0xff] %vm1926, %v1907
        %1942 = vst.msk [vmem:[#allocation3 + $0x78] sm:$0xff] %vm1926, %v1909
        %v1943 = vld [vmem:[%s179] sm:$0xf]
        %v1944 = vld [vmem:[%s179 + $0x4] sm:$0xf]
        %v1945 = vld [vmem:[%s179 + $0x8] sm:$0x1]
        %v1946 = vld [vmem:[%s179 + $0xc] sm:$0xf]
        %v1947 = vld [vmem:[%s179 + $0x10] sm:$0xf]
        %v1948 = vld [vmem:[%s179 + $0x14] sm:$0x1]
        %v1949 = vld [vmem:[%s179 + $0x18] sm:$0xf]
        %v1950 = vld [vmem:[%s179 + $0x1c] sm:$0xf]
        %v1951 = vld [vmem:[%s179 + $0x20] sm:$0x1]
        %v1952 = vld [vmem:[%s179 + $0x24] sm:$0xf]
        %v1953 = vld [vmem:[%s179 + $0x28] sm:$0xf]
        %v1954 = vld [vmem:[%s179 + $0x2c] sm:$0x1]
        %v1955 = vld [vmem:[%s179 + $0x30] sm:$0xf]
        %v1956 = vld [vmem:[%s179 + $0x34] sm:$0xf]
        %v1957 = vld [vmem:[%s179 + $0x38] sm:$0x1]
        %v1958 = vld [vmem:[%s179 + $0x3c] sm:$0xf]
        %v1959 = vld [vmem:[%s179 + $0x40] sm:$0xf]
        %v1960 = vld [vmem:[%s179 + $0x44] sm:$0x1]
        %v1961 = vld [vmem:[%s179 + $0x48] sm:$0xf]
        %v1962 = vld [vmem:[%s179 + $0x4c] sm:$0xf]
        %v1963 = vld [vmem:[%s179 + $0x50] sm:$0x1]
        %v1964 = vld [vmem:[%s179 + $0x54] sm:$0xf]
        %v1965 = vld [vmem:[%s179 + $0x58] sm:$0xf]
        %v1966 = vld [vmem:[%s179 + $0x5c] sm:$0x1]
        %v1967 = vld [vmem:[%s179 + $0x60] sm:$0xf]
        %v1968 = vld [vmem:[%s179 + $0x64] sm:$0xf]
        %v1969 = vld [vmem:[%s179 + $0x68] sm:$0x1]
        %v1970 = vld [vmem:[%s179 + $0x6c] sm:$0xf]
        %v1971 = vld [vmem:[%s179 + $0x70] sm:$0xf]
        %v1972 = vld [vmem:[%s179 + $0x74] sm:$0x1]
        %v1973 = vld [vmem:[%s179 + $0x78] sm:$0xf]
        %v1974 = vld [vmem:[%s179 + $0x7c] sm:$0xf]
        %v1975 = vld [vmem:[%s179 + $0x80] sm:$0x1]
        %v1976 = vld [vmem:[%s179 + $0x84] sm:$0xf]
        %v1977 = vld [vmem:[%s179 + $0x88] sm:$0xf]
        %v1978 = vld [vmem:[%s179 + $0x8c] sm:$0x1]
        %v1979 = vld [vmem:[%s179 + $0x90] sm:$0xf]
        %v1980 = vld [vmem:[%s179 + $0x94] sm:$0xf]
        %v1981 = vld [vmem:[%s179 + $0x98] sm:$0x1]
        %v1982 = vld [vmem:[%s179 + $0x9c] sm:$0xf]
        %v1983 = vld [vmem:[%s179 + $0xa0] sm:$0xf]
        %v1984 = vld [vmem:[%s179 + $0xa4] sm:$0x1]
        %v1985 = vld [vmem:[%s179 + $0xa8] sm:$0xf]
        %v1986 = vld [vmem:[%s179 + $0xac] sm:$0xf]
        %v1987 = vld [vmem:[%s179 + $0xb0] sm:$0x1]
        %v1988 = vld [vmem:[%s179 + $0xb4] sm:$0xf]
        %v1989 = vld [vmem:[%s179 + $0xb8] sm:$0xf]
        %v1990 = vld [vmem:[%s179 + $0xbc] sm:$0x1]
        %v1992 = vshrl.u32 %v1943, 16
        %v1994 = vrot.slane %v1992, 4
        %v1995 = vshll.u32 %v1943, 16
        %v1997 = vrot.slane %v1995, 5
        %v1998 = vor.u32 %v1994, %v1997
        %v1999 = vrot.slane %v1998, 4
        %v2001 = vshll.u32 %v1944, 16
        %v2003 = vrot.slane %v2001, 5
        %v2004 = vsel %vm944, %v1999, %v2003
        %v2005 = vshrl.u32 %v1944, 16
        %v2007 = vrot.slane %v2005, 4
        %v2008 = vor.u32 %v2007, %v2003
        %v2009 = vrot.slane %v2008, 4
        %v2011 = vshll.u32 %v1945, 16
        %v2013 = vrot.slane %v2011, 5
        %v2014 = vsel %vm944, %v2009, %v2013
        %v2016 = vshrl.u32 %v1946, 16
        %v2018 = vrot.slane %v2016, 4
        %v2019 = vshll.u32 %v1946, 16
        %v2021 = vrot.slane %v2019, 5
        %v2022 = vor.u32 %v2018, %v2021
        %v2023 = vrot.slane %v2022, 4
        %v2025 = vshll.u32 %v1947, 16
        %v2027 = vrot.slane %v2025, 5
        %v2028 = vsel %vm944, %v2023, %v2027
        %v2029 = vshrl.u32 %v1947, 16
        %v2031 = vrot.slane %v2029, 4
        %v2032 = vor.u32 %v2031, %v2027
        %v2033 = vrot.slane %v2032, 4
        %v2035 = vshll.u32 %v1948, 16
        %v2037 = vrot.slane %v2035, 5
        %v2038 = vsel %vm944, %v2033, %v2037
        %v2040 = vshrl.u32 %v1949, 16
        %v2042 = vrot.slane %v2040, 4
        %v2043 = vshll.u32 %v1949, 16
        %v2045 = vrot.slane %v2043, 5
        %v2046 = vor.u32 %v2042, %v2045
        %v2047 = vrot.slane %v2046, 4
        %v2049 = vshll.u32 %v1950, 16
        %v2051 = vrot.slane %v2049, 5
        %v2052 = vsel %vm944, %v2047, %v2051
        %v2053 = vshrl.u32 %v1950, 16
        %v2055 = vrot.slane %v2053, 4
        %v2056 = vor.u32 %v2055, %v2051
        %v2057 = vrot.slane %v2056, 4
        %v2059 = vshll.u32 %v1951, 16
        %v2061 = vrot.slane %v2059, 5
        %v2062 = vsel %vm944, %v2057, %v2061
        %v2064 = vshrl.u32 %v1952, 16
        %v2066 = vrot.slane %v2064, 4
        %v2067 = vshll.u32 %v1952, 16
        %v2069 = vrot.slane %v2067, 5
        %v2070 = vor.u32 %v2066, %v2069
        %v2071 = vrot.slane %v2070, 4
        %v2073 = vshll.u32 %v1953, 16
        %v2075 = vrot.slane %v2073, 5
        %v2076 = vsel %vm944, %v2071, %v2075
        %v2077 = vshrl.u32 %v1953, 16
        %v2079 = vrot.slane %v2077, 4
        %v2080 = vor.u32 %v2079, %v2075
        %v2081 = vrot.slane %v2080, 4
        %v2083 = vshll.u32 %v1954, 16
        %v2085 = vrot.slane %v2083, 5
        %v2086 = vsel %vm944, %v2081, %v2085
        %v2088 = vshrl.u32 %v1955, 16
        %v2090 = vrot.slane %v2088, 4
        %v2091 = vshll.u32 %v1955, 16
        %v2093 = vrot.slane %v2091, 5
        %v2094 = vor.u32 %v2090, %v2093
        %v2095 = vrot.slane %v2094, 4
        %v2097 = vshll.u32 %v1956, 16
        %v2099 = vrot.slane %v2097, 5
        %v2100 = vsel %vm944, %v2095, %v2099
        %v2101 = vshrl.u32 %v1956, 16
        %v2103 = vrot.slane %v2101, 4
        %v2104 = vor.u32 %v2103, %v2099
        %v2105 = vrot.slane %v2104, 4
        %v2107 = vshll.u32 %v1957, 16
        %v2109 = vrot.slane %v2107, 5
        %v2110 = vsel %vm944, %v2105, %v2109
        %v2112 = vshrl.u32 %v1958, 16
        %v2114 = vrot.slane %v2112, 4
        %v2115 = vshll.u32 %v1958, 16
        %v2117 = vrot.slane %v2115, 5
        %v2118 = vor.u32 %v2114, %v2117
        %v2119 = vrot.slane %v2118, 4
        %v2121 = vshll.u32 %v1959, 16
        %v2123 = vrot.slane %v2121, 5
        %v2124 = vsel %vm944, %v2119, %v2123
        %v2125 = vshrl.u32 %v1959, 16
        %v2127 = vrot.slane %v2125, 4
        %v2128 = vor.u32 %v2127, %v2123
        %v2129 = vrot.slane %v2128, 4
        %v2131 = vshll.u32 %v1960, 16
        %v2133 = vrot.slane %v2131, 5
        %v2134 = vsel %vm944, %v2129, %v2133
        %v2136 = vshrl.u32 %v1961, 16
        %v2138 = vrot.slane %v2136, 4
        %v2139 = vshll.u32 %v1961, 16
        %v2141 = vrot.slane %v2139, 5
        %v2142 = vor.u32 %v2138, %v2141
        %v2143 = vrot.slane %v2142, 4
        %v2145 = vshll.u32 %v1962, 16
        %v2147 = vrot.slane %v2145, 5
        %v2148 = vsel %vm944, %v2143, %v2147
        %v2149 = vshrl.u32 %v1962, 16
        %v2151 = vrot.slane %v2149, 4
        %v2152 = vor.u32 %v2151, %v2147
        %v2153 = vrot.slane %v2152, 4
        %v2155 = vshll.u32 %v1963, 16
        %v2157 = vrot.slane %v2155, 5
        %v2158 = vsel %vm944, %v2153, %v2157
        %v2160 = vshrl.u32 %v1964, 16
        %v2162 = vrot.slane %v2160, 4
        %v2163 = vshll.u32 %v1964, 16
        %v2165 = vrot.slane %v2163, 5
        %v2166 = vor.u32 %v2162, %v2165
        %v2167 = vrot.slane %v2166, 4
        %v2169 = vshll.u32 %v1965, 16
        %v2171 = vrot.slane %v2169, 5
        %v2172 = vsel %vm944, %v2167, %v2171
        %v2173 = vshrl.u32 %v1965, 16
        %v2175 = vrot.slane %v2173, 4
        %v2176 = vor.u32 %v2175, %v2171
        %v2177 = vrot.slane %v2176, 4
        %v2179 = vshll.u32 %v1966, 16
        %v2181 = vrot.slane %v2179, 5
        %v2182 = vsel %vm944, %v2177, %v2181
        %v2184 = vshrl.u32 %v1967, 16
        %v2186 = vrot.slane %v2184, 4
        %v2187 = vshll.u32 %v1967, 16
        %v2189 = vrot.slane %v2187, 5
        %v2190 = vor.u32 %v2186, %v2189
        %v2191 = vrot.slane %v2190, 4
        %v2193 = vshll.u32 %v1968, 16
        %v2195 = vrot.slane %v2193, 5
        %v2196 = vsel %vm944, %v2191, %v2195
        %v2197 = vshrl.u32 %v1968, 16
        %v2199 = vrot.slane %v2197, 4
        %v2200 = vor.u32 %v2199, %v2195
        %v2201 = vrot.slane %v2200, 4
        %v2203 = vshll.u32 %v1969, 16
        %v2205 = vrot.slane %v2203, 5
        %v2206 = vsel %vm944, %v2201, %v2205
        %v2208 = vshrl.u32 %v1970, 16
        %v2210 = vrot.slane %v2208, 4
        %v2211 = vshll.u32 %v1970, 16
        %v2213 = vrot.slane %v2211, 5
        %v2214 = vor.u32 %v2210, %v2213
        %v2215 = vrot.slane %v2214, 4
        %v2217 = vshll.u32 %v1971, 16
        %v2219 = vrot.slane %v2217, 5
        %v2220 = vsel %vm944, %v2215, %v2219
        %v2221 = vshrl.u32 %v1971, 16
        %v2223 = vrot.slane %v2221, 4
        %v2224 = vor.u32 %v2223, %v2219
        %v2225 = vrot.slane %v2224, 4
        %v2227 = vshll.u32 %v1972, 16
        %v2229 = vrot.slane %v2227, 5
        %v2230 = vsel %vm944, %v2225, %v2229
        %v2232 = vshrl.u32 %v1973, 16
        %v2234 = vrot.slane %v2232, 4
        %v2235 = vshll.u32 %v1973, 16
        %v2237 = vrot.slane %v2235, 5
        %v2238 = vor.u32 %v2234, %v2237
        %v2239 = vrot.slane %v2238, 4
        %v2241 = vshll.u32 %v1974, 16
        %v2243 = vrot.slane %v2241, 5
        %v2244 = vsel %vm944, %v2239, %v2243
        %v2245 = vshrl.u32 %v1974, 16
        %v2247 = vrot.slane %v2245, 4
        %v2248 = vor.u32 %v2247, %v2243
        %v2249 = vrot.slane %v2248, 4
        %v2251 = vshll.u32 %v1975, 16
        %v2253 = vrot.slane %v2251, 5
        %v2254 = vsel %vm944, %v2249, %v2253
        %v2256 = vshrl.u32 %v1976, 16
        %v2258 = vrot.slane %v2256, 4
        %v2259 = vshll.u32 %v1976, 16
        %v2261 = vrot.slane %v2259, 5
        %v2262 = vor.u32 %v2258, %v2261
        %v2263 = vrot.slane %v2262, 4
        %v2265 = vshll.u32 %v1977, 16
        %v2267 = vrot.slane %v2265, 5
        %v2268 = vsel %vm944, %v2263, %v2267
        %v2269 = vshrl.u32 %v1977, 16
        %v2271 = vrot.slane %v2269, 4
        %v2272 = vor.u32 %v2271, %v2267
        %v2273 = vrot.slane %v2272, 4
        %v2275 = vshll.u32 %v1978, 16
        %v2277 = vrot.slane %v2275, 5
        %v2278 = vsel %vm944, %v2273, %v2277
        %v2280 = vshrl.u32 %v1979, 16
        %v2282 = vrot.slane %v2280, 4
        %v2283 = vshll.u32 %v1979, 16
        %v2285 = vrot.slane %v2283, 5
        %v2286 = vor.u32 %v2282, %v2285
        %v2287 = vrot.slane %v2286, 4
        %v2289 = vshll.u32 %v1980, 16
        %v2291 = vrot.slane %v2289, 5
        %v2292 = vsel %vm944, %v2287, %v2291
        %v2293 = vshrl.u32 %v1980, 16
        %v2295 = vrot.slane %v2293, 4
        %v2296 = vor.u32 %v2295, %v2291
        %v2297 = vrot.slane %v2296, 4
        %v2299 = vshll.u32 %v1981, 16
        %v2301 = vrot.slane %v2299, 5
        %v2302 = vsel %vm944, %v2297, %v2301
        %v2304 = vshrl.u32 %v1982, 16
        %v2306 = vrot.slane %v2304, 4
        %v2307 = vshll.u32 %v1982, 16
        %v2309 = vrot.slane %v2307, 5
        %v2310 = vor.u32 %v2306, %v2309
        %v2311 = vrot.slane %v2310, 4
        %v2313 = vshll.u32 %v1983, 16
        %v2315 = vrot.slane %v2313, 5
        %v2316 = vsel %vm944, %v2311, %v2315
        %v2317 = vshrl.u32 %v1983, 16
        %v2319 = vrot.slane %v2317, 4
        %v2320 = vor.u32 %v2319, %v2315
        %v2321 = vrot.slane %v2320, 4
        %v2323 = vshll.u32 %v1984, 16
        %v2325 = vrot.slane %v2323, 5
        %v2326 = vsel %vm944, %v2321, %v2325
        %v2328 = vshrl.u32 %v1985, 16
        %v2330 = vrot.slane %v2328, 4
        %v2331 = vshll.u32 %v1985, 16
        %v2333 = vrot.slane %v2331, 5
        %v2334 = vor.u32 %v2330, %v2333
        %v2335 = vrot.slane %v2334, 4
        %v2337 = vshll.u32 %v1986, 16
        %v2339 = vrot.slane %v2337, 5
        %v2340 = vsel %vm944, %v2335, %v2339
        %v2341 = vshrl.u32 %v1986, 16
        %v2343 = vrot.slane %v2341, 4
        %v2344 = vor.u32 %v2343, %v2339
        %v2345 = vrot.slane %v2344, 4
        %v2347 = vshll.u32 %v1987, 16
        %v2349 = vrot.slane %v2347, 5
        %v2350 = vsel %vm944, %v2345, %v2349
        %v2352 = vshrl.u32 %v1988, 16
        %v2354 = vrot.slane %v2352, 4
        %v2355 = vshll.u32 %v1988, 16
        %v2357 = vrot.slane %v2355, 5
        %v2358 = vor.u32 %v2354, %v2357
        %v2359 = vrot.slane %v2358, 4
        %v2361 = vshll.u32 %v1989, 16
        %v2363 = vrot.slane %v2361, 5
        %v2364 = vsel %vm944, %v2359, %v2363
        %v2365 = vshrl.u32 %v1989, 16
        %v2367 = vrot.slane %v2365, 4
        %v2368 = vor.u32 %v2367, %v2363
        %v2369 = vrot.slane %v2368, 4
        %v2371 = vshll.u32 %v1990, 16
        %v2373 = vrot.slane %v2371, 5
        %v2374 = vsel %vm944, %v2369, %v2373
        %v2375 = vunpack.c.l.b16 %v2004
        %v2376 = vunpack.c.l.b16 %v2014
        %v2377 = vunpack.c.l.b16 %v2028
        %v2378 = vunpack.c.l.b16 %v2038
        %v2379 = vunpack.c.l.b16 %v2052
        %v2380 = vunpack.c.l.b16 %v2062
        %v2381 = vunpack.c.l.b16 %v2076
        %v2382 = vunpack.c.l.b16 %v2086
        %v2383 = vunpack.c.l.b16 %v2100
        %v2384 = vunpack.c.l.b16 %v2110
        %v2385 = vunpack.c.l.b16 %v2124
        %v2386 = vunpack.c.l.b16 %v2134
        %v2387 = vunpack.c.l.b16 %v2148
        %v2388 = vunpack.c.l.b16 %v2158
        %v2389 = vunpack.c.l.b16 %v2172
        %v2390 = vunpack.c.l.b16 %v2182
        %v2391 = vunpack.c.l.b16 %v2196
        %v2392 = vunpack.c.l.b16 %v2206
        %v2393 = vunpack.c.l.b16 %v2220
        %v2394 = vunpack.c.l.b16 %v2230
        %v2395 = vunpack.c.l.b16 %v2244
        %v2396 = vunpack.c.l.b16 %v2254
        %v2397 = vunpack.c.l.b16 %v2268
        %v2398 = vunpack.c.l.b16 %v2278
        %v2399 = vunpack.c.l.b16 %v2292
        %v2400 = vunpack.c.l.b16 %v2302
        %v2401 = vunpack.c.l.b16 %v2316
        %v2402 = vunpack.c.l.b16 %v2326
        %v2403 = vunpack.c.l.b16 %v2340
        %v2404 = vunpack.c.l.b16 %v2350
        %v2405 = vunpack.c.l.b16 %v2364
        %v2406 = vunpack.c.l.b16 %v2374
        %v2407 = vpack.c.b16 %v2376, %v2375
        %v2408 = vpack.c.b16 %v2378, %v2377
        %v2409 = vpack.c.b16 %v2380, %v2379
        %v2410 = vpack.c.b16 %v2382, %v2381
        %v2411 = vpack.c.b16 %v2384, %v2383
        %v2412 = vpack.c.b16 %v2386, %v2385
        %v2413 = vpack.c.b16 %v2388, %v2387
        %v2414 = vpack.c.b16 %v2390, %v2389
        %v2415 = vpack.c.b16 %v2392, %v2391
        %v2416 = vpack.c.b16 %v2394, %v2393
        %v2417 = vpack.c.b16 %v2396, %v2395
        %v2418 = vpack.c.b16 %v2398, %v2397
        %v2419 = vpack.c.b16 %v2400, %v2399
        %v2420 = vpack.c.b16 %v2402, %v2401
        %v2421 = vpack.c.b16 %v2404, %v2403
        %v2422 = vpack.c.b16 %v2406, %v2405
        %2423 = vrot.lane.b32.xlu0 %v2407, 32
        %v2424 = vpop.permute.xlu0 %2423
        %2425 = vrot.lane.b32.xlu0 %v2408, 32
        %v2426 = vpop.permute.xlu0 %2425
        %2427 = vrot.lane.b32.xlu0 %v2409, 32
        %v2428 = vpop.permute.xlu0 %2427
        %2429 = vrot.lane.b32.xlu0 %v2410, 32
        %v2430 = vpop.permute.xlu0 %2429
        %2431 = vrot.lane.b32.xlu0 %v2411, 32
        %v2432 = vpop.permute.xlu0 %2431
        %2433 = vrot.lane.b32.xlu0 %v2412, 32
        %v2434 = vpop.permute.xlu0 %2433
        %2435 = vrot.lane.b32.xlu0 %v2413, 32
        %v2436 = vpop.permute.xlu0 %2435
        %2437 = vrot.lane.b32.xlu0 %v2414, 32
        %v2438 = vpop.permute.xlu0 %2437
        %2439 = vrot.lane.b32.xlu0 %v2415, 32
        %v2440 = vpop.permute.xlu0 %2439
        %2441 = vrot.lane.b32.xlu0 %v2416, 32
        %v2442 = vpop.permute.xlu0 %2441
        %2443 = vrot.lane.b32.xlu0 %v2417, 32
        %v2444 = vpop.permute.xlu0 %2443
        %2445 = vrot.lane.b32.xlu0 %v2418, 32
        %v2446 = vpop.permute.xlu0 %2445
        %2447 = vrot.lane.b32.xlu0 %v2419, 32
        %v2448 = vpop.permute.xlu0 %2447
        %2449 = vrot.lane.b32.xlu0 %v2420, 32
        %v2450 = vpop.permute.xlu0 %2449
        %2451 = vrot.lane.b32.xlu0 %v2421, 32
        %v2452 = vpop.permute.xlu0 %2451
        %2453 = vrot.lane.b32.xlu0 %v2422, 32
        %v2454 = vpop.permute.xlu0 %2453
        %vm2471 = vcmask 326912
        %2472 = vst.msk [vmem:[#allocation3] sm:$0xff] %vm2471, %v2424
        %2473 = vst.msk [vmem:[#allocation3 + $0x8] sm:$0xff] %vm2471, %v2426
        %2474 = vst.msk [vmem:[#allocation3 + $0x10] sm:$0xff] %vm2471, %v2428
        %2475 = vst.msk [vmem:[#allocation3 + $0x18] sm:$0xff] %vm2471, %v2430
        %2476 = vst.msk [vmem:[#allocation3 + $0x20] sm:$0xff] %vm2471, %v2432
        %2477 = vst.msk [vmem:[#allocation3 + $0x28] sm:$0xff] %vm2471, %v2434
        %2478 = vst.msk [vmem:[#allocation3 + $0x30] sm:$0xff] %vm2471, %v2436
        %2479 = vst.msk [vmem:[#allocation3 + $0x38] sm:$0xff] %vm2471, %v2438
        %2480 = vst.msk [vmem:[#allocation3 + $0x40] sm:$0xff] %vm2471, %v2440
        %2481 = vst.msk [vmem:[#allocation3 + $0x48] sm:$0xff] %vm2471, %v2442
        %2482 = vst.msk [vmem:[#allocation3 + $0x50] sm:$0xff] %vm2471, %v2444
        %2483 = vst.msk [vmem:[#allocation3 + $0x58] sm:$0xff] %vm2471, %v2446
        %2484 = vst.msk [vmem:[#allocation3 + $0x60] sm:$0xff] %vm2471, %v2448
        %2485 = vst.msk [vmem:[#allocation3 + $0x68] sm:$0xff] %vm2471, %v2450
        %2486 = vst.msk [vmem:[#allocation3 + $0x70] sm:$0xff] %vm2471, %v2452
        %2487 = vst.msk [vmem:[#allocation3 + $0x78] sm:$0xff] %vm2471, %v2454
        %v2488 = vld [vmem:[%s179] sm:$0xe]
        %v2489 = vld [vmem:[%s179 + $0x4] sm:$0xf]
        %v2490 = vld [vmem:[%s179 + $0x8] sm:$0x1]
        %v2491 = vld [vmem:[%s179 + $0xc] sm:$0xe]
        %v2492 = vld [vmem:[%s179 + $0x10] sm:$0xf]
        %v2493 = vld [vmem:[%s179 + $0x14] sm:$0x1]
        %v2494 = vld [vmem:[%s179 + $0x18] sm:$0xe]
        %v2495 = vld [vmem:[%s179 + $0x1c] sm:$0xf]
        %v2496 = vld [vmem:[%s179 + $0x20] sm:$0x1]
        %v2497 = vld [vmem:[%s179 + $0x24] sm:$0xe]
        %v2498 = vld [vmem:[%s179 + $0x28] sm:$0xf]
        %v2499 = vld [vmem:[%s179 + $0x2c] sm:$0x1]
        %v2500 = vld [vmem:[%s179 + $0x30] sm:$0xe]
        %v2501 = vld [vmem:[%s179 + $0x34] sm:$0xf]
        %v2502 = vld [vmem:[%s179 + $0x38] sm:$0x1]
        %v2503 = vld [vmem:[%s179 + $0x3c] sm:$0xe]
        %v2504 = vld [vmem:[%s179 + $0x40] sm:$0xf]
        %v2505 = vld [vmem:[%s179 + $0x44] sm:$0x1]
        %v2506 = vld [vmem:[%s179 + $0x48] sm:$0xe]
        %v2507 = vld [vmem:[%s179 + $0x4c] sm:$0xf]
        %v2508 = vld [vmem:[%s179 + $0x50] sm:$0x1]
        %v2509 = vld [vmem:[%s179 + $0x54] sm:$0xe]
        %v2510 = vld [vmem:[%s179 + $0x58] sm:$0xf]
        %v2511 = vld [vmem:[%s179 + $0x5c] sm:$0x1]
        %v2512 = vld [vmem:[%s179 + $0x60] sm:$0xe]
        %v2513 = vld [vmem:[%s179 + $0x64] sm:$0xf]
        %v2514 = vld [vmem:[%s179 + $0x68] sm:$0x1]
        %v2515 = vld [vmem:[%s179 + $0x6c] sm:$0xe]
        %v2516 = vld [vmem:[%s179 + $0x70] sm:$0xf]
        %v2517 = vld [vmem:[%s179 + $0x74] sm:$0x1]
        %v2518 = vld [vmem:[%s179 + $0x78] sm:$0xe]
        %v2519 = vld [vmem:[%s179 + $0x7c] sm:$0xf]
        %v2520 = vld [vmem:[%s179 + $0x80] sm:$0x1]
        %v2521 = vld [vmem:[%s179 + $0x84] sm:$0xe]
        %v2522 = vld [vmem:[%s179 + $0x88] sm:$0xf]
        %v2523 = vld [vmem:[%s179 + $0x8c] sm:$0x1]
        %v2524 = vld [vmem:[%s179 + $0x90] sm:$0xe]
        %v2525 = vld [vmem:[%s179 + $0x94] sm:$0xf]
        %v2526 = vld [vmem:[%s179 + $0x98] sm:$0x1]
        %v2527 = vld [vmem:[%s179 + $0x9c] sm:$0xe]
        %v2528 = vld [vmem:[%s179 + $0xa0] sm:$0xf]
        %v2529 = vld [vmem:[%s179 + $0xa4] sm:$0x1]
        %v2530 = vld [vmem:[%s179 + $0xa8] sm:$0xe]
        %v2531 = vld [vmem:[%s179 + $0xac] sm:$0xf]
        %v2532 = vld [vmem:[%s179 + $0xb0] sm:$0x1]
        %v2533 = vld [vmem:[%s179 + $0xb4] sm:$0xe]
        %v2534 = vld [vmem:[%s179 + $0xb8] sm:$0xf]
        %v2535 = vld [vmem:[%s179 + $0xbc] sm:$0x1]
        %v2584 = vrot.slane %v2488, 5
        %v2585 = vrot.slane %v2584, 4
        %v2586 = vrot.slane %v2489, 5
        %v2587 = vsel %vm1540, %v2585, %v2586
        %v2588 = vrot.slane %v2586, 4
        %v2589 = vrot.slane %v2490, 5
        %v2590 = vsel %vm1540, %v2588, %v2589
        %v2591 = vrot.slane %v2491, 5
        %v2592 = vrot.slane %v2591, 4
        %v2593 = vrot.slane %v2492, 5
        %v2594 = vsel %vm1540, %v2592, %v2593
        %v2595 = vrot.slane %v2593, 4
        %v2596 = vrot.slane %v2493, 5
        %v2597 = vsel %vm1540, %v2595, %v2596
        %v2598 = vrot.slane %v2494, 5
        %v2599 = vrot.slane %v2598, 4
        %v2600 = vrot.slane %v2495, 5
        %v2601 = vsel %vm1540, %v2599, %v2600
        %v2602 = vrot.slane %v2600, 4
        %v2603 = vrot.slane %v2496, 5
        %v2604 = vsel %vm1540, %v2602, %v2603
        %v2605 = vrot.slane %v2497, 5
        %v2606 = vrot.slane %v2605, 4
        %v2607 = vrot.slane %v2498, 5
        %v2608 = vsel %vm1540, %v2606, %v2607
        %v2609 = vrot.slane %v2607, 4
        %v2610 = vrot.slane %v2499, 5
        %v2611 = vsel %vm1540, %v2609, %v2610
        %v2612 = vrot.slane %v2500, 5
        %v2613 = vrot.slane %v2612, 4
        %v2614 = vrot.slane %v2501, 5
        %v2615 = vsel %vm1540, %v2613, %v2614
        %v2616 = vrot.slane %v2614, 4
        %v2617 = vrot.slane %v2502, 5
        %v2618 = vsel %vm1540, %v2616, %v2617
        %v2619 = vrot.slane %v2503, 5
        %v2620 = vrot.slane %v2619, 4
        %v2621 = vrot.slane %v2504, 5
        %v2622 = vsel %vm1540, %v2620, %v2621
        %v2623 = vrot.slane %v2621, 4
        %v2624 = vrot.slane %v2505, 5
        %v2625 = vsel %vm1540, %v2623, %v2624
        %v2626 = vrot.slane %v2506, 5
        %v2627 = vrot.slane %v2626, 4
        %v2628 = vrot.slane %v2507, 5
        %v2629 = vsel %vm1540, %v2627, %v2628
        %v2630 = vrot.slane %v2628, 4
        %v2631 = vrot.slane %v2508, 5
        %v2632 = vsel %vm1540, %v2630, %v2631
        %v2633 = vrot.slane %v2509, 5
        %v2634 = vrot.slane %v2633, 4
        %v2635 = vrot.slane %v2510, 5
        %v2636 = vsel %vm1540, %v2634, %v2635
        %v2637 = vrot.slane %v2635, 4
        %v2638 = vrot.slane %v2511, 5
        %v2639 = vsel %vm1540, %v2637, %v2638
        %v2640 = vrot.slane %v2512, 5
        %v2641 = vrot.slane %v2640, 4
        %v2642 = vrot.slane %v2513, 5
        %v2643 = vsel %vm1540, %v2641, %v2642
        %v2644 = vrot.slane %v2642, 4
        %v2645 = vrot.slane %v2514, 5
        %v2646 = vsel %vm1540, %v2644, %v2645
        %v2647 = vrot.slane %v2515, 5
        %v2648 = vrot.slane %v2647, 4
        %v2649 = vrot.slane %v2516, 5
        %v2650 = vsel %vm1540, %v2648, %v2649
        %v2651 = vrot.slane %v2649, 4
        %v2652 = vrot.slane %v2517, 5
        %v2653 = vsel %vm1540, %v2651, %v2652
        %v2654 = vrot.slane %v2518, 5
        %v2655 = vrot.slane %v2654, 4
        %v2656 = vrot.slane %v2519, 5
        %v2657 = vsel %vm1540, %v2655, %v2656
        %v2658 = vrot.slane %v2656, 4
        %v2659 = vrot.slane %v2520, 5
        %v2660 = vsel %vm1540, %v2658, %v2659
        %v2661 = vrot.slane %v2521, 5
        %v2662 = vrot.slane %v2661, 4
        %v2663 = vrot.slane %v2522, 5
        %v2664 = vsel %vm1540, %v2662, %v2663
        %v2665 = vrot.slane %v2663, 4
        %v2666 = vrot.slane %v2523, 5
        %v2667 = vsel %vm1540, %v2665, %v2666
        %v2668 = vrot.slane %v2524, 5
        %v2669 = vrot.slane %v2668, 4
        %v2670 = vrot.slane %v2525, 5
        %v2671 = vsel %vm1540, %v2669, %v2670
        %v2672 = vrot.slane %v2670, 4
        %v2673 = vrot.slane %v2526, 5
        %v2674 = vsel %vm1540, %v2672, %v2673
        %v2675 = vrot.slane %v2527, 5
        %v2676 = vrot.slane %v2675, 4
        %v2677 = vrot.slane %v2528, 5
        %v2678 = vsel %vm1540, %v2676, %v2677
        %v2679 = vrot.slane %v2677, 4
        %v2680 = vrot.slane %v2529, 5
        %v2681 = vsel %vm1540, %v2679, %v2680
        %v2682 = vrot.slane %v2530, 5
        %v2683 = vrot.slane %v2682, 4
        %v2684 = vrot.slane %v2531, 5
        %v2685 = vsel %vm1540, %v2683, %v2684
        %v2686 = vrot.slane %v2684, 4
        %v2687 = vrot.slane %v2532, 5
        %v2688 = vsel %vm1540, %v2686, %v2687
        %v2689 = vrot.slane %v2533, 5
        %v2690 = vrot.slane %v2689, 4
        %v2691 = vrot.slane %v2534, 5
        %v2692 = vsel %vm1540, %v2690, %v2691
        %v2693 = vrot.slane %v2691, 4
        %v2694 = vrot.slane %v2535, 5
        %v2695 = vsel %vm1540, %v2693, %v2694
        %v2696 = vunpack.c.l.b16 %v2587
        %v2697 = vunpack.c.l.b16 %v2590
        %v2698 = vunpack.c.l.b16 %v2594
        %v2699 = vunpack.c.l.b16 %v2597
        %v2700 = vunpack.c.l.b16 %v2601
        %v2701 = vunpack.c.l.b16 %v2604
        %v2702 = vunpack.c.l.b16 %v2608
        %v2703 = vunpack.c.l.b16 %v2611
        %v2704 = vunpack.c.l.b16 %v2615
        %v2705 = vunpack.c.l.b16 %v2618
        %v2706 = vunpack.c.l.b16 %v2622
        %v2707 = vunpack.c.l.b16 %v2625
        %v2708 = vunpack.c.l.b16 %v2629
        %v2709 = vunpack.c.l.b16 %v2632
        %v2710 = vunpack.c.l.b16 %v2636
        %v2711 = vunpack.c.l.b16 %v2639
        %v2712 = vunpack.c.l.b16 %v2643
        %v2713 = vunpack.c.l.b16 %v2646
        %v2714 = vunpack.c.l.b16 %v2650
        %v2715 = vunpack.c.l.b16 %v2653
        %v2716 = vunpack.c.l.b16 %v2657
        %v2717 = vunpack.c.l.b16 %v2660
        %v2718 = vunpack.c.l.b16 %v2664
        %v2719 = vunpack.c.l.b16 %v2667
        %v2720 = vunpack.c.l.b16 %v2671
        %v2721 = vunpack.c.l.b16 %v2674
        %v2722 = vunpack.c.l.b16 %v2678
        %v2723 = vunpack.c.l.b16 %v2681
        %v2724 = vunpack.c.l.b16 %v2685
        %v2725 = vunpack.c.l.b16 %v2688
        %v2726 = vunpack.c.l.b16 %v2692
        %v2727 = vunpack.c.l.b16 %v2695
        %v2728 = vpack.c.b16 %v2697, %v2696
        %v2729 = vpack.c.b16 %v2699, %v2698
        %v2730 = vpack.c.b16 %v2701, %v2700
        %v2731 = vpack.c.b16 %v2703, %v2702
        %v2732 = vpack.c.b16 %v2705, %v2704
        %v2733 = vpack.c.b16 %v2707, %v2706
        %v2734 = vpack.c.b16 %v2709, %v2708
        %v2735 = vpack.c.b16 %v2711, %v2710
        %v2736 = vpack.c.b16 %v2713, %v2712
        %v2737 = vpack.c.b16 %v2715, %v2714
        %v2738 = vpack.c.b16 %v2717, %v2716
        %v2739 = vpack.c.b16 %v2719, %v2718
        %v2740 = vpack.c.b16 %v2721, %v2720
        %v2741 = vpack.c.b16 %v2723, %v2722
        %v2742 = vpack.c.b16 %v2725, %v2724
        %v2743 = vpack.c.b16 %v2727, %v2726
        %2744 = vrot.lane.b32.xlu0 %v2728, 40
        %v2745 = vpop.permute.xlu0 %2744
        %2746 = vrot.lane.b32.xlu0 %v2729, 40
        %v2747 = vpop.permute.xlu0 %2746
        %2748 = vrot.lane.b32.xlu0 %v2730, 40
        %v2749 = vpop.permute.xlu0 %2748
        %2750 = vrot.lane.b32.xlu0 %v2731, 40
        %v2751 = vpop.permute.xlu0 %2750
        %2752 = vrot.lane.b32.xlu0 %v2732, 40
        %v2753 = vpop.permute.xlu0 %2752
        %2754 = vrot.lane.b32.xlu0 %v2733, 40
        %v2755 = vpop.permute.xlu0 %2754
        %2756 = vrot.lane.b32.xlu0 %v2734, 40
        %v2757 = vpop.permute.xlu0 %2756
        %2758 = vrot.lane.b32.xlu0 %v2735, 40
        %v2759 = vpop.permute.xlu0 %2758
        %2760 = vrot.lane.b32.xlu0 %v2736, 40
        %v2761 = vpop.permute.xlu0 %2760
        %2762 = vrot.lane.b32.xlu0 %v2737, 40
        %v2763 = vpop.permute.xlu0 %2762
        %2764 = vrot.lane.b32.xlu0 %v2738, 40
        %v2765 = vpop.permute.xlu0 %2764
        %2766 = vrot.lane.b32.xlu0 %v2739, 40
        %v2767 = vpop.permute.xlu0 %2766
        %2768 = vrot.lane.b32.xlu0 %v2740, 40
        %v2769 = vpop.permute.xlu0 %2768
        %2770 = vrot.lane.b32.xlu0 %v2741, 40
        %v2771 = vpop.permute.xlu0 %2770
        %2772 = vrot.lane.b32.xlu0 %v2742, 40
        %v2773 = vpop.permute.xlu0 %2772
        %2774 = vrot.lane.b32.xlu0 %v2743, 40
        %v2775 = vpop.permute.xlu0 %2774
        %vm2792 = vcmask 392512
        %2793 = vst.msk [vmem:[#allocation3] sm:$0xff] %vm2792, %v2745
        %2794 = vst.msk [vmem:[#allocation3 + $0x8] sm:$0xff] %vm2792, %v2747
        %2795 = vst.msk [vmem:[#allocation3 + $0x10] sm:$0xff] %vm2792, %v2749
        %2796 = vst.msk [vmem:[#allocation3 + $0x18] sm:$0xff] %vm2792, %v2751
        %2797 = vst.msk [vmem:[#allocation3 + $0x20] sm:$0xff] %vm2792, %v2753
        %2798 = vst.msk [vmem:[#allocation3 + $0x28] sm:$0xff] %vm2792, %v2755
        %2799 = vst.msk [vmem:[#allocation3 + $0x30] sm:$0xff] %vm2792, %v2757
        %2800 = vst.msk [vmem:[#allocation3 + $0x38] sm:$0xff] %vm2792, %v2759
        %2801 = vst.msk [vmem:[#allocation3 + $0x40] sm:$0xff] %vm2792, %v2761
        %2802 = vst.msk [vmem:[#allocation3 + $0x48] sm:$0xff] %vm2792, %v2763
        %2803 = vst.msk [vmem:[#allocation3 + $0x50] sm:$0xff] %vm2792, %v2765
        %2804 = vst.msk [vmem:[#allocation3 + $0x58] sm:$0xff] %vm2792, %v2767
        %2805 = vst.msk [vmem:[#allocation3 + $0x60] sm:$0xff] %vm2792, %v2769
        %2806 = vst.msk [vmem:[#allocation3 + $0x68] sm:$0xff] %vm2792, %v2771
        %2807 = vst.msk [vmem:[#allocation3 + $0x70] sm:$0xff] %vm2792, %v2773
        %2808 = vst.msk [vmem:[#allocation3 + $0x78] sm:$0xff] %vm2792, %v2775
        %s2809 = scalar_lea.vmem [#allocation2], 24
        %v2810 = vld [vmem:[%s2809] sm:$0xf]
        %v2811 = vld [vmem:[%s2809 + $0x4] sm:$0xf]
        %v2812 = vld [vmem:[%s2809 + $0xc] sm:$0xf]
        %v2813 = vld [vmem:[%s2809 + $0x10] sm:$0xf]
        %v2814 = vld [vmem:[%s2809 + $0x18] sm:$0xf]
        %v2815 = vld [vmem:[%s2809 + $0x1c] sm:$0xf]
        %v2816 = vld [vmem:[%s2809 + $0x24] sm:$0xf]
        %v2817 = vld [vmem:[%s2809 + $0x28] sm:$0xf]
        %v2818 = vld [vmem:[%s2809 + $0x30] sm:$0xf]
        %v2819 = vld [vmem:[%s2809 + $0x34] sm:$0xf]
        %v2820 = vld [vmem:[%s2809 + $0x3c] sm:$0xf]
        %v2821 = vld [vmem:[%s2809 + $0x40] sm:$0xf]
        %v2822 = vld [vmem:[%s2809 + $0x48] sm:$0xf]
        %v2823 = vld [vmem:[%s2809 + $0x4c] sm:$0xf]
        %v2824 = vld [vmem:[%s2809 + $0x54] sm:$0xf]
        %v2825 = vld [vmem:[%s2809 + $0x58] sm:$0xf]
        %v2826 = vld [vmem:[%s2809 + $0x60] sm:$0xf]
        %v2827 = vld [vmem:[%s2809 + $0x64] sm:$0xf]
        %v2828 = vld [vmem:[%s2809 + $0x6c] sm:$0xf]
        %v2829 = vld [vmem:[%s2809 + $0x70] sm:$0xf]
        %v2830 = vld [vmem:[%s2809 + $0x78] sm:$0xf]
        %v2831 = vld [vmem:[%s2809 + $0x7c] sm:$0xf]
        %v2832 = vld [vmem:[%s2809 + $0x84] sm:$0xf]
        %v2833 = vld [vmem:[%s2809 + $0x88] sm:$0xf]
        %v2834 = vld [vmem:[%s2809 + $0x90] sm:$0xf]
        %v2835 = vld [vmem:[%s2809 + $0x94] sm:$0xf]
        %v2836 = vld [vmem:[%s2809 + $0x9c] sm:$0xf]
        %v2837 = vld [vmem:[%s2809 + $0xa0] sm:$0xf]
        %v2838 = vld [vmem:[%s2809 + $0xa8] sm:$0xf]
        %v2839 = vld [vmem:[%s2809 + $0xac] sm:$0xf]
        %v2840 = vld [vmem:[%s2809 + $0xb4] sm:$0xf]
        %v2841 = vld [vmem:[%s2809 + $0xb8] sm:$0xf]
        %v2874 = vunpack.c.l.b16 %v2810
        %v2875 = vunpack.c.l.b16 %v2811
        %v2876 = vunpack.c.l.b16 %v2812
        %v2877 = vunpack.c.l.b16 %v2813
        %v2878 = vunpack.c.l.b16 %v2814
        %v2879 = vunpack.c.l.b16 %v2815
        %v2880 = vunpack.c.l.b16 %v2816
        %v2881 = vunpack.c.l.b16 %v2817
        %v2882 = vunpack.c.l.b16 %v2818
        %v2883 = vunpack.c.l.b16 %v2819
        %v2884 = vunpack.c.l.b16 %v2820
        %v2885 = vunpack.c.l.b16 %v2821
        %v2886 = vunpack.c.l.b16 %v2822
        %v2887 = vunpack.c.l.b16 %v2823
        %v2888 = vunpack.c.l.b16 %v2824
        %v2889 = vunpack.c.l.b16 %v2825
        %v2890 = vunpack.c.l.b16 %v2826
        %v2891 = vunpack.c.l.b16 %v2827
        %v2892 = vunpack.c.l.b16 %v2828
        %v2893 = vunpack.c.l.b16 %v2829
        %v2894 = vunpack.c.l.b16 %v2830
        %v2895 = vunpack.c.l.b16 %v2831
        %v2896 = vunpack.c.l.b16 %v2832
        %v2897 = vunpack.c.l.b16 %v2833
        %v2898 = vunpack.c.l.b16 %v2834
        %v2899 = vunpack.c.l.b16 %v2835
        %v2900 = vunpack.c.l.b16 %v2836
        %v2901 = vunpack.c.l.b16 %v2837
        %v2902 = vunpack.c.l.b16 %v2838
        %v2903 = vunpack.c.l.b16 %v2839
        %v2904 = vunpack.c.l.b16 %v2840
        %v2905 = vunpack.c.l.b16 %v2841
        %v2906 = vpack.c.b16 %v2875, %v2874
        %v2907 = vpack.c.b16 %v2877, %v2876
        %v2908 = vpack.c.b16 %v2879, %v2878
        %v2909 = vpack.c.b16 %v2881, %v2880
        %v2910 = vpack.c.b16 %v2883, %v2882
        %v2911 = vpack.c.b16 %v2885, %v2884
        %v2912 = vpack.c.b16 %v2887, %v2886
        %v2913 = vpack.c.b16 %v2889, %v2888
        %v2914 = vpack.c.b16 %v2891, %v2890
        %v2915 = vpack.c.b16 %v2893, %v2892
        %v2916 = vpack.c.b16 %v2895, %v2894
        %v2917 = vpack.c.b16 %v2897, %v2896
        %v2918 = vpack.c.b16 %v2899, %v2898
        %v2919 = vpack.c.b16 %v2901, %v2900
        %v2920 = vpack.c.b16 %v2903, %v2902
        %v2921 = vpack.c.b16 %v2905, %v2904
        %2922 = vrot.lane.b32.xlu0 %v2906, 48
        %v2923 = vpop.permute.xlu0 %2922
        %2924 = vrot.lane.b32.xlu0 %v2907, 48
        %v2925 = vpop.permute.xlu0 %2924
        %2926 = vrot.lane.b32.xlu0 %v2908, 48
        %v2927 = vpop.permute.xlu0 %2926
        %2928 = vrot.lane.b32.xlu0 %v2909, 48
        %v2929 = vpop.permute.xlu0 %2928
        %2930 = vrot.lane.b32.xlu0 %v2910, 48
        %v2931 = vpop.permute.xlu0 %2930
        %2932 = vrot.lane.b32.xlu0 %v2911, 48
        %v2933 = vpop.permute.xlu0 %2932
        %2934 = vrot.lane.b32.xlu0 %v2912, 48
        %v2935 = vpop.permute.xlu0 %2934
        %2936 = vrot.lane.b32.xlu0 %v2913, 48
        %v2937 = vpop.permute.xlu0 %2936
        %2938 = vrot.lane.b32.xlu0 %v2914, 48
        %v2939 = vpop.permute.xlu0 %2938
        %2940 = vrot.lane.b32.xlu0 %v2915, 48
        %v2941 = vpop.permute.xlu0 %2940
        %2942 = vrot.lane.b32.xlu0 %v2916, 48
        %v2943 = vpop.permute.xlu0 %2942
        %2944 = vrot.lane.b32.xlu0 %v2917, 48
        %v2945 = vpop.permute.xlu0 %2944
        %2946 = vrot.lane.b32.xlu0 %v2918, 48
        %v2947 = vpop.permute.xlu0 %2946
        %2948 = vrot.lane.b32.xlu0 %v2919, 48
        %v2949 = vpop.permute.xlu0 %2948
        %2950 = vrot.lane.b32.xlu0 %v2920, 48
        %v2951 = vpop.permute.xlu0 %2950
        %2952 = vrot.lane.b32.xlu0 %v2921, 48
        %v2953 = vpop.permute.xlu0 %2952
        %vm2970 = vcmask 458112
        %2971 = vst.msk [vmem:[#allocation3] sm:$0xff] %vm2970, %v2923
        %2972 = vst.msk [vmem:[#allocation3 + $0x8] sm:$0xff] %vm2970, %v2925
        %2973 = vst.msk [vmem:[#allocation3 + $0x10] sm:$0xff] %vm2970, %v2927
        %2974 = vst.msk [vmem:[#allocation3 + $0x18] sm:$0xff] %vm2970, %v2929
        %2975 = vst.msk [vmem:[#allocation3 + $0x20] sm:$0xff] %vm2970, %v2931
        %2976 = vst.msk [vmem:[#allocation3 + $0x28] sm:$0xff] %vm2970, %v2933
        %2977 = vst.msk [vmem:[#allocation3 + $0x30] sm:$0xff] %vm2970, %v2935
        %2978 = vst.msk [vmem:[#allocation3 + $0x38] sm:$0xff] %vm2970, %v2937
        %2979 = vst.msk [vmem:[#allocation3 + $0x40] sm:$0xff] %vm2970, %v2939
        %2980 = vst.msk [vmem:[#allocation3 + $0x48] sm:$0xff] %vm2970, %v2941
        %2981 = vst.msk [vmem:[#allocation3 + $0x50] sm:$0xff] %vm2970, %v2943
        %2982 = vst.msk [vmem:[#allocation3 + $0x58] sm:$0xff] %vm2970, %v2945
        %2983 = vst.msk [vmem:[#allocation3 + $0x60] sm:$0xff] %vm2970, %v2947
        %2984 = vst.msk [vmem:[#allocation3 + $0x68] sm:$0xff] %vm2970, %v2949
        %2985 = vst.msk [vmem:[#allocation3 + $0x70] sm:$0xff] %vm2970, %v2951
        %2986 = vst.msk [vmem:[#allocation3 + $0x78] sm:$0xff] %vm2970, %v2953
        %v2987 = vld [vmem:[%s2809] sm:$0xf]
        %v2988 = vld [vmem:[%s2809 + $0x4] sm:$0xf]
        %v2989 = vld [vmem:[%s2809 + $0x8] sm:$0x1]
        %v2990 = vld [vmem:[%s2809 + $0xc] sm:$0xf]
        %v2991 = vld [vmem:[%s2809 + $0x10] sm:$0xf]
        %v2992 = vld [vmem:[%s2809 + $0x14] sm:$0x1]
        %v2993 = vld [vmem:[%s2809 + $0x18] sm:$0xf]
        %v2994 = vld [vmem:[%s2809 + $0x1c] sm:$0xf]
        %v2995 = vld [vmem:[%s2809 + $0x20] sm:$0x1]
        %v2996 = vld [vmem:[%s2809 + $0x24] sm:$0xf]
        %v2997 = vld [vmem:[%s2809 + $0x28] sm:$0xf]
        %v2998 = vld [vmem:[%s2809 + $0x2c] sm:$0x1]
        %v2999 = vld [vmem:[%s2809 + $0x30] sm:$0xf]
        %v3000 = vld [vmem:[%s2809 + $0x34] sm:$0xf]
        %v3001 = vld [vmem:[%s2809 + $0x38] sm:$0x1]
        %v3002 = vld [vmem:[%s2809 + $0x3c] sm:$0xf]
        %v3003 = vld [vmem:[%s2809 + $0x40] sm:$0xf]
        %v3004 = vld [vmem:[%s2809 + $0x44] sm:$0x1]
        %v3005 = vld [vmem:[%s2809 + $0x48] sm:$0xf]
        %v3006 = vld [vmem:[%s2809 + $0x4c] sm:$0xf]
        %v3007 = vld [vmem:[%s2809 + $0x50] sm:$0x1]
        %v3008 = vld [vmem:[%s2809 + $0x54] sm:$0xf]
        %v3009 = vld [vmem:[%s2809 + $0x58] sm:$0xf]
        %v3010 = vld [vmem:[%s2809 + $0x5c] sm:$0x1]
        %v3011 = vld [vmem:[%s2809 + $0x60] sm:$0xf]
        %v3012 = vld [vmem:[%s2809 + $0x64] sm:$0xf]
        %v3013 = vld [vmem:[%s2809 + $0x68] sm:$0x1]
        %v3014 = vld [vmem:[%s2809 + $0x6c] sm:$0xf]
        %v3015 = vld [vmem:[%s2809 + $0x70] sm:$0xf]
        %v3016 = vld [vmem:[%s2809 + $0x74] sm:$0x1]
        %v3017 = vld [vmem:[%s2809 + $0x78] sm:$0xf]
        %v3018 = vld [vmem:[%s2809 + $0x7c] sm:$0xf]
        %v3019 = vld [vmem:[%s2809 + $0x80] sm:$0x1]
        %v3020 = vld [vmem:[%s2809 + $0x84] sm:$0xf]
        %v3021 = vld [vmem:[%s2809 + $0x88] sm:$0xf]
        %v3022 = vld [vmem:[%s2809 + $0x8c] sm:$0x1]
        %v3023 = vld [vmem:[%s2809 + $0x90] sm:$0xf]
        %v3024 = vld [vmem:[%s2809 + $0x94] sm:$0xf]
        %v3025 = vld [vmem:[%s2809 + $0x98] sm:$0x1]
        %v3026 = vld [vmem:[%s2809 + $0x9c] sm:$0xf]
        %v3027 = vld [vmem:[%s2809 + $0xa0] sm:$0xf]
        %v3028 = vld [vmem:[%s2809 + $0xa4] sm:$0x1]
        %v3029 = vld [vmem:[%s2809 + $0xa8] sm:$0xf]
        %v3030 = vld [vmem:[%s2809 + $0xac] sm:$0xf]
        %v3031 = vld [vmem:[%s2809 + $0xb0] sm:$0x1]
        %v3032 = vld [vmem:[%s2809 + $0xb4] sm:$0xf]
        %v3033 = vld [vmem:[%s2809 + $0xb8] sm:$0xf]
        %v3034 = vld [vmem:[%s2809 + $0xbc] sm:$0x1]
        %v3036 = vshrl.u32 %v2987, 16
        %v3038 = vrot.slane %v3036, 4
        %v3039 = vshll.u32 %v2987, 16
        %v3041 = vrot.slane %v3039, 5
        %v3042 = vor.u32 %v3038, %v3041
        %v3043 = vrot.slane %v3042, 4
        %v3045 = vshll.u32 %v2988, 16
        %v3047 = vrot.slane %v3045, 5
        %v3048 = vsel %vm944, %v3043, %v3047
        %v3049 = vshrl.u32 %v2988, 16
        %v3051 = vrot.slane %v3049, 4
        %v3052 = vor.u32 %v3051, %v3047
        %v3053 = vrot.slane %v3052, 4
        %v3055 = vshll.u32 %v2989, 16
        %v3057 = vrot.slane %v3055, 5
        %v3058 = vsel %vm944, %v3053, %v3057
        %v3060 = vshrl.u32 %v2990, 16
        %v3062 = vrot.slane %v3060, 4
        %v3063 = vshll.u32 %v2990, 16
        %v3065 = vrot.slane %v3063, 5
        %v3066 = vor.u32 %v3062, %v3065
        %v3067 = vrot.slane %v3066, 4
        %v3069 = vshll.u32 %v2991, 16
        %v3071 = vrot.slane %v3069, 5
        %v3072 = vsel %vm944, %v3067, %v3071
        %v3073 = vshrl.u32 %v2991, 16
        %v3075 = vrot.slane %v3073, 4
        %v3076 = vor.u32 %v3075, %v3071
        %v3077 = vrot.slane %v3076, 4
        %v3079 = vshll.u32 %v2992, 16
        %v3081 = vrot.slane %v3079, 5
        %v3082 = vsel %vm944, %v3077, %v3081
        %v3084 = vshrl.u32 %v2993, 16
        %v3086 = vrot.slane %v3084, 4
        %v3087 = vshll.u32 %v2993, 16
        %v3089 = vrot.slane %v3087, 5
        %v3090 = vor.u32 %v3086, %v3089
        %v3091 = vrot.slane %v3090, 4
        %v3093 = vshll.u32 %v2994, 16
        %v3095 = vrot.slane %v3093, 5
        %v3096 = vsel %vm944, %v3091, %v3095
        %v3097 = vshrl.u32 %v2994, 16
        %v3099 = vrot.slane %v3097, 4
        %v3100 = vor.u32 %v3099, %v3095
        %v3101 = vrot.slane %v3100, 4
        %v3103 = vshll.u32 %v2995, 16
        %v3105 = vrot.slane %v3103, 5
        %v3106 = vsel %vm944, %v3101, %v3105
        %v3108 = vshrl.u32 %v2996, 16
        %v3110 = vrot.slane %v3108, 4
        %v3111 = vshll.u32 %v2996, 16
        %v3113 = vrot.slane %v3111, 5
        %v3114 = vor.u32 %v3110, %v3113
        %v3115 = vrot.slane %v3114, 4
        %v3117 = vshll.u32 %v2997, 16
        %v3119 = vrot.slane %v3117, 5
        %v3120 = vsel %vm944, %v3115, %v3119
        %v3121 = vshrl.u32 %v2997, 16
        %v3123 = vrot.slane %v3121, 4
        %v3124 = vor.u32 %v3123, %v3119
        %v3125 = vrot.slane %v3124, 4
        %v3127 = vshll.u32 %v2998, 16
        %v3129 = vrot.slane %v3127, 5
        %v3130 = vsel %vm944, %v3125, %v3129
        %v3132 = vshrl.u32 %v2999, 16
        %v3134 = vrot.slane %v3132, 4
        %v3135 = vshll.u32 %v2999, 16
        %v3137 = vrot.slane %v3135, 5
        %v3138 = vor.u32 %v3134, %v3137
        %v3139 = vrot.slane %v3138, 4
        %v3141 = vshll.u32 %v3000, 16
        %v3143 = vrot.slane %v3141, 5
        %v3144 = vsel %vm944, %v3139, %v3143
        %v3145 = vshrl.u32 %v3000, 16
        %v3147 = vrot.slane %v3145, 4
        %v3148 = vor.u32 %v3147, %v3143
        %v3149 = vrot.slane %v3148, 4
        %v3151 = vshll.u32 %v3001, 16
        %v3153 = vrot.slane %v3151, 5
        %v3154 = vsel %vm944, %v3149, %v3153
        %v3156 = vshrl.u32 %v3002, 16
        %v3158 = vrot.slane %v3156, 4
        %v3159 = vshll.u32 %v3002, 16
        %v3161 = vrot.slane %v3159, 5
        %v3162 = vor.u32 %v3158, %v3161
        %v3163 = vrot.slane %v3162, 4
        %v3165 = vshll.u32 %v3003, 16
        %v3167 = vrot.slane %v3165, 5
        %v3168 = vsel %vm944, %v3163, %v3167
        %v3169 = vshrl.u32 %v3003, 16
        %v3171 = vrot.slane %v3169, 4
        %v3172 = vor.u32 %v3171, %v3167
        %v3173 = vrot.slane %v3172, 4
        %v3175 = vshll.u32 %v3004, 16
        %v3177 = vrot.slane %v3175, 5
        %v3178 = vsel %vm944, %v3173, %v3177
        %v3180 = vshrl.u32 %v3005, 16
        %v3182 = vrot.slane %v3180, 4
        %v3183 = vshll.u32 %v3005, 16
        %v3185 = vrot.slane %v3183, 5
        %v3186 = vor.u32 %v3182, %v3185
        %v3187 = vrot.slane %v3186, 4
        %v3189 = vshll.u32 %v3006, 16
        %v3191 = vrot.slane %v3189, 5
        %v3192 = vsel %vm944, %v3187, %v3191
        %v3193 = vshrl.u32 %v3006, 16
        %v3195 = vrot.slane %v3193, 4
        %v3196 = vor.u32 %v3195, %v3191
        %v3197 = vrot.slane %v3196, 4
        %v3199 = vshll.u32 %v3007, 16
        %v3201 = vrot.slane %v3199, 5
        %v3202 = vsel %vm944, %v3197, %v3201
        %v3204 = vshrl.u32 %v3008, 16
        %v3206 = vrot.slane %v3204, 4
        %v3207 = vshll.u32 %v3008, 16
        %v3209 = vrot.slane %v3207, 5
        %v3210 = vor.u32 %v3206, %v3209
        %v3211 = vrot.slane %v3210, 4
        %v3213 = vshll.u32 %v3009, 16
        %v3215 = vrot.slane %v3213, 5
        %v3216 = vsel %vm944, %v3211, %v3215
        %v3217 = vshrl.u32 %v3009, 16
        %v3219 = vrot.slane %v3217, 4
        %v3220 = vor.u32 %v3219, %v3215
        %v3221 = vrot.slane %v3220, 4
        %v3223 = vshll.u32 %v3010, 16
        %v3225 = vrot.slane %v3223, 5
        %v3226 = vsel %vm944, %v3221, %v3225
        %v3228 = vshrl.u32 %v3011, 16
        %v3230 = vrot.slane %v3228, 4
        %v3231 = vshll.u32 %v3011, 16
        %v3233 = vrot.slane %v3231, 5
        %v3234 = vor.u32 %v3230, %v3233
        %v3235 = vrot.slane %v3234, 4
        %v3237 = vshll.u32 %v3012, 16
        %v3239 = vrot.slane %v3237, 5
        %v3240 = vsel %vm944, %v3235, %v3239
        %v3241 = vshrl.u32 %v3012, 16
        %v3243 = vrot.slane %v3241, 4
        %v3244 = vor.u32 %v3243, %v3239
        %v3245 = vrot.slane %v3244, 4
        %v3247 = vshll.u32 %v3013, 16
        %v3249 = vrot.slane %v3247, 5
        %v3250 = vsel %vm944, %v3245, %v3249
        %v3252 = vshrl.u32 %v3014, 16
        %v3254 = vrot.slane %v3252, 4
        %v3255 = vshll.u32 %v3014, 16
        %v3257 = vrot.slane %v3255, 5
        %v3258 = vor.u32 %v3254, %v3257
        %v3259 = vrot.slane %v3258, 4
        %v3261 = vshll.u32 %v3015, 16
        %v3263 = vrot.slane %v3261, 5
        %v3264 = vsel %vm944, %v3259, %v3263
        %v3265 = vshrl.u32 %v3015, 16
        %v3267 = vrot.slane %v3265, 4
        %v3268 = vor.u32 %v3267, %v3263
        %v3269 = vrot.slane %v3268, 4
        %v3271 = vshll.u32 %v3016, 16
        %v3273 = vrot.slane %v3271, 5
        %v3274 = vsel %vm944, %v3269, %v3273
        %v3276 = vshrl.u32 %v3017, 16
        %v3278 = vrot.slane %v3276, 4
        %v3279 = vshll.u32 %v3017, 16
        %v3281 = vrot.slane %v3279, 5
        %v3282 = vor.u32 %v3278, %v3281
        %v3283 = vrot.slane %v3282, 4
        %v3285 = vshll.u32 %v3018, 16
        %v3287 = vrot.slane %v3285, 5
        %v3288 = vsel %vm944, %v3283, %v3287
        %v3289 = vshrl.u32 %v3018, 16
        %v3291 = vrot.slane %v3289, 4
        %v3292 = vor.u32 %v3291, %v3287
        %v3293 = vrot.slane %v3292, 4
        %v3295 = vshll.u32 %v3019, 16
        %v3297 = vrot.slane %v3295, 5
        %v3298 = vsel %vm944, %v3293, %v3297
        %v3300 = vshrl.u32 %v3020, 16
        %v3302 = vrot.slane %v3300, 4
        %v3303 = vshll.u32 %v3020, 16
        %v3305 = vrot.slane %v3303, 5
        %v3306 = vor.u32 %v3302, %v3305
        %v3307 = vrot.slane %v3306, 4
        %v3309 = vshll.u32 %v3021, 16
        %v3311 = vrot.slane %v3309, 5
        %v3312 = vsel %vm944, %v3307, %v3311
        %v3313 = vshrl.u32 %v3021, 16
        %v3315 = vrot.slane %v3313, 4
        %v3316 = vor.u32 %v3315, %v3311
        %v3317 = vrot.slane %v3316, 4
        %v3319 = vshll.u32 %v3022, 16
        %v3321 = vrot.slane %v3319, 5
        %v3322 = vsel %vm944, %v3317, %v3321
        %v3324 = vshrl.u32 %v3023, 16
        %v3326 = vrot.slane %v3324, 4
        %v3327 = vshll.u32 %v3023, 16
        %v3329 = vrot.slane %v3327, 5
        %v3330 = vor.u32 %v3326, %v3329
        %v3331 = vrot.slane %v3330, 4
        %v3333 = vshll.u32 %v3024, 16
        %v3335 = vrot.slane %v3333, 5
        %v3336 = vsel %vm944, %v3331, %v3335
        %v3337 = vshrl.u32 %v3024, 16
        %v3339 = vrot.slane %v3337, 4
        %v3340 = vor.u32 %v3339, %v3335
        %v3341 = vrot.slane %v3340, 4
        %v3343 = vshll.u32 %v3025, 16
        %v3345 = vrot.slane %v3343, 5
        %v3346 = vsel %vm944, %v3341, %v3345
        %v3348 = vshrl.u32 %v3026, 16
        %v3350 = vrot.slane %v3348, 4
        %v3351 = vshll.u32 %v3026, 16
        %v3353 = vrot.slane %v3351, 5
        %v3354 = vor.u32 %v3350, %v3353
        %v3355 = vrot.slane %v3354, 4
        %v3357 = vshll.u32 %v3027, 16
        %v3359 = vrot.slane %v3357, 5
        %v3360 = vsel %vm944, %v3355, %v3359
        %v3361 = vshrl.u32 %v3027, 16
        %v3363 = vrot.slane %v3361, 4
        %v3364 = vor.u32 %v3363, %v3359
        %v3365 = vrot.slane %v3364, 4
        %v3367 = vshll.u32 %v3028, 16
        %v3369 = vrot.slane %v3367, 5
        %v3370 = vsel %vm944, %v3365, %v3369
        %v3372 = vshrl.u32 %v3029, 16
        %v3374 = vrot.slane %v3372, 4
        %v3375 = vshll.u32 %v3029, 16
        %v3377 = vrot.slane %v3375, 5
        %v3378 = vor.u32 %v3374, %v3377
        %v3379 = vrot.slane %v3378, 4
        %v3381 = vshll.u32 %v3030, 16
        %v3383 = vrot.slane %v3381, 5
        %v3384 = vsel %vm944, %v3379, %v3383
        %v3385 = vshrl.u32 %v3030, 16
        %v3387 = vrot.slane %v3385, 4
        %v3388 = vor.u32 %v3387, %v3383
        %v3389 = vrot.slane %v3388, 4
        %v3391 = vshll.u32 %v3031, 16
        %v3393 = vrot.slane %v3391, 5
        %v3394 = vsel %vm944, %v3389, %v3393
        %v3396 = vshrl.u32 %v3032, 16
        %v3398 = vrot.slane %v3396, 4
        %v3399 = vshll.u32 %v3032, 16
        %v3401 = vrot.slane %v3399, 5
        %v3402 = vor.u32 %v3398, %v3401
        %v3403 = vrot.slane %v3402, 4
        %v3405 = vshll.u32 %v3033, 16
        %v3407 = vrot.slane %v3405, 5
        %v3408 = vsel %vm944, %v3403, %v3407
        %v3409 = vshrl.u32 %v3033, 16
        %v3411 = vrot.slane %v3409, 4
        %v3412 = vor.u32 %v3411, %v3407
        %v3413 = vrot.slane %v3412, 4
        %v3415 = vshll.u32 %v3034, 16
        %v3417 = vrot.slane %v3415, 5
        %v3418 = vsel %vm944, %v3413, %v3417
        %v3419 = vunpack.c.l.b16 %v3048
        %v3420 = vunpack.c.l.b16 %v3058
        %v3421 = vunpack.c.l.b16 %v3072
        %v3422 = vunpack.c.l.b16 %v3082
        %v3423 = vunpack.c.l.b16 %v3096
        %v3424 = vunpack.c.l.b16 %v3106
        %v3425 = vunpack.c.l.b16 %v3120
        %v3426 = vunpack.c.l.b16 %v3130
        %v3427 = vunpack.c.l.b16 %v3144
        %v3428 = vunpack.c.l.b16 %v3154
        %v3429 = vunpack.c.l.b16 %v3168
        %v3430 = vunpack.c.l.b16 %v3178
        %v3431 = vunpack.c.l.b16 %v3192
        %v3432 = vunpack.c.l.b16 %v3202
        %v3433 = vunpack.c.l.b16 %v3216
        %v3434 = vunpack.c.l.b16 %v3226
        %v3435 = vunpack.c.l.b16 %v3240
        %v3436 = vunpack.c.l.b16 %v3250
        %v3437 = vunpack.c.l.b16 %v3264
        %v3438 = vunpack.c.l.b16 %v3274
        %v3439 = vunpack.c.l.b16 %v3288
        %v3440 = vunpack.c.l.b16 %v3298
        %v3441 = vunpack.c.l.b16 %v3312
        %v3442 = vunpack.c.l.b16 %v3322
        %v3443 = vunpack.c.l.b16 %v3336
        %v3444 = vunpack.c.l.b16 %v3346
        %v3445 = vunpack.c.l.b16 %v3360
        %v3446 = vunpack.c.l.b16 %v3370
        %v3447 = vunpack.c.l.b16 %v3384
        %v3448 = vunpack.c.l.b16 %v3394
        %v3449 = vunpack.c.l.b16 %v3408
        %v3450 = vunpack.c.l.b16 %v3418
        %v3451 = vpack.c.b16 %v3420, %v3419
        %v3452 = vpack.c.b16 %v3422, %v3421
        %v3453 = vpack.c.b16 %v3424, %v3423
        %v3454 = vpack.c.b16 %v3426, %v3425
        %v3455 = vpack.c.b16 %v3428, %v3427
        %v3456 = vpack.c.b16 %v3430, %v3429
        %v3457 = vpack.c.b16 %v3432, %v3431
        %v3458 = vpack.c.b16 %v3434, %v3433
        %v3459 = vpack.c.b16 %v3436, %v3435
        %v3460 = vpack.c.b16 %v3438, %v3437
        %v3461 = vpack.c.b16 %v3440, %v3439
        %v3462 = vpack.c.b16 %v3442, %v3441
        %v3463 = vpack.c.b16 %v3444, %v3443
        %v3464 = vpack.c.b16 %v3446, %v3445
        %v3465 = vpack.c.b16 %v3448, %v3447
        %v3466 = vpack.c.b16 %v3450, %v3449
        %3467 = vrot.lane.b32.xlu0 %v3451, 56
        %v3468 = vpop.permute.xlu0 %3467
        %3469 = vrot.lane.b32.xlu0 %v3452, 56
        %v3470 = vpop.permute.xlu0 %3469
        %3471 = vrot.lane.b32.xlu0 %v3453, 56
        %v3472 = vpop.permute.xlu0 %3471
        %3473 = vrot.lane.b32.xlu0 %v3454, 56
        %v3474 = vpop.permute.xlu0 %3473
        %3475 = vrot.lane.b32.xlu0 %v3455, 56
        %v3476 = vpop.permute.xlu0 %3475
        %3477 = vrot.lane.b32.xlu0 %v3456, 56
        %v3478 = vpop.permute.xlu0 %3477
        %3479 = vrot.lane.b32.xlu0 %v3457, 56
        %v3480 = vpop.permute.xlu0 %3479
        %3481 = vrot.lane.b32.xlu0 %v3458, 56
        %v3482 = vpop.permute.xlu0 %3481
        %3483 = vrot.lane.b32.xlu0 %v3459, 56
        %v3484 = vpop.permute.xlu0 %3483
        %3485 = vrot.lane.b32.xlu0 %v3460, 56
        %v3486 = vpop.permute.xlu0 %3485
        %3487 = vrot.lane.b32.xlu0 %v3461, 56
        %v3488 = vpop.permute.xlu0 %3487
        %3489 = vrot.lane.b32.xlu0 %v3462, 56
        %v3490 = vpop.permute.xlu0 %3489
        %3491 = vrot.lane.b32.xlu0 %v3463, 56
        %v3492 = vpop.permute.xlu0 %3491
        %3493 = vrot.lane.b32.xlu0 %v3464, 56
        %v3494 = vpop.permute.xlu0 %3493
        %3495 = vrot.lane.b32.xlu0 %v3465, 56
        %v3496 = vpop.permute.xlu0 %3495
        %3497 = vrot.lane.b32.xlu0 %v3466, 56
        %v3498 = vpop.permute.xlu0 %3497
        %vm3515 = vcmask 523712
        %3516 = vst.msk [vmem:[#allocation3] sm:$0xff] %vm3515, %v3468
        %3517 = vst.msk [vmem:[#allocation3 + $0x8] sm:$0xff] %vm3515, %v3470
        %3518 = vst.msk [vmem:[#allocation3 + $0x10] sm:$0xff] %vm3515, %v3472
        %3519 = vst.msk [vmem:[#allocation3 + $0x18] sm:$0xff] %vm3515, %v3474
        %3520 = vst.msk [vmem:[#allocation3 + $0x20] sm:$0xff] %vm3515, %v3476
        %3521 = vst.msk [vmem:[#allocation3 + $0x28] sm:$0xff] %vm3515, %v3478
        %3522 = vst.msk [vmem:[#allocation3 + $0x30] sm:$0xff] %vm3515, %v3480
        %3523 = vst.msk [vmem:[#allocation3 + $0x38] sm:$0xff] %vm3515, %v3482
        %3524 = vst.msk [vmem:[#allocation3 + $0x40] sm:$0xff] %vm3515, %v3484
        %3525 = vst.msk [vmem:[#allocation3 + $0x48] sm:$0xff] %vm3515, %v3486
        %3526 = vst.msk [vmem:[#allocation3 + $0x50] sm:$0xff] %vm3515, %v3488
        %3527 = vst.msk [vmem:[#allocation3 + $0x58] sm:$0xff] %vm3515, %v3490
        %3528 = vst.msk [vmem:[#allocation3 + $0x60] sm:$0xff] %vm3515, %v3492
        %3529 = vst.msk [vmem:[#allocation3 + $0x68] sm:$0xff] %vm3515, %v3494
        %3530 = vst.msk [vmem:[#allocation3 + $0x70] sm:$0xff] %vm3515, %v3496
        %3531 = vst.msk [vmem:[#allocation3 + $0x78] sm:$0xff] %vm3515, %v3498
        %v3532 = vld [vmem:[%s2809] sm:$0xe]
        %v3533 = vld [vmem:[%s2809 + $0x4] sm:$0xf]
        %v3534 = vld [vmem:[%s2809 + $0x8] sm:$0x1]
        %v3535 = vld [vmem:[%s2809 + $0xc] sm:$0xe]
        %v3536 = vld [vmem:[%s2809 + $0x10] sm:$0xf]
        %v3537 = vld [vmem:[%s2809 + $0x14] sm:$0x1]
        %v3538 = vld [vmem:[%s2809 + $0x18] sm:$0xe]
        %v3539 = vld [vmem:[%s2809 + $0x1c] sm:$0xf]
        %v3540 = vld [vmem:[%s2809 + $0x20] sm:$0x1]
        %v3541 = vld [vmem:[%s2809 + $0x24] sm:$0xe]
        %v3542 = vld [vmem:[%s2809 + $0x28] sm:$0xf]
        %v3543 = vld [vmem:[%s2809 + $0x2c] sm:$0x1]
        %v3544 = vld [vmem:[%s2809 + $0x30] sm:$0xe]
        %v3545 = vld [vmem:[%s2809 + $0x34] sm:$0xf]
        %v3546 = vld [vmem:[%s2809 + $0x38] sm:$0x1]
        %v3547 = vld [vmem:[%s2809 + $0x3c] sm:$0xe]
        %v3548 = vld [vmem:[%s2809 + $0x40] sm:$0xf]
        %v3549 = vld [vmem:[%s2809 + $0x44] sm:$0x1]
        %v3550 = vld [vmem:[%s2809 + $0x48] sm:$0xe]
        %v3551 = vld [vmem:[%s2809 + $0x4c] sm:$0xf]
        %v3552 = vld [vmem:[%s2809 + $0x50] sm:$0x1]
        %v3553 = vld [vmem:[%s2809 + $0x54] sm:$0xe]
        %v3554 = vld [vmem:[%s2809 + $0x58] sm:$0xf]
        %v3555 = vld [vmem:[%s2809 + $0x5c] sm:$0x1]
        %v3556 = vld [vmem:[%s2809 + $0x60] sm:$0xe]
        %v3557 = vld [vmem:[%s2809 + $0x64] sm:$0xf]
        %v3558 = vld [vmem:[%s2809 + $0x68] sm:$0x1]
        %v3559 = vld [vmem:[%s2809 + $0x6c] sm:$0xe]
        %v3560 = vld [vmem:[%s2809 + $0x70] sm:$0xf]
        %v3561 = vld [vmem:[%s2809 + $0x74] sm:$0x1]
        %v3562 = vld [vmem:[%s2809 + $0x78] sm:$0xe]
        %v3563 = vld [vmem:[%s2809 + $0x7c] sm:$0xf]
        %v3564 = vld [vmem:[%s2809 + $0x80] sm:$0x1]
        %v3565 = vld [vmem:[%s2809 + $0x84] sm:$0xe]
        %v3566 = vld [vmem:[%s2809 + $0x88] sm:$0xf]
        %v3567 = vld [vmem:[%s2809 + $0x8c] sm:$0x1]
        %v3568 = vld [vmem:[%s2809 + $0x90] sm:$0xe]
        %v3569 = vld [vmem:[%s2809 + $0x94] sm:$0xf]
        %v3570 = vld [vmem:[%s2809 + $0x98] sm:$0x1]
        %v3571 = vld [vmem:[%s2809 + $0x9c] sm:$0xe]
        %v3572 = vld [vmem:[%s2809 + $0xa0] sm:$0xf]
        %v3573 = vld [vmem:[%s2809 + $0xa4] sm:$0x1]
        %v3574 = vld [vmem:[%s2809 + $0xa8] sm:$0xe]
        %v3575 = vld [vmem:[%s2809 + $0xac] sm:$0xf]
        %v3576 = vld [vmem:[%s2809 + $0xb0] sm:$0x1]
        %v3577 = vld [vmem:[%s2809 + $0xb4] sm:$0xe]
        %v3578 = vld [vmem:[%s2809 + $0xb8] sm:$0xf]
        %v3579 = vld [vmem:[%s2809 + $0xbc] sm:$0x1]
        %v3628 = vrot.slane %v3532, 5
        %v3629 = vrot.slane %v3628, 4
        %v3630 = vrot.slane %v3533, 5
        %v3631 = vsel %vm1540, %v3629, %v3630
        %v3632 = vrot.slane %v3630, 4
        %v3633 = vrot.slane %v3534, 5
        %v3634 = vsel %vm1540, %v3632, %v3633
        %v3635 = vrot.slane %v3535, 5
        %v3636 = vrot.slane %v3635, 4
        %v3637 = vrot.slane %v3536, 5
        %v3638 = vsel %vm1540, %v3636, %v3637
        %v3639 = vrot.slane %v3637, 4
        %v3640 = vrot.slane %v3537, 5
        %v3641 = vsel %vm1540, %v3639, %v3640
        %v3642 = vrot.slane %v3538, 5
        %v3643 = vrot.slane %v3642, 4
        %v3644 = vrot.slane %v3539, 5
        %v3645 = vsel %vm1540, %v3643, %v3644
        %v3646 = vrot.slane %v3644, 4
        %v3647 = vrot.slane %v3540, 5
        %v3648 = vsel %vm1540, %v3646, %v3647
        %v3649 = vrot.slane %v3541, 5
        %v3650 = vrot.slane %v3649, 4
        %v3651 = vrot.slane %v3542, 5
        %v3652 = vsel %vm1540, %v3650, %v3651
        %v3653 = vrot.slane %v3651, 4
        %v3654 = vrot.slane %v3543, 5
        %v3655 = vsel %vm1540, %v3653, %v3654
        %v3656 = vrot.slane %v3544, 5
        %v3657 = vrot.slane %v3656, 4
        %v3658 = vrot.slane %v3545, 5
        %v3659 = vsel %vm1540, %v3657, %v3658
        %v3660 = vrot.slane %v3658, 4
        %v3661 = vrot.slane %v3546, 5
        %v3662 = vsel %vm1540, %v3660, %v3661
        %v3663 = vrot.slane %v3547, 5
        %v3664 = vrot.slane %v3663, 4
        %v3665 = vrot.slane %v3548, 5
        %v3666 = vsel %vm1540, %v3664, %v3665
        %v3667 = vrot.slane %v3665, 4
        %v3668 = vrot.slane %v3549, 5
        %v3669 = vsel %vm1540, %v3667, %v3668
        %v3670 = vrot.slane %v3550, 5
        %v3671 = vrot.slane %v3670, 4
        %v3672 = vrot.slane %v3551, 5
        %v3673 = vsel %vm1540, %v3671, %v3672
        %v3674 = vrot.slane %v3672, 4
        %v3675 = vrot.slane %v3552, 5
        %v3676 = vsel %vm1540, %v3674, %v3675
        %v3677 = vrot.slane %v3553, 5
        %v3678 = vrot.slane %v3677, 4
        %v3679 = vrot.slane %v3554, 5
        %v3680 = vsel %vm1540, %v3678, %v3679
        %v3681 = vrot.slane %v3679, 4
        %v3682 = vrot.slane %v3555, 5
        %v3683 = vsel %vm1540, %v3681, %v3682
        %v3684 = vrot.slane %v3556, 5
        %v3685 = vrot.slane %v3684, 4
        %v3686 = vrot.slane %v3557, 5
        %v3687 = vsel %vm1540, %v3685, %v3686
        %v3688 = vrot.slane %v3686, 4
        %v3689 = vrot.slane %v3558, 5
        %v3690 = vsel %vm1540, %v3688, %v3689
        %v3691 = vrot.slane %v3559, 5
        %v3692 = vrot.slane %v3691, 4
        %v3693 = vrot.slane %v3560, 5
        %v3694 = vsel %vm1540, %v3692, %v3693
        %v3695 = vrot.slane %v3693, 4
        %v3696 = vrot.slane %v3561, 5
        %v3697 = vsel %vm1540, %v3695, %v3696
        %v3698 = vrot.slane %v3562, 5
        %v3699 = vrot.slane %v3698, 4
        %v3700 = vrot.slane %v3563, 5
        %v3701 = vsel %vm1540, %v3699, %v3700
        %v3702 = vrot.slane %v3700, 4
        %v3703 = vrot.slane %v3564, 5
        %v3704 = vsel %vm1540, %v3702, %v3703
        %v3705 = vrot.slane %v3565, 5
        %v3706 = vrot.slane %v3705, 4
        %v3707 = vrot.slane %v3566, 5
        %v3708 = vsel %vm1540, %v3706, %v3707
        %v3709 = vrot.slane %v3707, 4
        %v3710 = vrot.slane %v3567, 5
        %v3711 = vsel %vm1540, %v3709, %v3710
        %v3712 = vrot.slane %v3568, 5
        %v3713 = vrot.slane %v3712, 4
        %v3714 = vrot.slane %v3569, 5
        %v3715 = vsel %vm1540, %v3713, %v3714
        %v3716 = vrot.slane %v3714, 4
        %v3717 = vrot.slane %v3570, 5
        %v3718 = vsel %vm1540, %v3716, %v3717
        %v3719 = vrot.slane %v3571, 5
        %v3720 = vrot.slane %v3719, 4
        %v3721 = vrot.slane %v3572, 5
        %v3722 = vsel %vm1540, %v3720, %v3721
        %v3723 = vrot.slane %v3721, 4
        %v3724 = vrot.slane %v3573, 5
        %v3725 = vsel %vm1540, %v3723, %v3724
        %v3726 = vrot.slane %v3574, 5
        %v3727 = vrot.slane %v3726, 4
        %v3728 = vrot.slane %v3575, 5
        %v3729 = vsel %vm1540, %v3727, %v3728
        %v3730 = vrot.slane %v3728, 4
        %v3731 = vrot.slane %v3576, 5
        %v3732 = vsel %vm1540, %v3730, %v3731
        %v3733 = vrot.slane %v3577, 5
        %v3734 = vrot.slane %v3733, 4
        %v3735 = vrot.slane %v3578, 5
        %v3736 = vsel %vm1540, %v3734, %v3735
        %v3737 = vrot.slane %v3735, 4
        %v3738 = vrot.slane %v3579, 5
        %v3739 = vsel %vm1540, %v3737, %v3738
        %v3740 = vunpack.c.l.b16 %v3631
        %v3741 = vunpack.c.l.b16 %v3634
        %v3742 = vunpack.c.l.b16 %v3638
        %v3743 = vunpack.c.l.b16 %v3641
        %v3744 = vunpack.c.l.b16 %v3645
        %v3745 = vunpack.c.l.b16 %v3648
        %v3746 = vunpack.c.l.b16 %v3652
        %v3747 = vunpack.c.l.b16 %v3655
        %v3748 = vunpack.c.l.b16 %v3659
        %v3749 = vunpack.c.l.b16 %v3662
        %v3750 = vunpack.c.l.b16 %v3666
        %v3751 = vunpack.c.l.b16 %v3669
        %v3752 = vunpack.c.l.b16 %v3673
        %v3753 = vunpack.c.l.b16 %v3676
        %v3754 = vunpack.c.l.b16 %v3680
        %v3755 = vunpack.c.l.b16 %v3683
        %v3756 = vunpack.c.l.b16 %v3687
        %v3757 = vunpack.c.l.b16 %v3690
        %v3758 = vunpack.c.l.b16 %v3694
        %v3759 = vunpack.c.l.b16 %v3697
        %v3760 = vunpack.c.l.b16 %v3701
        %v3761 = vunpack.c.l.b16 %v3704
        %v3762 = vunpack.c.l.b16 %v3708
        %v3763 = vunpack.c.l.b16 %v3711
        %v3764 = vunpack.c.l.b16 %v3715
        %v3765 = vunpack.c.l.b16 %v3718
        %v3766 = vunpack.c.l.b16 %v3722
        %v3767 = vunpack.c.l.b16 %v3725
        %v3768 = vunpack.c.l.b16 %v3729
        %v3769 = vunpack.c.l.b16 %v3732
        %v3770 = vunpack.c.l.b16 %v3736
        %v3771 = vunpack.c.l.b16 %v3739
        %v3772 = vpack.c.b16 %v3741, %v3740
        %v3773 = vpack.c.b16 %v3743, %v3742
        %v3774 = vpack.c.b16 %v3745, %v3744
        %v3775 = vpack.c.b16 %v3747, %v3746
        %v3776 = vpack.c.b16 %v3749, %v3748
        %v3777 = vpack.c.b16 %v3751, %v3750
        %v3778 = vpack.c.b16 %v3753, %v3752
        %v3779 = vpack.c.b16 %v3755, %v3754
        %v3780 = vpack.c.b16 %v3757, %v3756
        %v3781 = vpack.c.b16 %v3759, %v3758
        %v3782 = vpack.c.b16 %v3761, %v3760
        %v3783 = vpack.c.b16 %v3763, %v3762
        %v3784 = vpack.c.b16 %v3765, %v3764
        %v3785 = vpack.c.b16 %v3767, %v3766
        %v3786 = vpack.c.b16 %v3769, %v3768
        %v3787 = vpack.c.b16 %v3771, %v3770
        %3788 = vrot.lane.b32.xlu0 %v3772, 64
        %v3789 = vpop.permute.xlu0 %3788
        %3790 = vrot.lane.b32.xlu0 %v3773, 64
        %v3791 = vpop.permute.xlu0 %3790
        %3792 = vrot.lane.b32.xlu0 %v3774, 64
        %v3793 = vpop.permute.xlu0 %3792
        %3794 = vrot.lane.b32.xlu0 %v3775, 64
        %v3795 = vpop.permute.xlu0 %3794
        %3796 = vrot.lane.b32.xlu0 %v3776, 64
        %v3797 = vpop.permute.xlu0 %3796
        %3798 = vrot.lane.b32.xlu0 %v3777, 64
        %v3799 = vpop.permute.xlu0 %3798
        %3800 = vrot.lane.b32.xlu0 %v3778, 64
        %v3801 = vpop.permute.xlu0 %3800
        %3802 = vrot.lane.b32.xlu0 %v3779, 64
        %v3803 = vpop.permute.xlu0 %3802
        %3804 = vrot.lane.b32.xlu0 %v3780, 64
        %v3805 = vpop.permute.xlu0 %3804
        %3806 = vrot.lane.b32.xlu0 %v3781, 64
        %v3807 = vpop.permute.xlu0 %3806
        %3808 = vrot.lane.b32.xlu0 %v3782, 64
        %v3809 = vpop.permute.xlu0 %3808
        %3810 = vrot.lane.b32.xlu0 %v3783, 64
        %v3811 = vpop.permute.xlu0 %3810
        %3812 = vrot.lane.b32.xlu0 %v3784, 64
        %v3813 = vpop.permute.xlu0 %3812
        %3814 = vrot.lane.b32.xlu0 %v3785, 64
        %v3815 = vpop.permute.xlu0 %3814
        %3816 = vrot.lane.b32.xlu0 %v3786, 64
        %v3817 = vpop.permute.xlu0 %3816
        %3818 = vrot.lane.b32.xlu0 %v3787, 64
        %v3819 = vpop.permute.xlu0 %3818
        %vm3836 = vcmask 589312
        %3837 = vst.msk [vmem:[#allocation3] sm:$0xff] %vm3836, %v3789
        %3838 = vst.msk [vmem:[#allocation3 + $0x8] sm:$0xff] %vm3836, %v3791
        %3839 = vst.msk [vmem:[#allocation3 + $0x10] sm:$0xff] %vm3836, %v3793
        %3840 = vst.msk [vmem:[#allocation3 + $0x18] sm:$0xff] %vm3836, %v3795
        %3841 = vst.msk [vmem:[#allocation3 + $0x20] sm:$0xff] %vm3836, %v3797
        %3842 = vst.msk [vmem:[#allocation3 + $0x28] sm:$0xff] %vm3836, %v3799
        %3843 = vst.msk [vmem:[#allocation3 + $0x30] sm:$0xff] %vm3836, %v3801
        %3844 = vst.msk [vmem:[#allocation3 + $0x38] sm:$0xff] %vm3836, %v3803
        %3845 = vst.msk [vmem:[#allocation3 + $0x40] sm:$0xff] %vm3836, %v3805
        %3846 = vst.msk [vmem:[#allocation3 + $0x48] sm:$0xff] %vm3836, %v3807
        %3847 = vst.msk [vmem:[#allocation3 + $0x50] sm:$0xff] %vm3836, %v3809
        %3848 = vst.msk [vmem:[#allocation3 + $0x58] sm:$0xff] %vm3836, %v3811
        %3849 = vst.msk [vmem:[#allocation3 + $0x60] sm:$0xff] %vm3836, %v3813
        %3850 = vst.msk [vmem:[#allocation3 + $0x68] sm:$0xff] %vm3836, %v3815
        %3851 = vst.msk [vmem:[#allocation3 + $0x70] sm:$0xff] %vm3836, %v3817
        %3852 = vst.msk [vmem:[#allocation3 + $0x78] sm:$0xff] %vm3836, %v3819
        %v3853 = vld [vmem:[#allocation3] sm:$0xff]
        %v3854 = vld [vmem:[#allocation3 + $0x8] sm:$0xff]
        %v3855 = vld [vmem:[#allocation3 + $0x10] sm:$0xff]
        %v3856 = vld [vmem:[#allocation3 + $0x18] sm:$0xff]
        %v3857 = vld [vmem:[#allocation3 + $0x20] sm:$0xff]
        %v3858 = vld [vmem:[#allocation3 + $0x28] sm:$0xff]
        %v3859 = vld [vmem:[#allocation3 + $0x30] sm:$0xff]
        %v3860 = vld [vmem:[#allocation3 + $0x38] sm:$0xff]
        %v3861 = vld [vmem:[#allocation3 + $0x40] sm:$0xff]
        %v3862 = vld [vmem:[#allocation3 + $0x48] sm:$0xff]
        %v3863 = vld [vmem:[#allocation3 + $0x50] sm:$0xff]
        %v3864 = vld [vmem:[#allocation3 + $0x58] sm:$0xff]
        %v3865 = vld [vmem:[#allocation3 + $0x60] sm:$0xff]
        %v3866 = vld [vmem:[#allocation3 + $0x68] sm:$0xff]
        %v3867 = vld [vmem:[#allocation3 + $0x70] sm:$0xff]
        %v3868 = vld [vmem:[#allocation3 + $0x78] sm:$0xff]
        %v3869 = vld [vmem:[%s1] sm:$0xf]
        %v3870 = vld [vmem:[%s1 + $0x4] sm:$0xf]
        %v3871 = vld [vmem:[%s1 + $0x8] sm:$0xf]
        %v3872 = vld [vmem:[%s1 + $0xc] sm:$0xf]
        %v3873 = vld [vmem:[%s1 + $0x10] sm:$0xf]
        %v3874 = vld [vmem:[%s1 + $0x14] sm:$0xf]
        %v3875 = vld [vmem:[%s1 + $0x18] sm:$0xf]
        %v3876 = vld [vmem:[%s1 + $0x1c] sm:$0xf]
        %v3877 = vld [vmem:[%s1 + $0x20] sm:$0xf]
        %v3887 = vunpack.c.l.b16 %v3869
        %v3888 = vunpack.c.l.b16 %v3870
        %v3889 = vunpack.c.l.b16 %v3871
        %v3890 = vunpack.c.l.b16 %v3872
        %v3891 = vunpack.c.l.b16 %v3873
        %v3892 = vunpack.c.l.b16 %v3874
        %v3893 = vunpack.c.l.b16 %v3875
        %v3894 = vunpack.c.l.b16 %v3876
        %v3895 = vunpack.c.l.b16 %v3877
        %v3896 = vpack.c.b16 %v3888, %v3887
        %v3897 = vpack.c.b16 %v3890, %v3889
        %v3898 = vpack.c.b16 %v3892, %v3891
        %v3899 = vpack.c.b16 %v3894, %v3893
        %v3900 = vpack.c.b16 %v3895, %v3895
        %vm3905 = vcmask 588800
        %v3907 = vsel %vm3905, %v3853, 0
        %v3910 = vsel %vm3905, %v3854, 0
        %v3913 = vsel %vm3905, %v3855, 0
        %v3916 = vsel %vm3905, %v3856, 0
        %v3919 = vsel %vm3905, %v3857, 0
        %v3922 = vsel %vm3905, %v3858, 0
        %v3925 = vsel %vm3905, %v3859, 0
        %v3928 = vsel %vm3905, %v3860, 0
        %v3931 = vsel %vm3905, %v3861, 0
        %v3934 = vsel %vm3905, %v3862, 0
        %v3937 = vsel %vm3905, %v3863, 0
        %v3940 = vsel %vm3905, %v3864, 0
        %v3943 = vsel %vm3905, %v3865, 0
        %v3946 = vsel %vm3905, %v3866, 0
        %v3949 = vsel %vm3905, %v3867, 0
        %v3952 = vsel %vm3905, %v3868, 0
        %vm3954 = vcmask 1043456
        %v3956 = vsel %vm3954, %v3900, 0
        %3958 = vmatprep.subr.bf16.mxu0 0
        %3959 = vmatpush1.bf16.msra.mxu0 %v3896
        %3960 = vmatprep.subr.bf16.mxu0 0
        %3961 = vmatpush1.bf16.msra.mxu0 %v3897
        %3962 = vmatprep.subr.bf16.mxu0 0
        %3963 = vmatpush1.bf16.msra.mxu0 %v3898
        %3964 = vmatprep.subr.bf16.mxu0 0
        %3965 = vmatpush1.bf16.msra.mxu0 %v3899
        %3966 = vmatprep.subr.bf16.mxu0 0
        %3967 = vmatpush1.bf16.msra.mxu0 %v3956
        %3968 = vmatprep.subr.bf16.mxu0 0
        %3969 = vmatpush1.bf16.msra.mxu0 0
        %3970 = vmatprep.subr.bf16.mxu0 0
        %3971 = vmatpush1.bf16.msra.mxu0 0
        %3972 = vmatprep.subr.bf16.mxu0 0
        %3973 = vmatpush1.bf16.msra.mxu0 0
        %3974 = vmatprep.subr.bf16.mxu0 0
        %3975 = vmatpush1.bf16.msra.mxu0 0
        %3976 = vmatprep.subr.bf16.mxu0 0
        %3977 = vmatpush1.bf16.msra.mxu0 0
        %3978 = vmatprep.subr.bf16.mxu0 0
        %3979 = vmatpush1.bf16.msra.mxu0 0
        %3980 = vmatprep.subr.bf16.mxu0 0
        %3981 = vmatpush1.bf16.msra.mxu0 0
        %3982 = vmatprep.subr.bf16.mxu0 0
        %3983 = vmatpush1.bf16.msra.mxu0 0
        %3984 = vmatprep.subr.bf16.mxu0 0
        %3985 = vmatpush1.bf16.msra.mxu0 0
        %3986 = vmatprep.subr.bf16.mxu0 0
        %3987 = vmatpush1.bf16.msra.mxu0 0
        %3988 = vmatprep.subr.bf16.mxu0 0
        %3989 = vmatpush1.bf16.msra.mxu0 0
        %3990 = vmatprep.mubr.bf16.mxu0 0
        %3991 = vmatmul.mubr.bf16.gmra.mrb[0].mxu0 %v3907
        %v3992 = vpop.f32.mrb[0].mxu0
        %v3993 = vadd.f32 0.0, %v3992
        %v3994 = vpop.f32.mrb[0].mxu0
        %v3995 = vpop.f32.mrb[0].mxu0
        %v3996 = vadd.f32 0.0, %v3995
        %v3997 = vpop.f32.mrb[0].mxu0
        %3998 = vmatprep.mubr.bf16.mxu0 0
        %3999 = vmatmul.mubr.bf16.gmra.mrb[0].mxu0 %v3910
        %v4000 = vpop.f32.mrb[0].mxu0
        %v4001 = vadd.f32 0.0, %v4000
        %v4002 = vpop.f32.mrb[0].mxu0
        %v4003 = vpop.f32.mrb[0].mxu0
        %v4004 = vadd.f32 0.0, %v4003
        %v4005 = vpop.f32.mrb[0].mxu0
        %4006 = vmatprep.mubr.bf16.mxu0 0
        %4007 = vmatmul.mubr.bf16.gmra.mrb[0].mxu0 %v3913
        %v4008 = vpop.f32.mrb[0].mxu0
        %v4009 = vadd.f32 0.0, %v4008
        %v4010 = vpop.f32.mrb[0].mxu0
        %v4011 = vpop.f32.mrb[0].mxu0
        %v4012 = vadd.f32 0.0, %v4011
        %v4013 = vpop.f32.mrb[0].mxu0
        %4014 = vmatprep.mubr.bf16.mxu0 0
        %4015 = vmatmul.mubr.bf16.gmra.mrb[0].mxu0 %v3916
        %v4016 = vpop.f32.mrb[0].mxu0
        %v4017 = vadd.f32 0.0, %v4016
        %v4018 = vpop.f32.mrb[0].mxu0
        %v4019 = vpop.f32.mrb[0].mxu0
        %v4020 = vadd.f32 0.0, %v4019
        %v4021 = vpop.f32.mrb[0].mxu0
        %4022 = vmatprep.mubr.bf16.mxu0 0
        %4023 = vmatmul.mubr.bf16.gmra.mrb[0].mxu0 %v3919
        %v4024 = vpop.f32.mrb[0].mxu0
        %v4025 = vadd.f32 0.0, %v4024
        %v4026 = vpop.f32.mrb[0].mxu0
        %v4027 = vpop.f32.mrb[0].mxu0
        %v4028 = vadd.f32 0.0, %v4027
        %v4029 = vpop.f32.mrb[0].mxu0
        %4030 = vmatprep.mubr.bf16.mxu0 0
        %4031 = vmatmul.mubr.bf16.gmra.mrb[0].mxu0 %v3922
        %v4032 = vpop.f32.mrb[0].mxu0
        %v4033 = vadd.f32 0.0, %v4032
        %v4034 = vpop.f32.mrb[0].mxu0
        %v4035 = vpop.f32.mrb[0].mxu0
        %v4036 = vadd.f32 0.0, %v4035
        %v4037 = vpop.f32.mrb[0].mxu0
        %4038 = vmatprep.mubr.bf16.mxu0 0
        %4039 = vmatmul.mubr.bf16.gmra.mrb[0].mxu0 %v3925
        %v4040 = vpop.f32.mrb[0].mxu0
        %v4041 = vadd.f32 0.0, %v4040
        %v4042 = vpop.f32.mrb[0].mxu0
        %v4043 = vpop.f32.mrb[0].mxu0
        %v4044 = vadd.f32 0.0, %v4043
        %v4045 = vpop.f32.mrb[0].mxu0
        %4046 = vmatprep.mubr.bf16.mxu0 0
        %4047 = vmatmul.mubr.bf16.gmra.mrb[0].mxu0 %v3928
        %v4048 = vpop.f32.mrb[0].mxu0
        %v4049 = vadd.f32 0.0, %v4048
        %v4050 = vpop.f32.mrb[0].mxu0
        %v4051 = vpop.f32.mrb[0].mxu0
        %v4052 = vadd.f32 0.0, %v4051
        %v4053 = vpop.f32.mrb[0].mxu0
        %4054 = vmatprep.mubr.bf16.mxu0 0
        %4055 = vmatmul.mubr.bf16.gmra.mrb[0].mxu0 %v3931
        %v4056 = vpop.f32.mrb[0].mxu0
        %v4057 = vadd.f32 0.0, %v4056
        %v4058 = vpop.f32.mrb[0].mxu0
        %v4059 = vpop.f32.mrb[0].mxu0
        %v4060 = vadd.f32 0.0, %v4059
        %v4061 = vpop.f32.mrb[0].mxu0
        %4062 = vmatprep.mubr.bf16.mxu0 0
        %4063 = vmatmul.mubr.bf16.gmra.mrb[0].mxu0 %v3934
        %v4064 = vpop.f32.mrb[0].mxu0
        %v4065 = vadd.f32 0.0, %v4064
        %v4066 = vpop.f32.mrb[0].mxu0
        %v4067 = vpop.f32.mrb[0].mxu0
        %v4068 = vadd.f32 0.0, %v4067
        %v4069 = vpop.f32.mrb[0].mxu0
        %4070 = vmatprep.mubr.bf16.mxu0 0
        %4071 = vmatmul.mubr.bf16.gmra.mrb[0].mxu0 %v3937
        %v4072 = vpop.f32.mrb[0].mxu0
        %v4073 = vadd.f32 0.0, %v4072
        %v4074 = vpop.f32.mrb[0].mxu0
        %v4075 = vpop.f32.mrb[0].mxu0
        %v4076 = vadd.f32 0.0, %v4075
        %v4077 = vpop.f32.mrb[0].mxu0
        %4078 = vmatprep.mubr.bf16.mxu0 0
        %4079 = vmatmul.mubr.bf16.gmra.mrb[0].mxu0 %v3940
        %v4080 = vpop.f32.mrb[0].mxu0
        %v4081 = vadd.f32 0.0, %v4080
        %v4082 = vpop.f32.mrb[0].mxu0
        %v4083 = vpop.f32.mrb[0].mxu0
        %v4084 = vadd.f32 0.0, %v4083
        %v4085 = vpop.f32.mrb[0].mxu0
        %4086 = vmatprep.mubr.bf16.mxu0 0
        %4087 = vmatmul.mubr.bf16.gmra.mrb[0].mxu0 %v3943
        %v4088 = vpop.f32.mrb[0].mxu0
        %v4089 = vadd.f32 0.0, %v4088
        %v4090 = vpop.f32.mrb[0].mxu0
        %v4091 = vpop.f32.mrb[0].mxu0
        %v4092 = vadd.f32 0.0, %v4091
        %v4093 = vpop.f32.mrb[0].mxu0
        %4094 = vmatprep.mubr.bf16.mxu0 0
        %4095 = vmatmul.mubr.bf16.gmra.mrb[0].mxu0 %v3946
        %v4096 = vpop.f32.mrb[0].mxu0
        %v4097 = vadd.f32 0.0, %v4096
        %v4098 = vpop.f32.mrb[0].mxu0
        %v4099 = vpop.f32.mrb[0].mxu0
        %v4100 = vadd.f32 0.0, %v4099
        %v4101 = vpop.f32.mrb[0].mxu0
        %4102 = vmatprep.mubr.bf16.mxu0 0
        %4103 = vmatmul.mubr.bf16.gmra.mrb[0].mxu0 %v3949
        %v4104 = vpop.f32.mrb[0].mxu0
        %v4105 = vadd.f32 0.0, %v4104
        %v4106 = vpop.f32.mrb[0].mxu0
        %v4107 = vpop.f32.mrb[0].mxu0
        %v4108 = vadd.f32 0.0, %v4107
        %v4109 = vpop.f32.mrb[0].mxu0
        %4110 = vmatprep.mubr.bf16.mxu0 0
        %4111 = vmatmul.mubr.bf16.gmra.mrb[0].mxu0 %v3952
        %v4112 = vpop.f32.mrb[0].mxu0
        %v4113 = vadd.f32 0.0, %v4112
        %v4114 = vpop.f32.mrb[0].mxu0
        %v4115 = vpop.f32.mrb[0].mxu0
        %v4116 = vadd.f32 0.0, %v4115
        %v4117 = vpop.f32.mrb[0].mxu0
        %4118 = vdwg.mxu0
        %v4119 = vld [vmem:[%s2] sm:$0x1]
        %v4120 = vlaneseq
        %v4121 = vshrl.u32 %v4120, 7
        %v4122 = vsub.s32 0, %v4121
        %v4123 = vrot.slane %v4119, %v4122
        %v4124 = vmul.f32 %v3993, %v4123
        %v4125 = vmul.f32 %v3996, %v4123
        %v4126 = vmul.f32 %v4001, %v4123
        %v4127 = vmul.f32 %v4004, %v4123
        %v4128 = vmul.f32 %v4009, %v4123
        %v4129 = vmul.f32 %v4012, %v4123
        %v4130 = vmul.f32 %v4017, %v4123
        %v4131 = vmul.f32 %v4020, %v4123
        %v4132 = vmul.f32 %v4025, %v4123
        %v4133 = vmul.f32 %v4028, %v4123
        %v4134 = vmul.f32 %v4033, %v4123
        %v4135 = vmul.f32 %v4036, %v4123
        %v4136 = vmul.f32 %v4041, %v4123
        %v4137 = vmul.f32 %v4044, %v4123
        %v4138 = vmul.f32 %v4049, %v4123
        %v4139 = vmul.f32 %v4052, %v4123
        %v4140 = vmul.f32 %v4057, %v4123
        %v4141 = vmul.f32 %v4060, %v4123
        %v4142 = vmul.f32 %v4065, %v4123
        %v4143 = vmul.f32 %v4068, %v4123
        %v4144 = vmul.f32 %v4073, %v4123
        %v4145 = vmul.f32 %v4076, %v4123
        %v4146 = vmul.f32 %v4081, %v4123
        %v4147 = vmul.f32 %v4084, %v4123
        %v4148 = vmul.f32 %v4089, %v4123
        %v4149 = vmul.f32 %v4092, %v4123
        %v4150 = vmul.f32 %v4097, %v4123
        %v4151 = vmul.f32 %v4100, %v4123
        %v4152 = vmul.f32 %v4105, %v4123
        %v4153 = vmul.f32 %v4108, %v4123
        %v4154 = vmul.f32 %v4113, %v4123
        %v4155 = vmul.f32 %v4116, %v4123
        %v4156 = vld [vmem:[%s2 + $0x1] sm:$0x1]
        %v4157 = vlaneseq
        %v4158 = vshrl.u32 %v4157, 7
        %v4159 = vsub.s32 0, %v4158
        %v4160 = vrot.slane %v4156, %v4159
        %v4161 = vadd.f32 %v4124, %v4160
        %v4162 = vadd.f32 %v4125, %v4160
        %v4163 = vadd.f32 %v4126, %v4160
        %v4164 = vadd.f32 %v4127, %v4160
        %v4165 = vadd.f32 %v4128, %v4160
        %v4166 = vadd.f32 %v4129, %v4160
        %v4167 = vadd.f32 %v4130, %v4160
        %v4168 = vadd.f32 %v4131, %v4160
        %v4169 = vadd.f32 %v4132, %v4160
        %v4170 = vadd.f32 %v4133, %v4160
        %v4171 = vadd.f32 %v4134, %v4160
        %v4172 = vadd.f32 %v4135, %v4160
        %v4173 = vadd.f32 %v4136, %v4160
        %v4174 = vadd.f32 %v4137, %v4160
        %v4175 = vadd.f32 %v4138, %v4160
        %v4176 = vadd.f32 %v4139, %v4160
        %v4177 = vadd.f32 %v4140, %v4160
        %v4178 = vadd.f32 %v4141, %v4160
        %v4179 = vadd.f32 %v4142, %v4160
        %v4180 = vadd.f32 %v4143, %v4160
        %v4181 = vadd.f32 %v4144, %v4160
        %v4182 = vadd.f32 %v4145, %v4160
        %v4183 = vadd.f32 %v4146, %v4160
        %v4184 = vadd.f32 %v4147, %v4160
        %v4185 = vadd.f32 %v4148, %v4160
        %v4186 = vadd.f32 %v4149, %v4160
        %v4187 = vadd.f32 %v4150, %v4160
        %v4188 = vadd.f32 %v4151, %v4160
        %v4189 = vadd.f32 %v4152, %v4160
        %v4190 = vadd.f32 %v4153, %v4160
        %v4191 = vadd.f32 %v4154, %v4160
        %v4192 = vadd.f32 %v4155, %v4160
        %v4193 = vmax.f32 %v4161, 0.0
        %v4194 = vmax.f32 %v4162, 0.0
        %v4195 = vmax.f32 %v4163, 0.0
        %v4196 = vmax.f32 %v4164, 0.0
        %v4197 = vmax.f32 %v4165, 0.0
        %v4198 = vmax.f32 %v4166, 0.0
        %v4199 = vmax.f32 %v4167, 0.0
        %v4200 = vmax.f32 %v4168, 0.0
        %v4201 = vmax.f32 %v4169, 0.0
        %v4202 = vmax.f32 %v4170, 0.0
        %v4203 = vmax.f32 %v4171, 0.0
        %v4204 = vmax.f32 %v4172, 0.0
        %v4205 = vmax.f32 %v4173, 0.0
        %v4206 = vmax.f32 %v4174, 0.0
        %v4207 = vmax.f32 %v4175, 0.0
        %v4208 = vmax.f32 %v4176, 0.0
        %v4209 = vmax.f32 %v4177, 0.0
        %v4210 = vmax.f32 %v4178, 0.0
        %v4211 = vmax.f32 %v4179, 0.0
        %v4212 = vmax.f32 %v4180, 0.0
        %v4213 = vmax.f32 %v4181, 0.0
        %v4214 = vmax.f32 %v4182, 0.0
        %v4215 = vmax.f32 %v4183, 0.0
        %v4216 = vmax.f32 %v4184, 0.0
        %v4217 = vmax.f32 %v4185, 0.0
        %v4218 = vmax.f32 %v4186, 0.0
        %v4219 = vmax.f32 %v4187, 0.0
        %v4220 = vmax.f32 %v4188, 0.0
        %v4221 = vmax.f32 %v4189, 0.0
        %v4222 = vmax.f32 %v4190, 0.0
        %v4223 = vmax.f32 %v4191, 0.0
        %v4224 = vmax.f32 %v4192, 0.0
        %v4225 = vmax.f32 %v4193, %v4195
        %v4226 = vmax.f32 %v4194, %v4196
        %v4227 = vmax.f32 %v4197, %v4199
        %v4228 = vmax.f32 %v4198, %v4200
        %v4229 = vmax.f32 %v4201, %v4203
        %v4230 = vmax.f32 %v4202, %v4204
        %v4231 = vmax.f32 %v4205, %v4207
        %v4232 = vmax.f32 %v4206, %v4208
        %v4233 = vmax.f32 %v4209, %v4211
        %v4234 = vmax.f32 %v4210, %v4212
        %v4235 = vmax.f32 %v4213, %v4215
        %v4236 = vmax.f32 %v4214, %v4216
        %v4237 = vmax.f32 %v4217, %v4219
        %v4238 = vmax.f32 %v4218, %v4220
        %v4239 = vmax.f32 %v4221, %v4223
        %v4240 = vmax.f32 %v4222, %v4224
        %4241 = vst [vmem:[#allocation4] sm:$0xff] %v4225
        %4242 = vst [vmem:[#allocation4 + $0x8] sm:$0xff] %v4226
        %4243 = vst [vmem:[#allocation4 + $0x10] sm:$0xff] %v4227
        %4244 = vst [vmem:[#allocation4 + $0x18] sm:$0xff] %v4228
        %4245 = vst [vmem:[#allocation4 + $0x20] sm:$0xff] %v4229
        %4246 = vst [vmem:[#allocation4 + $0x28] sm:$0xff] %v4230
        %4247 = vst [vmem:[#allocation4 + $0x30] sm:$0xff] %v4231
        %4248 = vst [vmem:[#allocation4 + $0x38] sm:$0xff] %v4232
        %4249 = vst [vmem:[#allocation4 + $0x40] sm:$0xff] %v4233
        %4250 = vst [vmem:[#allocation4 + $0x48] sm:$0xff] %v4234
        %4251 = vst [vmem:[#allocation4 + $0x50] sm:$0xff] %v4235
        %4252 = vst [vmem:[#allocation4 + $0x58] sm:$0xff] %v4236
        %4253 = vst [vmem:[#allocation4 + $0x60] sm:$0xff] %v4237
        %4254 = vst [vmem:[#allocation4 + $0x68] sm:$0xff] %v4238
        %4255 = vst [vmem:[#allocation4 + $0x70] sm:$0xff] %v4239
        %4256 = vst [vmem:[#allocation4 + $0x78] sm:$0xff] %v4240
        %v4257 = vld [vmem:[#allocation4] ss:$2 sm:$0xff]
        %s4258 = scalar_lea.vmem [#allocation4], 16
        %v4259 = vld [vmem:[%s4258] ss:$2 sm:$0xff]
        %s4260 = scalar_lea.vmem [#allocation4], 32
        %v4261 = vld [vmem:[%s4260] ss:$2 sm:$0xff]
        %s4262 = scalar_lea.vmem [#allocation4], 48
        %v4263 = vld [vmem:[%s4262] ss:$2 sm:$0xff]
        %s4264 = scalar_lea.vmem [#allocation4], 64
        %v4265 = vld [vmem:[%s4264] ss:$2 sm:$0xff]
        %s4266 = scalar_lea.vmem [#allocation4], 80
        %v4267 = vld [vmem:[%s4266] ss:$2 sm:$0xff]
        %s4268 = scalar_lea.vmem [#allocation4], 96
        %v4269 = vld [vmem:[%s4268] ss:$2 sm:$0xff]
        %s4270 = scalar_lea.vmem [#allocation4], 112
        %v4271 = vld [vmem:[%s4270] ss:$2 sm:$0xff]
        %s4272 = scalar_lea.vmem [#allocation4], 1
        %v4273 = vld [vmem:[%s4272] ss:$2 sm:$0xff]
        %s4274 = scalar_lea.vmem [#allocation4], 17
        %v4275 = vld [vmem:[%s4274] ss:$2 sm:$0xff]
        %s4276 = scalar_lea.vmem [#allocation4], 33
        %v4277 = vld [vmem:[%s4276] ss:$2 sm:$0xff]
        %s4278 = scalar_lea.vmem [#allocation4], 49
        %v4279 = vld [vmem:[%s4278] ss:$2 sm:$0xff]
        %s4280 = scalar_lea.vmem [#allocation4], 65
        %v4281 = vld [vmem:[%s4280] ss:$2 sm:$0xff]
        %s4282 = scalar_lea.vmem [#allocation4], 81
        %v4283 = vld [vmem:[%s4282] ss:$2 sm:$0xff]
        %s4284 = scalar_lea.vmem [#allocation4], 97
        %v4285 = vld [vmem:[%s4284] ss:$2 sm:$0xff]
        %s4286 = scalar_lea.vmem [#allocation4], 113
        %v4287 = vld [vmem:[%s4286] ss:$2 sm:$0xff]
        %v4288 = vmax.f32 %v4257, %v4273
        %v4289 = vmax.f32 %v4259, %v4275
        %v4290 = vmax.f32 %v4261, %v4277
        %v4291 = vmax.f32 %v4263, %v4279
        %v4292 = vmax.f32 %v4265, %v4281
        %v4293 = vmax.f32 %v4267, %v4283
        %v4294 = vmax.f32 %v4269, %v4285
        %v4295 = vmax.f32 %v4271, %v4287
        %v4296 = vpack.c.bf16 %v4288, %v4288
        %v4297 = vpack.c.bf16 %v4289, %v4289
        %v4298 = vpack.c.bf16 %v4290, %v4290
        %v4299 = vpack.c.bf16 %v4291, %v4291
        %v4300 = vpack.c.bf16 %v4292, %v4292
        %v4301 = vpack.c.bf16 %v4293, %v4293
        %v4302 = vpack.c.bf16 %v4294, %v4294
        %v4303 = vpack.c.bf16 %v4295, %v4295
        %4304 = vst [vmem:[%s163] sm:$0xf] %v4296
        %4305 = vst [vmem:[%s163 + $0x4] sm:$0xf] %v4297
        %4306 = vst [vmem:[%s163 + $0x8] sm:$0xf] %v4298
        %4307 = vst [vmem:[%s163 + $0xc] sm:$0xf] %v4299
        %4308 = vst [vmem:[%s163 + $0x10] sm:$0xf] %v4300
        %4309 = vst [vmem:[%s163 + $0x14] sm:$0xf] %v4301
        %4310 = vst [vmem:[%s163 + $0x18] sm:$0xf] %v4302
        %4311 = vst [vmem:[%s163 + $0x1c] sm:$0xf] %v4303
        %s4312 = sand.u32 %s93, 1
        %s4313 = scalar_lea.sflag [#allocation6], %s4312
        %s4314 = sand.u32 %s93, 1
        %s4315 = smul.addr %s4314, 32
        %s4316 = scalar_lea.vmem [#allocation5], %s4315
        // Predicated region
        $region33: #{tpu_custom_call.1} parent=31 // pred_check
          %p4317 = pneg %p103
        $region34: #{tpu_custom_call.1} parent=31 // pred_check_branch
          %4319 = sbr.rel (%p4317) target = $region36
        $region35: #{tpu_custom_call.1} parent=31 // pred_region
          %s4321 = ssub.s32 512, 512
          %4322 = vsyncadd %s4313, %s4321
          %s4323 = smul.addr %s17, 8
          %s4324 = smul.addr %s4323, 64
          %s4325 = scalar_lea.hbm %s3, %s4324
          %s4326 = sshll.u32 %s4316, 4
          %s4327 = int_to_ptr.vmem [resolvable:$true] %s4326
          %4332 = dma.vmem_to_hbm [thread:$0]  %s4327, 512, %s4325, %s4313, 64, 64, 4
        $region36: #{tpu_custom_call.1} parent=31 // pred_fallthru
          _
      $region32: #{tpu_custom_call.1} parent=5 // pred_fallthru
        _
      %p4333 = scmp.le.s32.totalorder 2, %s12
      // Predicated region
      $region37: #{tpu_custom_call.1} parent=5 // pred_check
        %p4334 = pneg %p4333
      $region38: #{tpu_custom_call.1} parent=5 // pred_check_branch
        %4336 = sbr.rel (%p4334) target = $region40
      $region39: #{tpu_custom_call.1} parent=5 // pred_region
        %s4337 = ssub.s32 %s12, 2
        // Predicated region
        $region41: #{tpu_custom_call.1} parent=39 // pred_check
          %p4338 = pneg %p109
        $region42: #{tpu_custom_call.1} parent=39 // pred_check_branch
          %4340 = sbr.rel (%p4338) target = $region44
        $region43: #{tpu_custom_call.1} parent=39 // pred_region
          %s4341 = sand.u32 %s94, 1
          %s4342 = scalar_lea.sflag [#allocation6], %s4341
          %s4343 = sand.u32 %s94, 1
          %s4344 = smul.addr %s4343, 32
          %s4345 = scalar_lea.vmem [#allocation5], %s4344
          %4346 = dma.done %s4342, 512
        $region44: #{tpu_custom_call.1} parent=39 // pred_fallthru
          _
      $region40: #{tpu_custom_call.1} parent=5 // pred_fallthru
        _
    $region6: #{tpu_custom_call.1} parent=1 // loop_footer
      %s16 = sadd.s32 1, %s12
    $region7: #{tpu_custom_call.1} parent=1 // loop_footer_branch
      %11 = sbr.rel target = $region3
    $region8: #{tpu_custom_call.1} parent=1 // loop_exit
      _
    %4347 = vsyncpa [#allocation6], 1
    %s4348 = scalar_lea.sflag [#allocation6], 1
    %4349 = vsyncpa %s4348, 1

</llo_original>
